<compile_context>
chip_gen: v7x
topology: tpu7x:2x2x1
jax: 0.10.0
libtpu: 0.0.40
codegen_flags: <defaults>
</compile_context>

<pallas_src>
import functools

import jax
import jax.numpy as jnp
from jax.experimental import pallas as pl
from jax.experimental.pallas import tpu as pltpu


# ----------------------------------------------------------------------------
# Kernel A: fused conv(im2col) -> ReLU -> pool+consensus (MXU) -> FC, one step.
# ----------------------------------------------------------------------------
def _video_kernel(patches_ref, wconv_ref, bconv_ref, pool_ref, wfc_ref,
                  bfc_ref, out_ref):
    # (B*T*HW, Kp) @ (Kp, Cf) -> conv output for every pixel of every segment.
    h = jnp.dot(patches_ref[...], wconv_ref[...],
                preferred_element_type=jnp.float32)
    h = jnp.maximum(h + bconv_ref[...], 0.0)                 # ReLU
    # Fused global-avg-pool + segment consensus as an MXU reduction:
    # pool_ref is (B, B*T*HW) with 1/(T*HW) on each batch's rows.
    pooled = jnp.dot(pool_ref[...], h,
                     preferred_element_type=jnp.float32)     # (B, Cf)
    # Batched FC over B, bias added exactly once (post-averaging).
    out_ref[...] = (jnp.dot(pooled, wfc_ref[...],
                            preferred_element_type=jnp.float32)
                    + bfc_ref[...]).astype(out_ref.dtype)


def tsn_backbone(videos, w_conv, b_conv, w_fc, b_fc, *, num_segments):
    """videos: (B, T*C, H, W) float32 -> (B, F) float32."""
    B, TC, H, W = videos.shape
    T = num_segments
    C = TC // T
    K = C * 9
    K_pad = ((K + 31) // 32) * 32
    Cf = w_conv.shape[0]
    F = w_fc.shape[0]
    HW = H * W
    THW = T * HW

    x = videos.reshape(B * T, C, H, W)
    # im2col, 3x3, padding=1 (same), ordering (c, kh, kw) matching w_conv.
    xp = jnp.pad(x, ((0, 0), (0, 0), (1, 1), (1, 1)))
    cols = [xp[:, :, dy:dy + H, dx:dx + W]
            for dy in range(3) for dx in range(3)]           # each (BT, C, H, W)
    patches = jnp.stack(cols, axis=2)                        # (BT, C, 9, H, W)
    patches = patches.reshape(B * T, K, HW).transpose(0, 2, 1)  # (BT, HW, K)
    patches = patches.reshape(B * T * HW, K)
    patches = jnp.pad(patches, ((0, 0), (0, K_pad - K)))     # (BT*HW, Kp)

    wconv_mat = jnp.pad(w_conv.reshape(Cf, K).T,
                        ((0, K_pad - K), (0, 0)))            # (Kp, Cf)
    bconv_mat = b_conv.reshape(1, Cf)
    wfc_mat = w_fc.T                                         # (Cf, F)
    bfc_mat = b_fc.reshape(1, F)

    # Pool/consensus selector: row b averages the T*HW rows of batch b.
    col_batch = jnp.arange(B * THW, dtype=jnp.int32) // THW
    pool_mat = (jnp.arange(B, dtype=jnp.int32)[:, None] == col_batch[None, :]
                ).astype(jnp.float32) / float(THW)           # (B, B*T*HW)

    return pl.pallas_call(
        _video_kernel,
        out_shape=jax.ShapeDtypeStruct((B, F), jnp.float32),
        grid=(1,),
        in_specs=[
            pl.BlockSpec((B * THW, K_pad), lambda i: (0, 0)),
            pl.BlockSpec((K_pad, Cf), lambda i: (0, 0)),
            pl.BlockSpec((1, Cf), lambda i: (0, 0)),
            pl.BlockSpec((B, B * THW), lambda i: (0, 0)),
            pl.BlockSpec((Cf, F), lambda i: (0, 0)),
            pl.BlockSpec((1, F), lambda i: (0, 0)),
        ],
        out_specs=pl.BlockSpec((B, F), lambda i: (0, 0)),
        compiler_params=pltpu.CompilerParams(
            dimension_semantics=("arbitrary",)),
    )(patches, wconv_mat, bconv_mat, pool_mat, wfc_mat, bfc_mat)


# ----------------------------------------------------------------------------
# Kernel B: proj_mm = nn.Linear(768, F) applied to [text_emb; class_emb] fused.
# ----------------------------------------------------------------------------
def _linear_kernel(x_ref, w_ref, b_ref, o_ref):
    o_ref[...] = (jnp.dot(x_ref[...], w_ref[...],
                          preferred_element_type=jnp.float32)
                  + b_ref[...]).astype(o_ref.dtype)


def proj_mm_fused(text_emb, class_emb, w, b):
    """One launch for both projections: y = x @ w.T + b, rows padded to 8."""
    n_text = text_emb.shape[0]
    x = jnp.concatenate([text_emb, class_emb], axis=0)       # (N, 768)
    N, D = x.shape
    F = w.shape[0]
    N_pad = ((N + 7) // 8) * 8
    x_p = jnp.pad(x, ((0, N_pad - N), (0, 0)))

    out = pl.pallas_call(
        _linear_kernel,
        out_shape=jax.ShapeDtypeStruct((N_pad, F), jnp.float32),
        grid=(1,),
        in_specs=[
            pl.BlockSpec((N_pad, D), lambda i: (0, 0)),
            pl.BlockSpec((D, F), lambda i: (0, 0)),
            pl.BlockSpec((1, F), lambda i: (0, 0)),
        ],
        out_specs=pl.BlockSpec((N_pad, F), lambda i: (0, 0)),
    )(x_p, w.T, b.reshape(1, F))
    return out[:n_text], out[n_text:N]


# ----------------------------------------------------------------------------
# TSN_MMC forward
# ----------------------------------------------------------------------------
def tsn_mmc_forward(params, videos, text_emb, class_emb, *, num_segments):
    video_emb = tsn_backbone(videos,
                             params["w_conv"], params["b_conv"],
                             params["w_fc"], params["b_fc"],
                             num_segments=num_segments)
    text_out, class_out = proj_mm_fused(text_emb, class_emb,
                                        params["w_proj"], params["b_proj"])
    return video_emb, text_out, class_out


def init_params(key, *, channels, conv_feat, feature_dim, text_dim=768):
    ks = jax.random.split(key, 6)
    return {
        "w_conv": 0.05 * jax.random.normal(ks[0], (conv_feat, channels, 3, 3),
                                           jnp.float32),
        "b_conv": 0.01 * jax.random.normal(ks[1], (conv_feat,), jnp.float32),
        "w_fc":   0.05 * jax.random.normal(ks[2], (feature_dim, conv_feat),
                                           jnp.float32),
        "b_fc":   0.01 * jax.random.normal(ks[3], (feature_dim,), jnp.float32),
        "w_proj": 0.05 * jax.random.normal(ks[4], (feature_dim, text_dim),
                                           jnp.float32),
        "b_proj": 0.01 * jax.random.normal(ks[5], (feature_dim,), jnp.float32),
    }


if __name__ == "__main__":
    # Small, module-consistent shapes.
    B = 2                 # batch
    T = 4                 # num_segments
    C = 3                 # RGB modality
    H = W = 16            # spatial
    Cf = 32               # synthetic backbone conv channels
    FEATURE_DIM = 256     # backbone feature_dim
    TEXT_DIM = 768        # proj_mm input dim (CLIP text width)
    N_TEXT = 2
    NUM_CLASS = 5

    key = jax.random.PRNGKey(0)
    k_v, k_t, k_c, k_p = jax.random.split(key, 4)

    videos = jax.random.normal(k_v, (B, T * C, H, W), jnp.float32)
    text_emb = jax.random.normal(k_t, (N_TEXT, TEXT_DIM), jnp.float32)
    class_emb = jax.random.normal(k_c, (NUM_CLASS, TEXT_DIM), jnp.float32)

    params = init_params(k_p, channels=C, conv_feat=Cf, feature_dim=FEATURE_DIM,
                         text_dim=TEXT_DIM)

    fwd = jax.jit(functools.partial(tsn_mmc_forward, num_segments=T))
    video_emb, text_out, class_out = fwd(params, videos, text_emb, class_emb)
    jax.block_until_ready((video_emb, text_out, class_out))

    assert video_emb.shape == (B, FEATURE_DIM)
    assert text_out.shape == (N_TEXT, FEATURE_DIM)
    assert class_out.shape == (NUM_CLASS, FEATURE_DIM)

    # Cross-check the video path against plain-JAX conv -> relu -> pool -> FC
    # -> segment averaging (the unfused per-segment formulation).
    xx = videos.reshape(B * T, C, H, W)
    ref_h = jax.lax.conv_general_dilated(
        xx, params["w_conv"], window_strides=(1, 1), padding="SAME",
        dimension_numbers=("NCHW", "OIHW", "NCHW"))
    ref_h = jnp.maximum(ref_h + params["b_conv"][None, :, None, None], 0.0)
    ref_pooled = ref_h.mean(axis=(2, 3))                          # (BT, Cf)
    ref_feat = ref_pooled @ params["w_fc"].T + params["b_fc"]     # (BT, F)
    ref_video = ref_feat.reshape(B, T, FEATURE_DIM).mean(axis=1)  # (B, F)
    assert jnp.allclose(video_emb, ref_video, atol=2e-3, rtol=2e-3)

    # Cross-check proj_mm against plain JAX.
    ref_text = text_emb @ params["w_proj"].T + params["b_proj"]
    ref_class = class_emb @ params["w_proj"].T + params["b_proj"]
    assert jnp.allclose(text_out, ref_text, atol=2e-3, rtol=2e-3)
    assert jnp.allclose(class_out, ref_class, atol=2e-3, rtol=2e-3)

    print("KERNEL_OK")
</pallas_src>

<mosaic_0001>
module attributes {stable_mosaic.version = 11 : i64} {
  func.func @_video_kernel(%arg0: i32, %arg1: memref<2048x32xf32, #tpu.memory_space<vmem>>, %arg2: memref<32x32xf32, #tpu.memory_space<vmem>>, %arg3: memref<1x32xf32, #tpu.memory_space<vmem>>, %arg4: memref<2x2048xf32, #tpu.memory_space<vmem>>, %arg5: memref<32x256xf32, #tpu.memory_space<vmem>>, %arg6: memref<1x256xf32, #tpu.memory_space<vmem>>, %arg7: memref<2x256xf32, #tpu.memory_space<vmem>>) attributes {dimension_semantics = [#tpu.dimension_semantics<arbitrary>], iteration_bounds = array<i64: 1>, scalar_prefetch = 0 : i64, scratch_operands = 0 : i64, tpu.core_type = #tpu.core_type<tc>, window_params = [{pipeline_mode = #tpu.pipeline_mode<synchronous>, transform_indices = @transform_0, window_bounds = array<i64: 2048, 32>}, {pipeline_mode = #tpu.pipeline_mode<synchronous>, transform_indices = @transform_1, window_bounds = array<i64: 32, 32>}, {pipeline_mode = #tpu.pipeline_mode<synchronous>, transform_indices = @transform_2, window_bounds = array<i64: 1, 32>}, {pipeline_mode = #tpu.pipeline_mode<synchronous>, transform_indices = @transform_3, window_bounds = array<i64: 2, 2048>}, {pipeline_mode = #tpu.pipeline_mode<synchronous>, transform_indices = @transform_4, window_bounds = array<i64: 32, 256>}, {pipeline_mode = #tpu.pipeline_mode<synchronous>, transform_indices = @transform_5, window_bounds = array<i64: 1, 256>}, {pipeline_mode = #tpu.pipeline_mode<synchronous>, transform_indices = @transform_6, window_bounds = array<i64: 2, 256>}]} {
    %c0 = arith.constant 0 : index
    %c0_0 = arith.constant 0 : index
    %0 = vector.load %arg1[%c0, %c0_0] : memref<2048x32xf32, #tpu.memory_space<vmem>>, vector<2048x32xf32>
    %c0_1 = arith.constant 0 : index
    %c0_2 = arith.constant 0 : index
    %1 = vector.load %arg2[%c0_1, %c0_2] : memref<32x32xf32, #tpu.memory_space<vmem>>, vector<32x32xf32>
    %cst = arith.constant dense<0.000000e+00> : vector<2048x32xf32>
    %2 = tpu.matmul %0, %1, %cst {dimension_numbers = #tpu.dot_dimension_numbers<[1], [0], [0], [1], [0, 0, 1, 1], [], []>} : vector<2048x32xf32>, vector<32x32xf32>, vector<2048x32xf32> -> vector<2048x32xf32>
    %c0_3 = arith.constant 0 : index
    %c0_4 = arith.constant 0 : index
    %3 = vector.load %arg3[%c0_3, %c0_4] : memref<1x32xf32, #tpu.memory_space<vmem>>, vector<1x32xf32>
    %4 = vector.broadcast %3 : vector<1x32xf32> to vector<2048x32xf32>
    %5 = arith.addf %2, %4 : vector<2048x32xf32>
    %cst_5 = arith.constant 0.000000e+00 : f32
    %6 = vector.broadcast %cst_5 : f32 to vector<2048x32xf32>
    %7 = arith.maximumf %5, %6 : vector<2048x32xf32>
    %c0_6 = arith.constant 0 : index
    %c0_7 = arith.constant 0 : index
    %8 = vector.load %arg4[%c0_6, %c0_7] : memref<2x2048xf32, #tpu.memory_space<vmem>>, vector<2x2048xf32>
    %cst_8 = arith.constant dense<0.000000e+00> : vector<2x32xf32>
    %9 = tpu.matmul %8, %7, %cst_8 {dimension_numbers = #tpu.dot_dimension_numbers<[1], [0], [0], [1], [0, 0, 1, 1], [], []>} : vector<2x2048xf32>, vector<2048x32xf32>, vector<2x32xf32> -> vector<2x32xf32>
    %c0_9 = arith.constant 0 : index
    %c0_10 = arith.constant 0 : index
    %10 = vector.load %arg5[%c0_9, %c0_10] : memref<32x256xf32, #tpu.memory_space<vmem>>, vector<32x256xf32>
    %cst_11 = arith.constant dense<0.000000e+00> : vector<2x256xf32>
    %11 = tpu.matmul %9, %10, %cst_11 {dimension_numbers = #tpu.dot_dimension_numbers<[1], [0], [0], [1], [0, 0, 1, 1], [], []>} : vector<2x32xf32>, vector<32x256xf32>, vector<2x256xf32> -> vector<2x256xf32>
    %c0_12 = arith.constant 0 : index
    %c0_13 = arith.constant 0 : index
    %12 = vector.load %arg6[%c0_12, %c0_13] : memref<1x256xf32, #tpu.memory_space<vmem>>, vector<1x256xf32>
    %13 = vector.broadcast %12 : vector<1x256xf32> to vector<2x256xf32>
    %14 = arith.addf %11, %13 : vector<2x256xf32>
    %c0_14 = arith.constant 0 : index
    %c0_15 = arith.constant 0 : index
    %15 = vector.load %arg7[%c0_14, %c0_15] : memref<2x256xf32, #tpu.memory_space<vmem>>, vector<2x256xf32>
    tpu.vector_store %arg7[%c0_14, %c0_15], %14 {strides = array<i32>} : memref<2x256xf32, #tpu.memory_space<vmem>>, vector<2x256xf32>,
    return
  }
  func.func @transform_0(%arg0: i32) -> (i32, i32) {
    %c0_i32 = arith.constant 0 : i32
    %c0_i32_0 = arith.constant 0 : i32
    %c0_i32_1 = arith.constant 0 : i32
    return %c0_i32, %c0_i32_0 : i32, i32
  }
  func.func @transform_1(%arg0: i32) -> (i32, i32) {
    %c0_i32 = arith.constant 0 : i32
    %c0_i32_0 = arith.constant 0 : i32
    %c0_i32_1 = arith.constant 0 : i32
    return %c0_i32, %c0_i32_0 : i32, i32
  }
  func.func @transform_2(%arg0: i32) -> (i32, i32) {
    %c0_i32 = arith.constant 0 : i32
    %c0_i32_0 = arith.constant 0 : i32
    %c0_i32_1 = arith.constant 0 : i32
    return %c0_i32, %c0_i32_0 : i32, i32
  }
  func.func @transform_3(%arg0: i32) -> (i32, i32) {
    %c0_i32 = arith.constant 0 : i32
    %c0_i32_0 = arith.constant 0 : i32
    %c0_i32_1 = arith.constant 0 : i32
    return %c0_i32, %c0_i32_0 : i32, i32
  }
  func.func @transform_4(%arg0: i32) -> (i32, i32) {
    %c0_i32 = arith.constant 0 : i32
    %c0_i32_0 = arith.constant 0 : i32
    %c0_i32_1 = arith.constant 0 : i32
    return %c0_i32, %c0_i32_0 : i32, i32
  }
  func.func @transform_5(%arg0: i32) -> (i32, i32) {
    %c0_i32 = arith.constant 0 : i32
    %c0_i32_0 = arith.constant 0 : i32
    %c0_i32_1 = arith.constant 0 : i32
    return %c0_i32, %c0_i32_0 : i32, i32
  }
  func.func @transform_6(%arg0: i32) -> (i32, i32) {
    %c0_i32 = arith.constant 0 : i32
    %c0_i32_0 = arith.constant 0 : i32
    %c0_i32_1 = arith.constant 0 : i32
    return %c0_i32, %c0_i32_0 : i32, i32
  }
}

module attributes {stable_mosaic.version = 11 : i64} {
  func.func @_linear_kernel(%arg0: i32, %arg1: memref<8x768xf32, #tpu.memory_space<vmem>>, %arg2: memref<768x256xf32, #tpu.memory_space<vmem>>, %arg3: memref<1x256xf32, #tpu.memory_space<vmem>>, %arg4: memref<8x256xf32, #tpu.memory_space<vmem>>) attributes {dimension_semantics = [#tpu.dimension_semantics<arbitrary>], iteration_bounds = array<i64: 1>, scalar_prefetch = 0 : i64, scratch_operands = 0 : i64, tpu.core_type = #tpu.core_type<tc>, window_params = [{pipeline_mode = #tpu.pipeline_mode<synchronous>, transform_indices = @transform_0, window_bounds = array<i64: 8, 768>}, {pipeline_mode = #tpu.pipeline_mode<synchronous>, transform_indices = @transform_1, window_bounds = array<i64: 768, 256>}, {pipeline_mode = #tpu.pipeline_mode<synchronous>, transform_indices = @transform_2, window_bounds = array<i64: 1, 256>}, {pipeline_mode = #tpu.pipeline_mode<synchronous>, transform_indices = @transform_3, window_bounds = array<i64: 8, 256>}]} {
    %c0 = arith.constant 0 : index
    %c0_0 = arith.constant 0 : index
    %0 = vector.load %arg1[%c0, %c0_0] : memref<8x768xf32, #tpu.memory_space<vmem>>, vector<8x768xf32>
    %c0_1 = arith.constant 0 : index
    %c0_2 = arith.constant 0 : index
    %1 = vector.load %arg2[%c0_1, %c0_2] : memref<768x256xf32, #tpu.memory_space<vmem>>, vector<768x256xf32>
    %cst = arith.constant dense<0.000000e+00> : vector<8x256xf32>
    %2 = tpu.matmul %0, %1, %cst {dimension_numbers = #tpu.dot_dimension_numbers<[1], [0], [0], [1], [0, 0, 1, 1], [], []>} : vector<8x768xf32>, vector<768x256xf32>, vector<8x256xf32> -> vector<8x256xf32>
    %c0_3 = arith.constant 0 : index
    %c0_4 = arith.constant 0 : index
    %3 = vector.load %arg3[%c0_3, %c0_4] : memref<1x256xf32, #tpu.memory_space<vmem>>, vector<1x256xf32>
    %4 = vector.broadcast %3 : vector<1x256xf32> to vector<8x256xf32>
    %5 = arith.addf %2, %4 : vector<8x256xf32>
    %c0_5 = arith.constant 0 : index
    %c0_6 = arith.constant 0 : index
    %6 = vector.load %arg4[%c0_5, %c0_6] : memref<8x256xf32, #tpu.memory_space<vmem>>, vector<8x256xf32>
    tpu.vector_store %arg4[%c0_5, %c0_6], %5 {strides = array<i32>} : memref<8x256xf32, #tpu.memory_space<vmem>>, vector<8x256xf32>,
    return
  }
  func.func @transform_0(%arg0: i32) -> (i32, i32) {
    %c0_i32 = arith.constant 0 : i32
    %c0_i32_0 = arith.constant 0 : i32
    %c0_i32_1 = arith.constant 0 : i32
    return %c0_i32, %c0_i32_0 : i32, i32
  }
  func.func @transform_1(%arg0: i32) -> (i32, i32) {
    %c0_i32 = arith.constant 0 : i32
    %c0_i32_0 = arith.constant 0 : i32
    %c0_i32_1 = arith.constant 0 : i32
    return %c0_i32, %c0_i32_0 : i32, i32
  }
  func.func @transform_2(%arg0: i32) -> (i32, i32) {
    %c0_i32 = arith.constant 0 : i32
    %c0_i32_0 = arith.constant 0 : i32
    %c0_i32_1 = arith.constant 0 : i32
    return %c0_i32, %c0_i32_0 : i32, i32
  }
  func.func @transform_3(%arg0: i32) -> (i32, i32) {
    %c0_i32 = arith.constant 0 : i32
    %c0_i32_0 = arith.constant 0 : i32
    %c0_i32_1 = arith.constant 0 : i32
    return %c0_i32, %c0_i32_0 : i32, i32
  }
}

</mosaic_0001>

<llo_original>
// kernel: tsn_mmc_forward.3
$region0: #{tsn_mmc_forward.3}
  #allocation0 [shape = 'u32[]', space=smem, size = 0x4, offset = 0x4, fixed_abs, tag = 'smem constant byte address 0x4 - core index']
  #allocation1 [shape = 'u32[144,128]{1,0:T(1,128)}', space=vmem, size = 0x12000, scoped, tag = 'internal scratch']
  %s0 = inlined_call_operand.vmem [shape: f32[8,768], index: 0, kind: input, shape index: {}]
  %s1 = inlined_call_operand.vmem [shape: f32[768,256], index: 1, kind: input, shape index: {}]
  %s2 = inlined_call_operand.vmem [shape: f32[1,256], index: 2, kind: input, shape index: {}]
  %s3 = inlined_call_operand.vmem [shape: f32[8,256], index: 3, kind: output, shape index: {}]
  %s4 = sld [smem:[#allocation0]]
  $region22: #{tsn_mmc_forward.3} parent=0
    _
  %s6 = ssub.s32 1, %s4
  %s7 = scalar_select 0, %s6, %s4
  // Predicated region
  $region2: #{tsn_mmc_forward.3} parent=0 // pred_check
    _
  $region3: #{tsn_mmc_forward.3} parent=0 // pred_check_branch
    %9 = sbr.rel (0) target = $region5
  $region4: #{tsn_mmc_forward.3} parent=0 // pred_region
    _
  $region5: #{tsn_mmc_forward.3} parent=0 // pred_fallthru
    _
  // Predicated region
  $region6: #{tsn_mmc_forward.3} parent=0 // pred_check
    _
  $region7: #{tsn_mmc_forward.3} parent=0 // pred_check_branch
    %11 = sbr.rel (0) target = $region9
  $region8: #{tsn_mmc_forward.3} parent=0 // pred_region
    _
  $region9: #{tsn_mmc_forward.3} parent=0 // pred_fallthru
    _
  // Predicated region
  $region10: #{tsn_mmc_forward.3} parent=0 // pred_check
    _
  $region11: #{tsn_mmc_forward.3} parent=0 // pred_check_branch
    %13 = sbr.rel (0) target = $region13
  $region12: #{tsn_mmc_forward.3} parent=0 // pred_region
    _
  $region13: #{tsn_mmc_forward.3} parent=0 // pred_fallthru
    _
  %v14 = vld [vmem:[%s0] sm:$0xff]
  %v15 = vld [vmem:[%s0 + $0x8] sm:$0xff]
  %v16 = vld [vmem:[%s0 + $0x10] sm:$0xff]
  %v17 = vld [vmem:[%s0 + $0x18] sm:$0xff]
  %v18 = vld [vmem:[%s0 + $0x20] sm:$0xff]
  %v19 = vld [vmem:[%s0 + $0x28] sm:$0xff]
  %v20 = vld [vmem:[%s1] sm:$0xff]
  %v21 = vld [vmem:[%s1 + $0x8] sm:$0xff]
  %v22 = vld [vmem:[%s1 + $0x10] sm:$0xff]
  %v23 = vld [vmem:[%s1 + $0x18] sm:$0xff]
  %v24 = vld [vmem:[%s1 + $0x20] sm:$0xff]
  %v25 = vld [vmem:[%s1 + $0x28] sm:$0xff]
  %v26 = vld [vmem:[%s1 + $0x30] sm:$0xff]
  %v27 = vld [vmem:[%s1 + $0x38] sm:$0xff]
  %v28 = vld [vmem:[%s1 + $0x40] sm:$0xff]
  %v29 = vld [vmem:[%s1 + $0x48] sm:$0xff]
  %v30 = vld [vmem:[%s1 + $0x50] sm:$0xff]
  %v31 = vld [vmem:[%s1 + $0x58] sm:$0xff]
  %v32 = vld [vmem:[%s1 + $0x60] sm:$0xff]
  %v33 = vld [vmem:[%s1 + $0x68] sm:$0xff]
  %v34 = vld [vmem:[%s1 + $0x70] sm:$0xff]
  %v35 = vld [vmem:[%s1 + $0x78] sm:$0xff]
  %v36 = vld [vmem:[%s1 + $0x80] sm:$0xff]
  %v37 = vld [vmem:[%s1 + $0x88] sm:$0xff]
  %v38 = vld [vmem:[%s1 + $0x90] sm:$0xff]
  %v39 = vld [vmem:[%s1 + $0x98] sm:$0xff]
  %v40 = vld [vmem:[%s1 + $0xa0] sm:$0xff]
  %v41 = vld [vmem:[%s1 + $0xa8] sm:$0xff]
  %v42 = vld [vmem:[%s1 + $0xb0] sm:$0xff]
  %v43 = vld [vmem:[%s1 + $0xb8] sm:$0xff]
  %v44 = vld [vmem:[%s1 + $0xc0] sm:$0xff]
  %v45 = vld [vmem:[%s1 + $0xc8] sm:$0xff]
  %v46 = vld [vmem:[%s1 + $0xd0] sm:$0xff]
  %v47 = vld [vmem:[%s1 + $0xd8] sm:$0xff]
  %v48 = vld [vmem:[%s1 + $0xe0] sm:$0xff]
  %v49 = vld [vmem:[%s1 + $0xe8] sm:$0xff]
  %v50 = vld [vmem:[%s1 + $0xf0] sm:$0xff]
  %v51 = vld [vmem:[%s1 + $0xf8] sm:$0xff]
  %v52 = vld [vmem:[%s1 + $0x100] sm:$0xff]
  %v53 = vld [vmem:[%s1 + $0x108] sm:$0xff]
  %v54 = vld [vmem:[%s1 + $0x110] sm:$0xff]
  %v55 = vld [vmem:[%s1 + $0x118] sm:$0xff]
  %v56 = vld [vmem:[%s1 + $0x120] sm:$0xff]
  %v57 = vld [vmem:[%s1 + $0x128] sm:$0xff]
  %v58 = vld [vmem:[%s1 + $0x130] sm:$0xff]
  %v59 = vld [vmem:[%s1 + $0x138] sm:$0xff]
  %v60 = vld [vmem:[%s1 + $0x140] sm:$0xff]
  %v61 = vld [vmem:[%s1 + $0x148] sm:$0xff]
  %v62 = vld [vmem:[%s1 + $0x150] sm:$0xff]
  %v63 = vld [vmem:[%s1 + $0x158] sm:$0xff]
  %v64 = vld [vmem:[%s1 + $0x160] sm:$0xff]
  %v65 = vld [vmem:[%s1 + $0x168] sm:$0xff]
  %v66 = vld [vmem:[%s1 + $0x170] sm:$0xff]
  %v67 = vld [vmem:[%s1 + $0x178] sm:$0xff]
  %v68 = vld [vmem:[%s1 + $0x180] sm:$0xff]
  %v69 = vld [vmem:[%s1 + $0x188] sm:$0xff]
  %v70 = vld [vmem:[%s1 + $0x190] sm:$0xff]
  %v71 = vld [vmem:[%s1 + $0x198] sm:$0xff]
  %v72 = vld [vmem:[%s1 + $0x1a0] sm:$0xff]
  %v73 = vld [vmem:[%s1 + $0x1a8] sm:$0xff]
  %v74 = vld [vmem:[%s1 + $0x1b0] sm:$0xff]
  %v75 = vld [vmem:[%s1 + $0x1b8] sm:$0xff]
  %v76 = vld [vmem:[%s1 + $0x1c0] sm:$0xff]
  %v77 = vld [vmem:[%s1 + $0x1c8] sm:$0xff]
  %v78 = vld [vmem:[%s1 + $0x1d0] sm:$0xff]
  %v79 = vld [vmem:[%s1 + $0x1d8] sm:$0xff]
  %v80 = vld [vmem:[%s1 + $0x1e0] sm:$0xff]
  %v81 = vld [vmem:[%s1 + $0x1e8] sm:$0xff]
  %v82 = vld [vmem:[%s1 + $0x1f0] sm:$0xff]
  %v83 = vld [vmem:[%s1 + $0x1f8] sm:$0xff]
  %v84 = vld [vmem:[%s1 + $0x200] sm:$0xff]
  %v85 = vld [vmem:[%s1 + $0x208] sm:$0xff]
  %v86 = vld [vmem:[%s1 + $0x210] sm:$0xff]
  %v87 = vld [vmem:[%s1 + $0x218] sm:$0xff]
  %v88 = vld [vmem:[%s1 + $0x220] sm:$0xff]
  %v89 = vld [vmem:[%s1 + $0x228] sm:$0xff]
  %v90 = vld [vmem:[%s1 + $0x230] sm:$0xff]
  %v91 = vld [vmem:[%s1 + $0x238] sm:$0xff]
  %v92 = vld [vmem:[%s1 + $0x240] sm:$0xff]
  %v93 = vld [vmem:[%s1 + $0x248] sm:$0xff]
  %v94 = vld [vmem:[%s1 + $0x250] sm:$0xff]
  %v95 = vld [vmem:[%s1 + $0x258] sm:$0xff]
  %v96 = vld [vmem:[%s1 + $0x260] sm:$0xff]
  %v97 = vld [vmem:[%s1 + $0x268] sm:$0xff]
  %v98 = vld [vmem:[%s1 + $0x270] sm:$0xff]
  %v99 = vld [vmem:[%s1 + $0x278] sm:$0xff]
  %v100 = vld [vmem:[%s1 + $0x280] sm:$0xff]
  %v101 = vld [vmem:[%s1 + $0x288] sm:$0xff]
  %v102 = vld [vmem:[%s1 + $0x290] sm:$0xff]
  %v103 = vld [vmem:[%s1 + $0x298] sm:$0xff]
  %v104 = vld [vmem:[%s1 + $0x2a0] sm:$0xff]
  %v105 = vld [vmem:[%s1 + $0x2a8] sm:$0xff]
  %v106 = vld [vmem:[%s1 + $0x2b0] sm:$0xff]
  %v107 = vld [vmem:[%s1 + $0x2b8] sm:$0xff]
  %v108 = vld [vmem:[%s1 + $0x2c0] sm:$0xff]
  %v109 = vld [vmem:[%s1 + $0x2c8] sm:$0xff]
  %v110 = vld [vmem:[%s1 + $0x2d0] sm:$0xff]
  %v111 = vld [vmem:[%s1 + $0x2d8] sm:$0xff]
  %v112 = vld [vmem:[%s1 + $0x2e0] sm:$0xff]
  %v113 = vld [vmem:[%s1 + $0x2e8] sm:$0xff]
  %v114 = vld [vmem:[%s1 + $0x2f0] sm:$0xff]
  %v115 = vld [vmem:[%s1 + $0x2f8] sm:$0xff]
  %v116 = vld [vmem:[%s1 + $0x300] sm:$0xff]
  %v117 = vld [vmem:[%s1 + $0x308] sm:$0xff]
  %v118 = vld [vmem:[%s1 + $0x310] sm:$0xff]
  %v119 = vld [vmem:[%s1 + $0x318] sm:$0xff]
  %v120 = vld [vmem:[%s1 + $0x320] sm:$0xff]
  %v121 = vld [vmem:[%s1 + $0x328] sm:$0xff]
  %v122 = vld [vmem:[%s1 + $0x330] sm:$0xff]
  %v123 = vld [vmem:[%s1 + $0x338] sm:$0xff]
  %v124 = vld [vmem:[%s1 + $0x340] sm:$0xff]
  %v125 = vld [vmem:[%s1 + $0x348] sm:$0xff]
  %v126 = vld [vmem:[%s1 + $0x350] sm:$0xff]
  %v127 = vld [vmem:[%s1 + $0x358] sm:$0xff]
  %v128 = vld [vmem:[%s1 + $0x360] sm:$0xff]
  %v129 = vld [vmem:[%s1 + $0x368] sm:$0xff]
  %v130 = vld [vmem:[%s1 + $0x370] sm:$0xff]
  %v131 = vld [vmem:[%s1 + $0x378] sm:$0xff]
  %v132 = vld [vmem:[%s1 + $0x380] sm:$0xff]
  %v133 = vld [vmem:[%s1 + $0x388] sm:$0xff]
  %v134 = vld [vmem:[%s1 + $0x390] sm:$0xff]
  %v135 = vld [vmem:[%s1 + $0x398] sm:$0xff]
  %v136 = vld [vmem:[%s1 + $0x3a0] sm:$0xff]
  %v137 = vld [vmem:[%s1 + $0x3a8] sm:$0xff]
  %v138 = vld [vmem:[%s1 + $0x3b0] sm:$0xff]
  %v139 = vld [vmem:[%s1 + $0x3b8] sm:$0xff]
  %v140 = vld [vmem:[%s1 + $0x3c0] sm:$0xff]
  %v141 = vld [vmem:[%s1 + $0x3c8] sm:$0xff]
  %v142 = vld [vmem:[%s1 + $0x3d0] sm:$0xff]
  %v143 = vld [vmem:[%s1 + $0x3d8] sm:$0xff]
  %v144 = vld [vmem:[%s1 + $0x3e0] sm:$0xff]
  %v145 = vld [vmem:[%s1 + $0x3e8] sm:$0xff]
  %v146 = vld [vmem:[%s1 + $0x3f0] sm:$0xff]
  %v147 = vld [vmem:[%s1 + $0x3f8] sm:$0xff]
  %v148 = vld [vmem:[%s1 + $0x400] sm:$0xff]
  %v149 = vld [vmem:[%s1 + $0x408] sm:$0xff]
  %v150 = vld [vmem:[%s1 + $0x410] sm:$0xff]
  %v151 = vld [vmem:[%s1 + $0x418] sm:$0xff]
  %v152 = vld [vmem:[%s1 + $0x420] sm:$0xff]
  %v153 = vld [vmem:[%s1 + $0x428] sm:$0xff]
  %v154 = vld [vmem:[%s1 + $0x430] sm:$0xff]
  %v155 = vld [vmem:[%s1 + $0x438] sm:$0xff]
  %v156 = vld [vmem:[%s1 + $0x440] sm:$0xff]
  %v157 = vld [vmem:[%s1 + $0x448] sm:$0xff]
  %v158 = vld [vmem:[%s1 + $0x450] sm:$0xff]
  %v159 = vld [vmem:[%s1 + $0x458] sm:$0xff]
  %v160 = vld [vmem:[%s1 + $0x460] sm:$0xff]
  %v161 = vld [vmem:[%s1 + $0x468] sm:$0xff]
  %v162 = vld [vmem:[%s1 + $0x470] sm:$0xff]
  %v163 = vld [vmem:[%s1 + $0x478] sm:$0xff]
  %v164 = vld [vmem:[%s1 + $0x480] sm:$0xff]
  %v165 = vld [vmem:[%s1 + $0x488] sm:$0xff]
  %v166 = vld [vmem:[%s1 + $0x490] sm:$0xff]
  %v167 = vld [vmem:[%s1 + $0x498] sm:$0xff]
  %v168 = vld [vmem:[%s1 + $0x4a0] sm:$0xff]
  %v169 = vld [vmem:[%s1 + $0x4a8] sm:$0xff]
  %v170 = vld [vmem:[%s1 + $0x4b0] sm:$0xff]
  %v171 = vld [vmem:[%s1 + $0x4b8] sm:$0xff]
  %v172 = vld [vmem:[%s1 + $0x4c0] sm:$0xff]
  %v173 = vld [vmem:[%s1 + $0x4c8] sm:$0xff]
  %v174 = vld [vmem:[%s1 + $0x4d0] sm:$0xff]
  %v175 = vld [vmem:[%s1 + $0x4d8] sm:$0xff]
  %v176 = vld [vmem:[%s1 + $0x4e0] sm:$0xff]
  %v177 = vld [vmem:[%s1 + $0x4e8] sm:$0xff]
  %v178 = vld [vmem:[%s1 + $0x4f0] sm:$0xff]
  %v179 = vld [vmem:[%s1 + $0x4f8] sm:$0xff]
  %v180 = vld [vmem:[%s1 + $0x500] sm:$0xff]
  %v181 = vld [vmem:[%s1 + $0x508] sm:$0xff]
  %v182 = vld [vmem:[%s1 + $0x510] sm:$0xff]
  %v183 = vld [vmem:[%s1 + $0x518] sm:$0xff]
  %v184 = vld [vmem:[%s1 + $0x520] sm:$0xff]
  %v185 = vld [vmem:[%s1 + $0x528] sm:$0xff]
  %v186 = vld [vmem:[%s1 + $0x530] sm:$0xff]
  %v187 = vld [vmem:[%s1 + $0x538] sm:$0xff]
  %v188 = vld [vmem:[%s1 + $0x540] sm:$0xff]
  %v189 = vld [vmem:[%s1 + $0x548] sm:$0xff]
  %v190 = vld [vmem:[%s1 + $0x550] sm:$0xff]
  %v191 = vld [vmem:[%s1 + $0x558] sm:$0xff]
  %v192 = vld [vmem:[%s1 + $0x560] sm:$0xff]
  %v193 = vld [vmem:[%s1 + $0x568] sm:$0xff]
  %v194 = vld [vmem:[%s1 + $0x570] sm:$0xff]
  %v195 = vld [vmem:[%s1 + $0x578] sm:$0xff]
  %v196 = vld [vmem:[%s1 + $0x580] sm:$0xff]
  %v197 = vld [vmem:[%s1 + $0x588] sm:$0xff]
  %v198 = vld [vmem:[%s1 + $0x590] sm:$0xff]
  %v199 = vld [vmem:[%s1 + $0x598] sm:$0xff]
  %v200 = vld [vmem:[%s1 + $0x5a0] sm:$0xff]
  %v201 = vld [vmem:[%s1 + $0x5a8] sm:$0xff]
  %v202 = vld [vmem:[%s1 + $0x5b0] sm:$0xff]
  %v203 = vld [vmem:[%s1 + $0x5b8] sm:$0xff]
  %v204 = vld [vmem:[%s1 + $0x5c0] sm:$0xff]
  %v205 = vld [vmem:[%s1 + $0x5c8] sm:$0xff]
  %v206 = vld [vmem:[%s1 + $0x5d0] sm:$0xff]
  %v207 = vld [vmem:[%s1 + $0x5d8] sm:$0xff]
  %v208 = vld [vmem:[%s1 + $0x5e0] sm:$0xff]
  %v209 = vld [vmem:[%s1 + $0x5e8] sm:$0xff]
  %v210 = vld [vmem:[%s1 + $0x5f0] sm:$0xff]
  %v211 = vld [vmem:[%s1 + $0x5f8] sm:$0xff]
  %v212 = vld [vmem:[%s2] sm:$0x3]
  %v214 = vlaneseq
  %v215 = vshrl.u32 %v214, 7
  %v216 = vsub.s32 0, %v215
  %v217 = vrot.slane %v212, %v216
  %v218 = vlaneseq
  %v219 = vshrl.u32 %v218, 7
  %v220 = vsub.s32 1, %v219
  %v221 = vrot.slane %v212, %v220
  %224 = vmatprep.subr.mxu0 %v21
  %225 = vmatpush1.msra.mxu0 %v20
  %226 = vmatprep.subr.mxu0 %v23
  %227 = vmatpush1.msra.mxu0 %v22
  %228 = vmatprep.subr.mxu0 %v25
  %229 = vmatpush1.msra.mxu0 %v24
  %230 = vmatprep.subr.mxu0 %v27
  %231 = vmatpush1.msra.mxu0 %v26
  %232 = vmatprep.subr.mxu0 %v29
  %233 = vmatpush1.msra.mxu0 %v28
  %234 = vmatprep.subr.mxu0 %v31
  %235 = vmatpush1.msra.mxu0 %v30
  %236 = vmatprep.subr.mxu0 %v33
  %237 = vmatpush1.msra.mxu0 %v32
  %238 = vmatprep.subr.mxu0 %v35
  %239 = vmatpush1.msra.mxu0 %v34
  %240 = vmatprep.subr.mxu0 %v37
  %241 = vmatpush1.msra.mxu0 %v36
  %242 = vmatprep.subr.mxu0 %v39
  %243 = vmatpush1.msra.mxu0 %v38
  %244 = vmatprep.subr.mxu0 %v41
  %245 = vmatpush1.msra.mxu0 %v40
  %246 = vmatprep.subr.mxu0 %v43
  %247 = vmatpush1.msra.mxu0 %v42
  %248 = vmatprep.subr.mxu0 %v45
  %249 = vmatpush1.msra.mxu0 %v44
  %250 = vmatprep.subr.mxu0 %v47
  %251 = vmatpush1.msra.mxu0 %v46
  %252 = vmatprep.subr.mxu0 %v49
  %253 = vmatpush1.msra.mxu0 %v48
  %254 = vmatprep.subr.mxu0 %v51
  %255 = vmatpush1.msra.mxu0 %v50
  %256 = vmatprep.subr.mxu0 %v53
  %257 = vmatpush1.msra.mxu0 %v52
  %258 = vmatprep.subr.mxu0 %v55
  %259 = vmatpush1.msra.mxu0 %v54
  %260 = vmatprep.subr.mxu0 %v57
  %261 = vmatpush1.msra.mxu0 %v56
  %262 = vmatprep.subr.mxu0 %v59
  %263 = vmatpush1.msra.mxu0 %v58
  %264 = vmatprep.subr.mxu0 %v61
  %265 = vmatpush1.msra.mxu0 %v60
  %266 = vmatprep.subr.mxu0 %v63
  %267 = vmatpush1.msra.mxu0 %v62
  %268 = vmatprep.subr.mxu0 %v65
  %269 = vmatpush1.msra.mxu0 %v64
  %270 = vmatprep.subr.mxu0 %v67
  %271 = vmatpush1.msra.mxu0 %v66
  %272 = vmatprep.subr.mxu0 %v69
  %273 = vmatpush1.msra.mxu0 %v68
  %274 = vmatprep.subr.mxu0 %v71
  %275 = vmatpush1.msra.mxu0 %v70
  %276 = vmatprep.subr.mxu0 %v73
  %277 = vmatpush1.msra.mxu0 %v72
  %278 = vmatprep.subr.mxu0 %v75
  %279 = vmatpush1.msra.mxu0 %v74
  %280 = vmatprep.subr.mxu0 %v77
  %281 = vmatpush1.msra.mxu0 %v76
  %282 = vmatprep.subr.mxu0 %v79
  %283 = vmatpush1.msra.mxu0 %v78
  %284 = vmatprep.subr.mxu0 %v81
  %285 = vmatpush1.msra.mxu0 %v80
  %286 = vmatprep.subr.mxu0 %v83
  %287 = vmatpush1.msra.mxu0 %v82
  %288 = vmatprep.mubr.f32.mxu0 %v15
  %289 = vmatmul.mubr.f32.gmra.mrb[0].mxu0 %v14
  %v290 = vpop.f32.mrb[0].mxu0
  %v291 = vadd.f32 %v217, %v290
  %v292 = vpop.f32.mrb[0].mxu0
  %v293 = vadd.f32 %v221, %v292
  %294 = vdwg.mxu0
  %295 = vmatprep.subr.mxu0 %v85
  %296 = vmatpush1.msra.mxu0 %v84
  %297 = vmatprep.subr.mxu0 %v87
  %298 = vmatpush1.msra.mxu0 %v86
  %299 = vmatprep.subr.mxu0 %v89
  %300 = vmatpush1.msra.mxu0 %v88
  %301 = vmatprep.subr.mxu0 %v91
  %302 = vmatpush1.msra.mxu0 %v90
  %303 = vmatprep.subr.mxu0 %v93
  %304 = vmatpush1.msra.mxu0 %v92
  %305 = vmatprep.subr.mxu0 %v95
  %306 = vmatpush1.msra.mxu0 %v94
  %307 = vmatprep.subr.mxu0 %v97
  %308 = vmatpush1.msra.mxu0 %v96
  %309 = vmatprep.subr.mxu0 %v99
  %310 = vmatpush1.msra.mxu0 %v98
  %311 = vmatprep.subr.mxu0 %v101
  %312 = vmatpush1.msra.mxu0 %v100
  %313 = vmatprep.subr.mxu0 %v103
  %314 = vmatpush1.msra.mxu0 %v102
  %315 = vmatprep.subr.mxu0 %v105
  %316 = vmatpush1.msra.mxu0 %v104
  %317 = vmatprep.subr.mxu0 %v107
  %318 = vmatpush1.msra.mxu0 %v106
  %319 = vmatprep.subr.mxu0 %v109
  %320 = vmatpush1.msra.mxu0 %v108
  %321 = vmatprep.subr.mxu0 %v111
  %322 = vmatpush1.msra.mxu0 %v110
  %323 = vmatprep.subr.mxu0 %v113
  %324 = vmatpush1.msra.mxu0 %v112
  %325 = vmatprep.subr.mxu0 %v115
  %326 = vmatpush1.msra.mxu0 %v114
  %327 = vmatprep.subr.mxu0 %v117
  %328 = vmatpush1.msra.mxu0 %v116
  %329 = vmatprep.subr.mxu0 %v119
  %330 = vmatpush1.msra.mxu0 %v118
  %331 = vmatprep.subr.mxu0 %v121
  %332 = vmatpush1.msra.mxu0 %v120
  %333 = vmatprep.subr.mxu0 %v123
  %334 = vmatpush1.msra.mxu0 %v122
  %335 = vmatprep.subr.mxu0 %v125
  %336 = vmatpush1.msra.mxu0 %v124
  %337 = vmatprep.subr.mxu0 %v127
  %338 = vmatpush1.msra.mxu0 %v126
  %339 = vmatprep.subr.mxu0 %v129
  %340 = vmatpush1.msra.mxu0 %v128
  %341 = vmatprep.subr.mxu0 %v131
  %342 = vmatpush1.msra.mxu0 %v130
  %343 = vmatprep.subr.mxu0 %v133
  %344 = vmatpush1.msra.mxu0 %v132
  %345 = vmatprep.subr.mxu0 %v135
  %346 = vmatpush1.msra.mxu0 %v134
  %347 = vmatprep.subr.mxu0 %v137
  %348 = vmatpush1.msra.mxu0 %v136
  %349 = vmatprep.subr.mxu0 %v139
  %350 = vmatpush1.msra.mxu0 %v138
  %351 = vmatprep.subr.mxu0 %v141
  %352 = vmatpush1.msra.mxu0 %v140
  %353 = vmatprep.subr.mxu0 %v143
  %354 = vmatpush1.msra.mxu0 %v142
  %355 = vmatprep.subr.mxu0 %v145
  %356 = vmatpush1.msra.mxu0 %v144
  %357 = vmatprep.subr.mxu0 %v147
  %358 = vmatpush1.msra.mxu0 %v146
  %359 = vmatprep.mubr.f32.mxu0 %v17
  %360 = vmatmul.mubr.f32.gmra.mrb[0].mxu0 %v16
  %v361 = vpop.f32.mrb[0].mxu0
  %v362 = vadd.f32 %v291, %v361
  %v363 = vpop.f32.mrb[0].mxu0
  %v364 = vadd.f32 %v293, %v363
  %365 = vdwg.mxu0
  %366 = vmatprep.subr.mxu0 %v149
  %367 = vmatpush1.msra.mxu0 %v148
  %368 = vmatprep.subr.mxu0 %v151
  %369 = vmatpush1.msra.mxu0 %v150
  %370 = vmatprep.subr.mxu0 %v153
  %371 = vmatpush1.msra.mxu0 %v152
  %372 = vmatprep.subr.mxu0 %v155
  %373 = vmatpush1.msra.mxu0 %v154
  %374 = vmatprep.subr.mxu0 %v157
  %375 = vmatpush1.msra.mxu0 %v156
  %376 = vmatprep.subr.mxu0 %v159
  %377 = vmatpush1.msra.mxu0 %v158
  %378 = vmatprep.subr.mxu0 %v161
  %379 = vmatpush1.msra.mxu0 %v160
  %380 = vmatprep.subr.mxu0 %v163
  %381 = vmatpush1.msra.mxu0 %v162
  %382 = vmatprep.subr.mxu0 %v165
  %383 = vmatpush1.msra.mxu0 %v164
  %384 = vmatprep.subr.mxu0 %v167
  %385 = vmatpush1.msra.mxu0 %v166
  %386 = vmatprep.subr.mxu0 %v169
  %387 = vmatpush1.msra.mxu0 %v168
  %388 = vmatprep.subr.mxu0 %v171
  %389 = vmatpush1.msra.mxu0 %v170
  %390 = vmatprep.subr.mxu0 %v173
  %391 = vmatpush1.msra.mxu0 %v172
  %392 = vmatprep.subr.mxu0 %v175
  %393 = vmatpush1.msra.mxu0 %v174
  %394 = vmatprep.subr.mxu0 %v177
  %395 = vmatpush1.msra.mxu0 %v176
  %396 = vmatprep.subr.mxu0 %v179
  %397 = vmatpush1.msra.mxu0 %v178
  %398 = vmatprep.subr.mxu0 %v181
  %399 = vmatpush1.msra.mxu0 %v180
  %400 = vmatprep.subr.mxu0 %v183
  %401 = vmatpush1.msra.mxu0 %v182
  %402 = vmatprep.subr.mxu0 %v185
  %403 = vmatpush1.msra.mxu0 %v184
  %404 = vmatprep.subr.mxu0 %v187
  %405 = vmatpush1.msra.mxu0 %v186
  %406 = vmatprep.subr.mxu0 %v189
  %407 = vmatpush1.msra.mxu0 %v188
  %408 = vmatprep.subr.mxu0 %v191
  %409 = vmatpush1.msra.mxu0 %v190
  %410 = vmatprep.subr.mxu0 %v193
  %411 = vmatpush1.msra.mxu0 %v192
  %412 = vmatprep.subr.mxu0 %v195
  %413 = vmatpush1.msra.mxu0 %v194
  %414 = vmatprep.subr.mxu0 %v197
  %415 = vmatpush1.msra.mxu0 %v196
  %416 = vmatprep.subr.mxu0 %v199
  %417 = vmatpush1.msra.mxu0 %v198
  %418 = vmatprep.subr.mxu0 %v201
  %419 = vmatpush1.msra.mxu0 %v200
  %420 = vmatprep.subr.mxu0 %v203
  %421 = vmatpush1.msra.mxu0 %v202
  %422 = vmatprep.subr.mxu0 %v205
  %423 = vmatpush1.msra.mxu0 %v204
  %424 = vmatprep.subr.mxu0 %v207
  %425 = vmatpush1.msra.mxu0 %v206
  %426 = vmatprep.subr.mxu0 %v209
  %427 = vmatpush1.msra.mxu0 %v208
  %428 = vmatprep.subr.mxu0 %v211
  %429 = vmatpush1.msra.mxu0 %v210
  %430 = vmatprep.mubr.f32.mxu0 %v19
  %431 = vmatmul.mubr.f32.gmra.mrb[0].mxu0 %v18
  %v432 = vpop.f32.mrb[0].mxu0
  %v433 = vadd.f32 %v362, %v432
  %v434 = vpop.f32.mrb[0].mxu0
  %v435 = vadd.f32 %v364, %v434
  %436 = vdwg.mxu0
  %437 = vst [vmem:[%s3] sm:$0xff] %v433
  %438 = vst [vmem:[%s3 + $0x8] sm:$0xff] %v435
  // Predicated region
  $region14: #{tsn_mmc_forward.3} parent=0 // pred_check
    _
  $region15: #{tsn_mmc_forward.3} parent=0 // pred_check_branch
    %440 = sbr.rel (0) target = $region17
  $region16: #{tsn_mmc_forward.3} parent=0 // pred_region
    _
  $region17: #{tsn_mmc_forward.3} parent=0 // pred_fallthru
    _
  // Predicated region
  $region18: #{tsn_mmc_forward.3} parent=0 // pred_check
    _
  $region19: #{tsn_mmc_forward.3} parent=0 // pred_check_branch
    %442 = sbr.rel (0) target = $region21
  $region20: #{tsn_mmc_forward.3} parent=0 // pred_region
    _
  $region21: #{tsn_mmc_forward.3} parent=0 // pred_fallthru
    _

// kernel: tsn_mmc_forward.2
$region0: #{tsn_mmc_forward.2}
  #allocation0 [shape = 'u32[]', space=smem, size = 0x4, offset = 0x4, fixed_abs, tag = 'smem constant byte address 0x4 - core index']
  #allocation1 [shape = 'u32[144,128]{1,0:T(1,128)}', space=vmem, size = 0x12000, scoped, tag = 'internal scratch']
  %s0 = inlined_call_operand.vmem [shape: f32[2048,32], index: 0, kind: input, shape index: {}]
  %s1 = inlined_call_operand.vmem [shape: f32[32,32], index: 1, kind: input, shape index: {}]
  %s2 = inlined_call_operand.vmem [shape: f32[1,32], index: 2, kind: input, shape index: {}]
  %s3 = inlined_call_operand.vmem [shape: f32[2,2048], index: 3, kind: input, shape index: {}]
  %s4 = inlined_call_operand.vmem [shape: f32[32,256], index: 4, kind: input, shape index: {}]
  %s5 = inlined_call_operand.vmem [shape: f32[1,256], index: 5, kind: input, shape index: {}]
  %s6 = inlined_call_operand.hbm [shape: f32[2,256], index: 6, kind: output, shape index: {}]
  %s7 = sld [smem:[#allocation0]]
  $region34: #{tsn_mmc_forward.2} parent=0
    _
  %s9 = ssub.s32 1, %s7
  %s10 = scalar_select 0, %s9, %s7
  $region1: #{tsn_mmc_forward.2} parent=0
    #allocation2 [shape = 'u8[2048]{0}', space=vmem, size = 0x800, scoped, tag = 'output window, operand 0, single buffered']
    #allocation3 [shape = 's32[1]{0}', space=sflag, size = 0x4, scoped, tag = 'scoped memory for tsn_mmc_forward.2']
    %11 = vsyncpa [#allocation3], 0
    // Predicated region
    $region2: #{tsn_mmc_forward.2} parent=1 // pred_check
      _
    $region3: #{tsn_mmc_forward.2} parent=1 // pred_check_branch
      %13 = sbr.rel (0) target = $region5
    $region4: #{tsn_mmc_forward.2} parent=1 // pred_region
      _
    $region5: #{tsn_mmc_forward.2} parent=1 // pred_fallthru
      _
    // Predicated region
    $region6: #{tsn_mmc_forward.2} parent=1 // pred_check
      _
    $region7: #{tsn_mmc_forward.2} parent=1 // pred_check_branch
      %15 = sbr.rel (0) target = $region9
    $region8: #{tsn_mmc_forward.2} parent=1 // pred_region
      _
    $region9: #{tsn_mmc_forward.2} parent=1 // pred_fallthru
      _
    // Predicated region
    $region10: #{tsn_mmc_forward.2} parent=1 // pred_check
      _
    $region11: #{tsn_mmc_forward.2} parent=1 // pred_check_branch
      %17 = sbr.rel (0) target = $region13
    $region12: #{tsn_mmc_forward.2} parent=1 // pred_region
      _
    $region13: #{tsn_mmc_forward.2} parent=1 // pred_fallthru
      _
    // Predicated region
    $region14: #{tsn_mmc_forward.2} parent=1 // pred_check
      _
    $region15: #{tsn_mmc_forward.2} parent=1 // pred_check_branch
      %19 = sbr.rel (0) target = $region17
    $region16: #{tsn_mmc_forward.2} parent=1 // pred_region
      _
    $region17: #{tsn_mmc_forward.2} parent=1 // pred_fallthru
      _
    // Predicated region
    $region18: #{tsn_mmc_forward.2} parent=1 // pred_check
      _
    $region19: #{tsn_mmc_forward.2} parent=1 // pred_check_branch
      %21 = sbr.rel (0) target = $region21
    $region20: #{tsn_mmc_forward.2} parent=1 // pred_region
      _
    $region21: #{tsn_mmc_forward.2} parent=1 // pred_fallthru
      _
    // Predicated region
    $region22: #{tsn_mmc_forward.2} parent=1 // pred_check
      _
    $region23: #{tsn_mmc_forward.2} parent=1 // pred_check_branch
      %23 = sbr.rel (0) target = $region25
    $region24: #{tsn_mmc_forward.2} parent=1 // pred_region
      _
    $region25: #{tsn_mmc_forward.2} parent=1 // pred_fallthru
      _
    %v24 = vld [vmem:[%s0] sm:$0xff]
    %v25 = vld [vmem:[%s0 + $0x8] sm:$0xff]
    %v26 = vld [vmem:[%s0 + $0x10] sm:$0xff]
    %v27 = vld [vmem:[%s0 + $0x18] sm:$0xff]
    %v28 = vld [vmem:[%s0 + $0x20] sm:$0xff]
    %v29 = vld [vmem:[%s0 + $0x28] sm:$0xff]
    %v30 = vld [vmem:[%s0 + $0x30] sm:$0xff]
    %v31 = vld [vmem:[%s0 + $0x38] sm:$0xff]
    %v32 = vld [vmem:[%s0 + $0x40] sm:$0xff]
    %v33 = vld [vmem:[%s0 + $0x48] sm:$0xff]
    %v34 = vld [vmem:[%s0 + $0x50] sm:$0xff]
    %v35 = vld [vmem:[%s0 + $0x58] sm:$0xff]
    %v36 = vld [vmem:[%s0 + $0x60] sm:$0xff]
    %v37 = vld [vmem:[%s0 + $0x68] sm:$0xff]
    %v38 = vld [vmem:[%s0 + $0x70] sm:$0xff]
    %v39 = vld [vmem:[%s0 + $0x78] sm:$0xff]
    %v40 = vld [vmem:[%s0 + $0x80] sm:$0xff]
    %v41 = vld [vmem:[%s0 + $0x88] sm:$0xff]
    %v42 = vld [vmem:[%s0 + $0x90] sm:$0xff]
    %v43 = vld [vmem:[%s0 + $0x98] sm:$0xff]
    %v44 = vld [vmem:[%s0 + $0xa0] sm:$0xff]
    %v45 = vld [vmem:[%s0 + $0xa8] sm:$0xff]
    %v46 = vld [vmem:[%s0 + $0xb0] sm:$0xff]
    %v47 = vld [vmem:[%s0 + $0xb8] sm:$0xff]
    %v48 = vld [vmem:[%s0 + $0xc0] sm:$0xff]
    %v49 = vld [vmem:[%s0 + $0xc8] sm:$0xff]
    %v50 = vld [vmem:[%s0 + $0xd0] sm:$0xff]
    %v51 = vld [vmem:[%s0 + $0xd8] sm:$0xff]
    %v52 = vld [vmem:[%s0 + $0xe0] sm:$0xff]
    %v53 = vld [vmem:[%s0 + $0xe8] sm:$0xff]
    %v54 = vld [vmem:[%s0 + $0xf0] sm:$0xff]
    %v55 = vld [vmem:[%s0 + $0xf8] sm:$0xff]
    %v56 = vld [vmem:[%s0 + $0x100] sm:$0xff]
    %v57 = vld [vmem:[%s0 + $0x108] sm:$0xff]
    %v58 = vld [vmem:[%s0 + $0x110] sm:$0xff]
    %v59 = vld [vmem:[%s0 + $0x118] sm:$0xff]
    %v60 = vld [vmem:[%s0 + $0x120] sm:$0xff]
    %v61 = vld [vmem:[%s0 + $0x128] sm:$0xff]
    %v62 = vld [vmem:[%s0 + $0x130] sm:$0xff]
    %v63 = vld [vmem:[%s0 + $0x138] sm:$0xff]
    %v64 = vld [vmem:[%s0 + $0x140] sm:$0xff]
    %v65 = vld [vmem:[%s0 + $0x148] sm:$0xff]
    %v66 = vld [vmem:[%s0 + $0x150] sm:$0xff]
    %v67 = vld [vmem:[%s0 + $0x158] sm:$0xff]
    %v68 = vld [vmem:[%s0 + $0x160] sm:$0xff]
    %v69 = vld [vmem:[%s0 + $0x168] sm:$0xff]
    %v70 = vld [vmem:[%s0 + $0x170] sm:$0xff]
    %v71 = vld [vmem:[%s0 + $0x178] sm:$0xff]
    %v72 = vld [vmem:[%s0 + $0x180] sm:$0xff]
    %v73 = vld [vmem:[%s0 + $0x188] sm:$0xff]
    %v74 = vld [vmem:[%s0 + $0x190] sm:$0xff]
    %v75 = vld [vmem:[%s0 + $0x198] sm:$0xff]
    %v76 = vld [vmem:[%s0 + $0x1a0] sm:$0xff]
    %v77 = vld [vmem:[%s0 + $0x1a8] sm:$0xff]
    %v78 = vld [vmem:[%s0 + $0x1b0] sm:$0xff]
    %v79 = vld [vmem:[%s0 + $0x1b8] sm:$0xff]
    %v80 = vld [vmem:[%s0 + $0x1c0] sm:$0xff]
    %v81 = vld [vmem:[%s0 + $0x1c8] sm:$0xff]
    %v82 = vld [vmem:[%s0 + $0x1d0] sm:$0xff]
    %v83 = vld [vmem:[%s0 + $0x1d8] sm:$0xff]
    %v84 = vld [vmem:[%s0 + $0x1e0] sm:$0xff]
    %v85 = vld [vmem:[%s0 + $0x1e8] sm:$0xff]
    %v86 = vld [vmem:[%s0 + $0x1f0] sm:$0xff]
    %v87 = vld [vmem:[%s0 + $0x1f8] sm:$0xff]
    %v88 = vld [vmem:[%s0 + $0x200] sm:$0xff]
    %v89 = vld [vmem:[%s0 + $0x208] sm:$0xff]
    %v90 = vld [vmem:[%s0 + $0x210] sm:$0xff]
    %v91 = vld [vmem:[%s0 + $0x218] sm:$0xff]
    %v92 = vld [vmem:[%s0 + $0x220] sm:$0xff]
    %v93 = vld [vmem:[%s0 + $0x228] sm:$0xff]
    %v94 = vld [vmem:[%s0 + $0x230] sm:$0xff]
    %v95 = vld [vmem:[%s0 + $0x238] sm:$0xff]
    %v96 = vld [vmem:[%s0 + $0x240] sm:$0xff]
    %v97 = vld [vmem:[%s0 + $0x248] sm:$0xff]
    %v98 = vld [vmem:[%s0 + $0x250] sm:$0xff]
    %v99 = vld [vmem:[%s0 + $0x258] sm:$0xff]
    %v100 = vld [vmem:[%s0 + $0x260] sm:$0xff]
    %v101 = vld [vmem:[%s0 + $0x268] sm:$0xff]
    %v102 = vld [vmem:[%s0 + $0x270] sm:$0xff]
    %v103 = vld [vmem:[%s0 + $0x278] sm:$0xff]
    %v104 = vld [vmem:[%s0 + $0x280] sm:$0xff]
    %v105 = vld [vmem:[%s0 + $0x288] sm:$0xff]
    %v106 = vld [vmem:[%s0 + $0x290] sm:$0xff]
    %v107 = vld [vmem:[%s0 + $0x298] sm:$0xff]
    %v108 = vld [vmem:[%s0 + $0x2a0] sm:$0xff]
    %v109 = vld [vmem:[%s0 + $0x2a8] sm:$0xff]
    %v110 = vld [vmem:[%s0 + $0x2b0] sm:$0xff]
    %v111 = vld [vmem:[%s0 + $0x2b8] sm:$0xff]
    %v112 = vld [vmem:[%s0 + $0x2c0] sm:$0xff]
    %v113 = vld [vmem:[%s0 + $0x2c8] sm:$0xff]
    %v114 = vld [vmem:[%s0 + $0x2d0] sm:$0xff]
    %v115 = vld [vmem:[%s0 + $0x2d8] sm:$0xff]
    %v116 = vld [vmem:[%s0 + $0x2e0] sm:$0xff]
    %v117 = vld [vmem:[%s0 + $0x2e8] sm:$0xff]
    %v118 = vld [vmem:[%s0 + $0x2f0] sm:$0xff]
    %v119 = vld [vmem:[%s0 + $0x2f8] sm:$0xff]
    %v120 = vld [vmem:[%s0 + $0x300] sm:$0xff]
    %v121 = vld [vmem:[%s0 + $0x308] sm:$0xff]
    %v122 = vld [vmem:[%s0 + $0x310] sm:$0xff]
    %v123 = vld [vmem:[%s0 + $0x318] sm:$0xff]
    %v124 = vld [vmem:[%s0 + $0x320] sm:$0xff]
    %v125 = vld [vmem:[%s0 + $0x328] sm:$0xff]
    %v126 = vld [vmem:[%s0 + $0x330] sm:$0xff]
    %v127 = vld [vmem:[%s0 + $0x338] sm:$0xff]
    %v128 = vld [vmem:[%s0 + $0x340] sm:$0xff]
    %v129 = vld [vmem:[%s0 + $0x348] sm:$0xff]
    %v130 = vld [vmem:[%s0 + $0x350] sm:$0xff]
    %v131 = vld [vmem:[%s0 + $0x358] sm:$0xff]
    %v132 = vld [vmem:[%s0 + $0x360] sm:$0xff]
    %v133 = vld [vmem:[%s0 + $0x368] sm:$0xff]
    %v134 = vld [vmem:[%s0 + $0x370] sm:$0xff]
    %v135 = vld [vmem:[%s0 + $0x378] sm:$0xff]
    %v136 = vld [vmem:[%s0 + $0x380] sm:$0xff]
    %v137 = vld [vmem:[%s0 + $0x388] sm:$0xff]
    %v138 = vld [vmem:[%s0 + $0x390] sm:$0xff]
    %v139 = vld [vmem:[%s0 + $0x398] sm:$0xff]
    %v140 = vld [vmem:[%s0 + $0x3a0] sm:$0xff]
    %v141 = vld [vmem:[%s0 + $0x3a8] sm:$0xff]
    %v142 = vld [vmem:[%s0 + $0x3b0] sm:$0xff]
    %v143 = vld [vmem:[%s0 + $0x3b8] sm:$0xff]
    %v144 = vld [vmem:[%s0 + $0x3c0] sm:$0xff]
    %v145 = vld [vmem:[%s0 + $0x3c8] sm:$0xff]
    %v146 = vld [vmem:[%s0 + $0x3d0] sm:$0xff]
    %v147 = vld [vmem:[%s0 + $0x3d8] sm:$0xff]
    %v148 = vld [vmem:[%s0 + $0x3e0] sm:$0xff]
    %v149 = vld [vmem:[%s0 + $0x3e8] sm:$0xff]
    %v150 = vld [vmem:[%s0 + $0x3f0] sm:$0xff]
    %v151 = vld [vmem:[%s0 + $0x3f8] sm:$0xff]
    %v152 = vld [vmem:[%s0 + $0x400] sm:$0xff]
    %v153 = vld [vmem:[%s0 + $0x408] sm:$0xff]
    %v154 = vld [vmem:[%s0 + $0x410] sm:$0xff]
    %v155 = vld [vmem:[%s0 + $0x418] sm:$0xff]
    %v156 = vld [vmem:[%s0 + $0x420] sm:$0xff]
    %v157 = vld [vmem:[%s0 + $0x428] sm:$0xff]
    %v158 = vld [vmem:[%s0 + $0x430] sm:$0xff]
    %v159 = vld [vmem:[%s0 + $0x438] sm:$0xff]
    %v160 = vld [vmem:[%s0 + $0x440] sm:$0xff]
    %v161 = vld [vmem:[%s0 + $0x448] sm:$0xff]
    %v162 = vld [vmem:[%s0 + $0x450] sm:$0xff]
    %v163 = vld [vmem:[%s0 + $0x458] sm:$0xff]
    %v164 = vld [vmem:[%s0 + $0x460] sm:$0xff]
    %v165 = vld [vmem:[%s0 + $0x468] sm:$0xff]
    %v166 = vld [vmem:[%s0 + $0x470] sm:$0xff]
    %v167 = vld [vmem:[%s0 + $0x478] sm:$0xff]
    %v168 = vld [vmem:[%s0 + $0x480] sm:$0xff]
    %v169 = vld [vmem:[%s0 + $0x488] sm:$0xff]
    %v170 = vld [vmem:[%s0 + $0x490] sm:$0xff]
    %v171 = vld [vmem:[%s0 + $0x498] sm:$0xff]
    %v172 = vld [vmem:[%s0 + $0x4a0] sm:$0xff]
    %v173 = vld [vmem:[%s0 + $0x4a8] sm:$0xff]
    %v174 = vld [vmem:[%s0 + $0x4b0] sm:$0xff]
    %v175 = vld [vmem:[%s0 + $0x4b8] sm:$0xff]
    %v176 = vld [vmem:[%s0 + $0x4c0] sm:$0xff]
    %v177 = vld [vmem:[%s0 + $0x4c8] sm:$0xff]
    %v178 = vld [vmem:[%s0 + $0x4d0] sm:$0xff]
    %v179 = vld [vmem:[%s0 + $0x4d8] sm:$0xff]
    %v180 = vld [vmem:[%s0 + $0x4e0] sm:$0xff]
    %v181 = vld [vmem:[%s0 + $0x4e8] sm:$0xff]
    %v182 = vld [vmem:[%s0 + $0x4f0] sm:$0xff]
    %v183 = vld [vmem:[%s0 + $0x4f8] sm:$0xff]
    %v184 = vld [vmem:[%s0 + $0x500] sm:$0xff]
    %v185 = vld [vmem:[%s0 + $0x508] sm:$0xff]
    %v186 = vld [vmem:[%s0 + $0x510] sm:$0xff]
    %v187 = vld [vmem:[%s0 + $0x518] sm:$0xff]
    %v188 = vld [vmem:[%s0 + $0x520] sm:$0xff]
    %v189 = vld [vmem:[%s0 + $0x528] sm:$0xff]
    %v190 = vld [vmem:[%s0 + $0x530] sm:$0xff]
    %v191 = vld [vmem:[%s0 + $0x538] sm:$0xff]
    %v192 = vld [vmem:[%s0 + $0x540] sm:$0xff]
    %v193 = vld [vmem:[%s0 + $0x548] sm:$0xff]
    %v194 = vld [vmem:[%s0 + $0x550] sm:$0xff]
    %v195 = vld [vmem:[%s0 + $0x558] sm:$0xff]
    %v196 = vld [vmem:[%s0 + $0x560] sm:$0xff]
    %v197 = vld [vmem:[%s0 + $0x568] sm:$0xff]
    %v198 = vld [vmem:[%s0 + $0x570] sm:$0xff]
    %v199 = vld [vmem:[%s0 + $0x578] sm:$0xff]
    %v200 = vld [vmem:[%s0 + $0x580] sm:$0xff]
    %v201 = vld [vmem:[%s0 + $0x588] sm:$0xff]
    %v202 = vld [vmem:[%s0 + $0x590] sm:$0xff]
    %v203 = vld [vmem:[%s0 + $0x598] sm:$0xff]
    %v204 = vld [vmem:[%s0 + $0x5a0] sm:$0xff]
    %v205 = vld [vmem:[%s0 + $0x5a8] sm:$0xff]
    %v206 = vld [vmem:[%s0 + $0x5b0] sm:$0xff]
    %v207 = vld [vmem:[%s0 + $0x5b8] sm:$0xff]
    %v208 = vld [vmem:[%s0 + $0x5c0] sm:$0xff]
    %v209 = vld [vmem:[%s0 + $0x5c8] sm:$0xff]
    %v210 = vld [vmem:[%s0 + $0x5d0] sm:$0xff]
    %v211 = vld [vmem:[%s0 + $0x5d8] sm:$0xff]
    %v212 = vld [vmem:[%s0 + $0x5e0] sm:$0xff]
    %v213 = vld [vmem:[%s0 + $0x5e8] sm:$0xff]
    %v214 = vld [vmem:[%s0 + $0x5f0] sm:$0xff]
    %v215 = vld [vmem:[%s0 + $0x5f8] sm:$0xff]
    %v216 = vld [vmem:[%s0 + $0x600] sm:$0xff]
    %v217 = vld [vmem:[%s0 + $0x608] sm:$0xff]
    %v218 = vld [vmem:[%s0 + $0x610] sm:$0xff]
    %v219 = vld [vmem:[%s0 + $0x618] sm:$0xff]
    %v220 = vld [vmem:[%s0 + $0x620] sm:$0xff]
    %v221 = vld [vmem:[%s0 + $0x628] sm:$0xff]
    %v222 = vld [vmem:[%s0 + $0x630] sm:$0xff]
    %v223 = vld [vmem:[%s0 + $0x638] sm:$0xff]
    %v224 = vld [vmem:[%s0 + $0x640] sm:$0xff]
    %v225 = vld [vmem:[%s0 + $0x648] sm:$0xff]
    %v226 = vld [vmem:[%s0 + $0x650] sm:$0xff]
    %v227 = vld [vmem:[%s0 + $0x658] sm:$0xff]
    %v228 = vld [vmem:[%s0 + $0x660] sm:$0xff]
    %v229 = vld [vmem:[%s0 + $0x668] sm:$0xff]
    %v230 = vld [vmem:[%s0 + $0x670] sm:$0xff]
    %v231 = vld [vmem:[%s0 + $0x678] sm:$0xff]
    %v232 = vld [vmem:[%s0 + $0x680] sm:$0xff]
    %v233 = vld [vmem:[%s0 + $0x688] sm:$0xff]
    %v234 = vld [vmem:[%s0 + $0x690] sm:$0xff]
    %v235 = vld [vmem:[%s0 + $0x698] sm:$0xff]
    %v236 = vld [vmem:[%s0 + $0x6a0] sm:$0xff]
    %v237 = vld [vmem:[%s0 + $0x6a8] sm:$0xff]
    %v238 = vld [vmem:[%s0 + $0x6b0] sm:$0xff]
    %v239 = vld [vmem:[%s0 + $0x6b8] sm:$0xff]
    %v240 = vld [vmem:[%s0 + $0x6c0] sm:$0xff]
    %v241 = vld [vmem:[%s0 + $0x6c8] sm:$0xff]
    %v242 = vld [vmem:[%s0 + $0x6d0] sm:$0xff]
    %v243 = vld [vmem:[%s0 + $0x6d8] sm:$0xff]
    %v244 = vld [vmem:[%s0 + $0x6e0] sm:$0xff]
    %v245 = vld [vmem:[%s0 + $0x6e8] sm:$0xff]
    %v246 = vld [vmem:[%s0 + $0x6f0] sm:$0xff]
    %v247 = vld [vmem:[%s0 + $0x6f8] sm:$0xff]
    %v248 = vld [vmem:[%s0 + $0x700] sm:$0xff]
    %v249 = vld [vmem:[%s0 + $0x708] sm:$0xff]
    %v250 = vld [vmem:[%s0 + $0x710] sm:$0xff]
    %v251 = vld [vmem:[%s0 + $0x718] sm:$0xff]
    %v252 = vld [vmem:[%s0 + $0x720] sm:$0xff]
    %v253 = vld [vmem:[%s0 + $0x728] sm:$0xff]
    %v254 = vld [vmem:[%s0 + $0x730] sm:$0xff]
    %v255 = vld [vmem:[%s0 + $0x738] sm:$0xff]
    %v256 = vld [vmem:[%s0 + $0x740] sm:$0xff]
    %v257 = vld [vmem:[%s0 + $0x748] sm:$0xff]
    %v258 = vld [vmem:[%s0 + $0x750] sm:$0xff]
    %v259 = vld [vmem:[%s0 + $0x758] sm:$0xff]
    %v260 = vld [vmem:[%s0 + $0x760] sm:$0xff]
    %v261 = vld [vmem:[%s0 + $0x768] sm:$0xff]
    %v262 = vld [vmem:[%s0 + $0x770] sm:$0xff]
    %v263 = vld [vmem:[%s0 + $0x778] sm:$0xff]
    %v264 = vld [vmem:[%s0 + $0x780] sm:$0xff]
    %v265 = vld [vmem:[%s0 + $0x788] sm:$0xff]
    %v266 = vld [vmem:[%s0 + $0x790] sm:$0xff]
    %v267 = vld [vmem:[%s0 + $0x798] sm:$0xff]
    %v268 = vld [vmem:[%s0 + $0x7a0] sm:$0xff]
    %v269 = vld [vmem:[%s0 + $0x7a8] sm:$0xff]
    %v270 = vld [vmem:[%s0 + $0x7b0] sm:$0xff]
    %v271 = vld [vmem:[%s0 + $0x7b8] sm:$0xff]
    %v272 = vld [vmem:[%s0 + $0x7c0] sm:$0xff]
    %v273 = vld [vmem:[%s0 + $0x7c8] sm:$0xff]
    %v274 = vld [vmem:[%s0 + $0x7d0] sm:$0xff]
    %v275 = vld [vmem:[%s0 + $0x7d8] sm:$0xff]
    %v276 = vld [vmem:[%s0 + $0x7e0] sm:$0xff]
    %v277 = vld [vmem:[%s0 + $0x7e8] sm:$0xff]
    %v278 = vld [vmem:[%s0 + $0x7f0] sm:$0xff]
    %v279 = vld [vmem:[%s0 + $0x7f8] sm:$0xff]
    %v280 = vld [vmem:[%s1] sm:$0xff]
    %v281 = vld [vmem:[%s1 + $0x8] sm:$0xff]
    %v282 = vld [vmem:[%s1 + $0x10] sm:$0xff]
    %v283 = vld [vmem:[%s1 + $0x18] sm:$0xff]
    %v284 = vld [vmem:[%s2] sm:$0x1]
    %v286 = vlaneseq
    %v287 = vshrl.u32 %v286, 7
    %v288 = vsub.s32 0, %v287
    %v289 = vrot.slane %v284, %v288
    %vm291 = vcmask 261120
    %v293 = vsel %vm291, %v24, 0
    %v296 = vsel %vm291, %v25, 0
    %v299 = vsel %vm291, %v26, 0
    %v302 = vsel %vm291, %v27, 0
    %v305 = vsel %vm291, %v28, 0
    %v308 = vsel %vm291, %v29, 0
    %v311 = vsel %vm291, %v30, 0
    %v314 = vsel %vm291, %v31, 0
    %v317 = vsel %vm291, %v32, 0
    %v320 = vsel %vm291, %v33, 0
    %v323 = vsel %vm291, %v34, 0
    %v326 = vsel %vm291, %v35, 0
    %v329 = vsel %vm291, %v36, 0
    %v332 = vsel %vm291, %v37, 0
    %v335 = vsel %vm291, %v38, 0
    %v338 = vsel %vm291, %v39, 0
    %v341 = vsel %vm291, %v40, 0
    %v344 = vsel %vm291, %v41, 0
    %v347 = vsel %vm291, %v42, 0
    %v350 = vsel %vm291, %v43, 0
    %v353 = vsel %vm291, %v44, 0
    %v356 = vsel %vm291, %v45, 0
    %v359 = vsel %vm291, %v46, 0
    %v362 = vsel %vm291, %v47, 0
    %v365 = vsel %vm291, %v48, 0
    %v368 = vsel %vm291, %v49, 0
    %v371 = vsel %vm291, %v50, 0
    %v374 = vsel %vm291, %v51, 0
    %v377 = vsel %vm291, %v52, 0
    %v380 = vsel %vm291, %v53, 0
    %v383 = vsel %vm291, %v54, 0
    %v386 = vsel %vm291, %v55, 0
    %v389 = vsel %vm291, %v56, 0
    %v392 = vsel %vm291, %v57, 0
    %v395 = vsel %vm291, %v58, 0
    %v398 = vsel %vm291, %v59, 0
    %v401 = vsel %vm291, %v60, 0
    %v404 = vsel %vm291, %v61, 0
    %v407 = vsel %vm291, %v62, 0
    %v410 = vsel %vm291, %v63, 0
    %v413 = vsel %vm291, %v64, 0
    %v416 = vsel %vm291, %v65, 0
    %v419 = vsel %vm291, %v66, 0
    %v422 = vsel %vm291, %v67, 0
    %v425 = vsel %vm291, %v68, 0
    %v428 = vsel %vm291, %v69, 0
    %v431 = vsel %vm291, %v70, 0
    %v434 = vsel %vm291, %v71, 0
    %v437 = vsel %vm291, %v72, 0
    %v440 = vsel %vm291, %v73, 0
    %v443 = vsel %vm291, %v74, 0
    %v446 = vsel %vm291, %v75, 0
    %v449 = vsel %vm291, %v76, 0
    %v452 = vsel %vm291, %v77, 0
    %v455 = vsel %vm291, %v78, 0
    %v458 = vsel %vm291, %v79, 0
    %v461 = vsel %vm291, %v80, 0
    %v464 = vsel %vm291, %v81, 0
    %v467 = vsel %vm291, %v82, 0
    %v470 = vsel %vm291, %v83, 0
    %v473 = vsel %vm291, %v84, 0
    %v476 = vsel %vm291, %v85, 0
    %v479 = vsel %vm291, %v86, 0
    %v482 = vsel %vm291, %v87, 0
    %v485 = vsel %vm291, %v88, 0
    %v488 = vsel %vm291, %v89, 0
    %v491 = vsel %vm291, %v90, 0
    %v494 = vsel %vm291, %v91, 0
    %v497 = vsel %vm291, %v92, 0
    %v500 = vsel %vm291, %v93, 0
    %v503 = vsel %vm291, %v94, 0
    %v506 = vsel %vm291, %v95, 0
    %v509 = vsel %vm291, %v96, 0
    %v512 = vsel %vm291, %v97, 0
    %v515 = vsel %vm291, %v98, 0
    %v518 = vsel %vm291, %v99, 0
    %v521 = vsel %vm291, %v100, 0
    %v524 = vsel %vm291, %v101, 0
    %v527 = vsel %vm291, %v102, 0
    %v530 = vsel %vm291, %v103, 0
    %v533 = vsel %vm291, %v104, 0
    %v536 = vsel %vm291, %v105, 0
    %v539 = vsel %vm291, %v106, 0
    %v542 = vsel %vm291, %v107, 0
    %v545 = vsel %vm291, %v108, 0
    %v548 = vsel %vm291, %v109, 0
    %v551 = vsel %vm291, %v110, 0
    %v554 = vsel %vm291, %v111, 0
    %v557 = vsel %vm291, %v112, 0
    %v560 = vsel %vm291, %v113, 0
    %v563 = vsel %vm291, %v114, 0
    %v566 = vsel %vm291, %v115, 0
    %v569 = vsel %vm291, %v116, 0
    %v572 = vsel %vm291, %v117, 0
    %v575 = vsel %vm291, %v118, 0
    %v578 = vsel %vm291, %v119, 0
    %v581 = vsel %vm291, %v120, 0
    %v584 = vsel %vm291, %v121, 0
    %v587 = vsel %vm291, %v122, 0
    %v590 = vsel %vm291, %v123, 0
    %v593 = vsel %vm291, %v124, 0
    %v596 = vsel %vm291, %v125, 0
    %v599 = vsel %vm291, %v126, 0
    %v602 = vsel %vm291, %v127, 0
    %v605 = vsel %vm291, %v128, 0
    %v608 = vsel %vm291, %v129, 0
    %v611 = vsel %vm291, %v130, 0
    %v614 = vsel %vm291, %v131, 0
    %v617 = vsel %vm291, %v132, 0
    %v620 = vsel %vm291, %v133, 0
    %v623 = vsel %vm291, %v134, 0
    %v626 = vsel %vm291, %v135, 0
    %v629 = vsel %vm291, %v136, 0
    %v632 = vsel %vm291, %v137, 0
    %v635 = vsel %vm291, %v138, 0
    %v638 = vsel %vm291, %v139, 0
    %v641 = vsel %vm291, %v140, 0
    %v644 = vsel %vm291, %v141, 0
    %v647 = vsel %vm291, %v142, 0
    %v650 = vsel %vm291, %v143, 0
    %v653 = vsel %vm291, %v144, 0
    %v656 = vsel %vm291, %v145, 0
    %v659 = vsel %vm291, %v146, 0
    %v662 = vsel %vm291, %v147, 0
    %v665 = vsel %vm291, %v148, 0
    %v668 = vsel %vm291, %v149, 0
    %v671 = vsel %vm291, %v150, 0
    %v674 = vsel %vm291, %v151, 0
    %v677 = vsel %vm291, %v152, 0
    %v680 = vsel %vm291, %v153, 0
    %v683 = vsel %vm291, %v154, 0
    %v686 = vsel %vm291, %v155, 0
    %v689 = vsel %vm291, %v156, 0
    %v692 = vsel %vm291, %v157, 0
    %v695 = vsel %vm291, %v158, 0
    %v698 = vsel %vm291, %v159, 0
    %v701 = vsel %vm291, %v160, 0
    %v704 = vsel %vm291, %v161, 0
    %v707 = vsel %vm291, %v162, 0
    %v710 = vsel %vm291, %v163, 0
    %v713 = vsel %vm291, %v164, 0
    %v716 = vsel %vm291, %v165, 0
    %v719 = vsel %vm291, %v166, 0
    %v722 = vsel %vm291, %v167, 0
    %v725 = vsel %vm291, %v168, 0
    %v728 = vsel %vm291, %v169, 0
    %v731 = vsel %vm291, %v170, 0
    %v734 = vsel %vm291, %v171, 0
    %v737 = vsel %vm291, %v172, 0
    %v740 = vsel %vm291, %v173, 0
    %v743 = vsel %vm291, %v174, 0
    %v746 = vsel %vm291, %v175, 0
    %v749 = vsel %vm291, %v176, 0
    %v752 = vsel %vm291, %v177, 0
    %v755 = vsel %vm291, %v178, 0
    %v758 = vsel %vm291, %v179, 0
    %v761 = vsel %vm291, %v180, 0
    %v764 = vsel %vm291, %v181, 0
    %v767 = vsel %vm291, %v182, 0
    %v770 = vsel %vm291, %v183, 0
    %v773 = vsel %vm291, %v184, 0
    %v776 = vsel %vm291, %v185, 0
    %v779 = vsel %vm291, %v186, 0
    %v782 = vsel %vm291, %v187, 0
    %v785 = vsel %vm291, %v188, 0
    %v788 = vsel %vm291, %v189, 0
    %v791 = vsel %vm291, %v190, 0
    %v794 = vsel %vm291, %v191, 0
    %v797 = vsel %vm291, %v192, 0
    %v800 = vsel %vm291, %v193, 0
    %v803 = vsel %vm291, %v194, 0
    %v806 = vsel %vm291, %v195, 0
    %v809 = vsel %vm291, %v196, 0
    %v812 = vsel %vm291, %v197, 0
    %v815 = vsel %vm291, %v198, 0
    %v818 = vsel %vm291, %v199, 0
    %v821 = vsel %vm291, %v200, 0
    %v824 = vsel %vm291, %v201, 0
    %v827 = vsel %vm291, %v202, 0
    %v830 = vsel %vm291, %v203, 0
    %v833 = vsel %vm291, %v204, 0
    %v836 = vsel %vm291, %v205, 0
    %v839 = vsel %vm291, %v206, 0
    %v842 = vsel %vm291, %v207, 0
    %v845 = vsel %vm291, %v208, 0
    %v848 = vsel %vm291, %v209, 0
    %v851 = vsel %vm291, %v210, 0
    %v854 = vsel %vm291, %v211, 0
    %v857 = vsel %vm291, %v212, 0
    %v860 = vsel %vm291, %v213, 0
    %v863 = vsel %vm291, %v214, 0
    %v866 = vsel %vm291, %v215, 0
    %v869 = vsel %vm291, %v216, 0
    %v872 = vsel %vm291, %v217, 0
    %v875 = vsel %vm291, %v218, 0
    %v878 = vsel %vm291, %v219, 0
    %v881 = vsel %vm291, %v220, 0
    %v884 = vsel %vm291, %v221, 0
    %v887 = vsel %vm291, %v222, 0
    %v890 = vsel %vm291, %v223, 0
    %v893 = vsel %vm291, %v224, 0
    %v896 = vsel %vm291, %v225, 0
    %v899 = vsel %vm291, %v226, 0
    %v902 = vsel %vm291, %v227, 0
    %v905 = vsel %vm291, %v228, 0
    %v908 = vsel %vm291, %v229, 0
    %v911 = vsel %vm291, %v230, 0
    %v914 = vsel %vm291, %v231, 0
    %v917 = vsel %vm291, %v232, 0
    %v920 = vsel %vm291, %v233, 0
    %v923 = vsel %vm291, %v234, 0
    %v926 = vsel %vm291, %v235, 0
    %v929 = vsel %vm291, %v236, 0
    %v932 = vsel %vm291, %v237, 0
    %v935 = vsel %vm291, %v238, 0
    %v938 = vsel %vm291, %v239, 0
    %v941 = vsel %vm291, %v240, 0
    %v944 = vsel %vm291, %v241, 0
    %v947 = vsel %vm291, %v242, 0
    %v950 = vsel %vm291, %v243, 0
    %v953 = vsel %vm291, %v244, 0
    %v956 = vsel %vm291, %v245, 0
    %v959 = vsel %vm291, %v246, 0
    %v962 = vsel %vm291, %v247, 0
    %v965 = vsel %vm291, %v248, 0
    %v968 = vsel %vm291, %v249, 0
    %v971 = vsel %vm291, %v250, 0
    %v974 = vsel %vm291, %v251, 0
    %v977 = vsel %vm291, %v252, 0
    %v980 = vsel %vm291, %v253, 0
    %v983 = vsel %vm291, %v254, 0
    %v986 = vsel %vm291, %v255, 0
    %v989 = vsel %vm291, %v256, 0
    %v992 = vsel %vm291, %v257, 0
    %v995 = vsel %vm291, %v258, 0
    %v998 = vsel %vm291, %v259, 0
    %v1001 = vsel %vm291, %v260, 0
    %v1004 = vsel %vm291, %v261, 0
    %v1007 = vsel %vm291, %v262, 0
    %v1010 = vsel %vm291, %v263, 0
    %v1013 = vsel %vm291, %v264, 0
    %v1016 = vsel %vm291, %v265, 0
    %v1019 = vsel %vm291, %v266, 0
    %v1022 = vsel %vm291, %v267, 0
    %v1025 = vsel %vm291, %v268, 0
    %v1028 = vsel %vm291, %v269, 0
    %v1031 = vsel %vm291, %v270, 0
    %v1034 = vsel %vm291, %v271, 0
    %v1037 = vsel %vm291, %v272, 0
    %v1040 = vsel %vm291, %v273, 0
    %v1043 = vsel %vm291, %v274, 0
    %v1046 = vsel %vm291, %v275, 0
    %v1049 = vsel %vm291, %v276, 0
    %v1052 = vsel %vm291, %v277, 0
    %v1055 = vsel %vm291, %v278, 0
    %v1058 = vsel %vm291, %v279, 0
    %1060 = vmatprep.subr.mxu0 0.0
    %1061 = vmatpush1.msra.mxu0 %v280
    %1062 = vmatprep.subr.mxu0 0.0
    %1063 = vmatpush1.msra.mxu0 %v281
    %1064 = vmatprep.subr.mxu0 0.0
    %1065 = vmatpush1.msra.mxu0 %v282
    %1066 = vmatprep.subr.mxu0 0.0
    %1067 = vmatpush1.msra.mxu0 %v283
    %1068 = vmatprep.subr.mxu0 0.0
    %1069 = vmatpush1.msra.mxu0 0.0
    %1070 = vmatprep.subr.mxu0 0.0
    %1071 = vmatpush1.msra.mxu0 0.0
    %1072 = vmatprep.subr.mxu0 0.0
    %1073 = vmatpush1.msra.mxu0 0.0
    %1074 = vmatprep.subr.mxu0 0.0
    %1075 = vmatpush1.msra.mxu0 0.0
    %1076 = vmatprep.subr.mxu0 0.0
    %1077 = vmatpush1.msra.mxu0 0.0
    %1078 = vmatprep.subr.mxu0 0.0
    %1079 = vmatpush1.msra.mxu0 0.0
    %1080 = vmatprep.subr.mxu0 0.0
    %1081 = vmatpush1.msra.mxu0 0.0
    %1082 = vmatprep.subr.mxu0 0.0
    %1083 = vmatpush1.msra.mxu0 0.0
    %1084 = vmatprep.subr.mxu0 0.0
    %1085 = vmatpush1.msra.mxu0 0.0
    %1086 = vmatprep.subr.mxu0 0.0
    %1087 = vmatpush1.msra.mxu0 0.0
    %1088 = vmatprep.subr.mxu0 0.0
    %1089 = vmatpush1.msra.mxu0 0.0
    %1090 = vmatprep.subr.mxu0 0.0
    %1091 = vmatpush1.msra.mxu0 0.0
    %1092 = vmatprep.subr.mxu0 0.0
    %1093 = vmatpush1.msra.mxu0 0.0
    %1094 = vmatprep.subr.mxu0 0.0
    %1095 = vmatpush1.msra.mxu0 0.0
    %1096 = vmatprep.subr.mxu0 0.0
    %1097 = vmatpush1.msra.mxu0 0.0
    %1098 = vmatprep.subr.mxu0 0.0
    %1099 = vmatpush1.msra.mxu0 0.0
    %1100 = vmatprep.subr.mxu0 0.0
    %1101 = vmatpush1.msra.mxu0 0.0
    %1102 = vmatprep.subr.mxu0 0.0
    %1103 = vmatpush1.msra.mxu0 0.0
    %1104 = vmatprep.subr.mxu0 0.0
    %1105 = vmatpush1.msra.mxu0 0.0
    %1106 = vmatprep.subr.mxu0 0.0
    %1107 = vmatpush1.msra.mxu0 0.0
    %1108 = vmatprep.subr.mxu0 0.0
    %1109 = vmatpush1.msra.mxu0 0.0
    %1110 = vmatprep.subr.mxu0 0.0
    %1111 = vmatpush1.msra.mxu0 0.0
    %1112 = vmatprep.subr.mxu0 0.0
    %1113 = vmatpush1.msra.mxu0 0.0
    %1114 = vmatprep.subr.mxu0 0.0
    %1115 = vmatpush1.msra.mxu0 0.0
    %1116 = vmatprep.subr.mxu0 0.0
    %1117 = vmatpush1.msra.mxu0 0.0
    %1118 = vmatprep.subr.mxu0 0.0
    %1119 = vmatpush1.msra.mxu0 0.0
    %1120 = vmatprep.subr.mxu0 0.0
    %1121 = vmatpush1.msra.mxu0 0.0
    %1122 = vmatprep.subr.mxu0 0.0
    %1123 = vmatpush1.msra.mxu0 0.0
    %1124 = vmatprep.mubr.f32.mxu0 0.0
    %1125 = vmatmul.mubr.f32.gmra.mrb[0].mxu0 %v293
    %v1126 = vpop.f32.mrb[0].mxu0
    %v1127 = vadd.f32 %v289, %v1126
    %v1128 = vpop.f32.mrb[0].mxu0
    %1129 = vmatprep.mubr.f32.mxu0 0.0
    %1130 = vmatmul.mubr.f32.gmra.mrb[0].mxu0 %v296
    %v1131 = vpop.f32.mrb[0].mxu0
    %v1132 = vadd.f32 %v289, %v1131
    %v1133 = vpop.f32.mrb[0].mxu0
    %1134 = vmatprep.mubr.f32.mxu0 0.0
    %1135 = vmatmul.mubr.f32.gmra.mrb[0].mxu0 %v299
    %v1136 = vpop.f32.mrb[0].mxu0
    %v1137 = vadd.f32 %v289, %v1136
    %v1138 = vpop.f32.mrb[0].mxu0
    %1139 = vmatprep.mubr.f32.mxu0 0.0
    %1140 = vmatmul.mubr.f32.gmra.mrb[0].mxu0 %v302
    %v1141 = vpop.f32.mrb[0].mxu0
    %v1142 = vadd.f32 %v289, %v1141
    %v1143 = vpop.f32.mrb[0].mxu0
    %1144 = vmatprep.mubr.f32.mxu0 0.0
    %1145 = vmatmul.mubr.f32.gmra.mrb[0].mxu0 %v305
    %v1146 = vpop.f32.mrb[0].mxu0
    %v1147 = vadd.f32 %v289, %v1146
    %v1148 = vpop.f32.mrb[0].mxu0
    %1149 = vmatprep.mubr.f32.mxu0 0.0
    %1150 = vmatmul.mubr.f32.gmra.mrb[0].mxu0 %v308
    %v1151 = vpop.f32.mrb[0].mxu0
    %v1152 = vadd.f32 %v289, %v1151
    %v1153 = vpop.f32.mrb[0].mxu0
    %1154 = vmatprep.mubr.f32.mxu0 0.0
    %1155 = vmatmul.mubr.f32.gmra.mrb[0].mxu0 %v311
    %v1156 = vpop.f32.mrb[0].mxu0
    %v1157 = vadd.f32 %v289, %v1156
    %v1158 = vpop.f32.mrb[0].mxu0
    %1159 = vmatprep.mubr.f32.mxu0 0.0
    %1160 = vmatmul.mubr.f32.gmra.mrb[0].mxu0 %v314
    %v1161 = vpop.f32.mrb[0].mxu0
    %v1162 = vadd.f32 %v289, %v1161
    %v1163 = vpop.f32.mrb[0].mxu0
    %1164 = vmatprep.mubr.f32.mxu0 0.0
    %1165 = vmatmul.mubr.f32.gmra.mrb[0].mxu0 %v317
    %v1166 = vpop.f32.mrb[0].mxu0
    %v1167 = vadd.f32 %v289, %v1166
    %v1168 = vpop.f32.mrb[0].mxu0
    %1169 = vmatprep.mubr.f32.mxu0 0.0
    %1170 = vmatmul.mubr.f32.gmra.mrb[0].mxu0 %v320
    %v1171 = vpop.f32.mrb[0].mxu0
    %v1172 = vadd.f32 %v289, %v1171
    %v1173 = vpop.f32.mrb[0].mxu0
    %1174 = vmatprep.mubr.f32.mxu0 0.0
    %1175 = vmatmul.mubr.f32.gmra.mrb[0].mxu0 %v323
    %v1176 = vpop.f32.mrb[0].mxu0
    %v1177 = vadd.f32 %v289, %v1176
    %v1178 = vpop.f32.mrb[0].mxu0
    %1179 = vmatprep.mubr.f32.mxu0 0.0
    %1180 = vmatmul.mubr.f32.gmra.mrb[0].mxu0 %v326
    %v1181 = vpop.f32.mrb[0].mxu0
    %v1182 = vadd.f32 %v289, %v1181
    %v1183 = vpop.f32.mrb[0].mxu0
    %1184 = vmatprep.mubr.f32.mxu0 0.0
    %1185 = vmatmul.mubr.f32.gmra.mrb[0].mxu0 %v329
    %v1186 = vpop.f32.mrb[0].mxu0
    %v1187 = vadd.f32 %v289, %v1186
    %v1188 = vpop.f32.mrb[0].mxu0
    %1189 = vmatprep.mubr.f32.mxu0 0.0
    %1190 = vmatmul.mubr.f32.gmra.mrb[0].mxu0 %v332
    %v1191 = vpop.f32.mrb[0].mxu0
    %v1192 = vadd.f32 %v289, %v1191
    %v1193 = vpop.f32.mrb[0].mxu0
    %1194 = vmatprep.mubr.f32.mxu0 0.0
    %1195 = vmatmul.mubr.f32.gmra.mrb[0].mxu0 %v335
    %v1196 = vpop.f32.mrb[0].mxu0
    %v1197 = vadd.f32 %v289, %v1196
    %v1198 = vpop.f32.mrb[0].mxu0
    %1199 = vmatprep.mubr.f32.mxu0 0.0
    %1200 = vmatmul.mubr.f32.gmra.mrb[0].mxu0 %v338
    %v1201 = vpop.f32.mrb[0].mxu0
    %v1202 = vadd.f32 %v289, %v1201
    %v1203 = vpop.f32.mrb[0].mxu0
    %1204 = vmatprep.mubr.f32.mxu0 0.0
    %1205 = vmatmul.mubr.f32.gmra.mrb[0].mxu0 %v341
    %v1206 = vpop.f32.mrb[0].mxu0
    %v1207 = vadd.f32 %v289, %v1206
    %v1208 = vpop.f32.mrb[0].mxu0
    %1209 = vmatprep.mubr.f32.mxu0 0.0
    %1210 = vmatmul.mubr.f32.gmra.mrb[0].mxu0 %v344
    %v1211 = vpop.f32.mrb[0].mxu0
    %v1212 = vadd.f32 %v289, %v1211
    %v1213 = vpop.f32.mrb[0].mxu0
    %1214 = vmatprep.mubr.f32.mxu0 0.0
    %1215 = vmatmul.mubr.f32.gmra.mrb[0].mxu0 %v347
    %v1216 = vpop.f32.mrb[0].mxu0
    %v1217 = vadd.f32 %v289, %v1216
    %v1218 = vpop.f32.mrb[0].mxu0
    %1219 = vmatprep.mubr.f32.mxu0 0.0
    %1220 = vmatmul.mubr.f32.gmra.mrb[0].mxu0 %v350
    %v1221 = vpop.f32.mrb[0].mxu0
    %v1222 = vadd.f32 %v289, %v1221
    %v1223 = vpop.f32.mrb[0].mxu0
    %1224 = vmatprep.mubr.f32.mxu0 0.0
    %1225 = vmatmul.mubr.f32.gmra.mrb[0].mxu0 %v353
    %v1226 = vpop.f32.mrb[0].mxu0
    %v1227 = vadd.f32 %v289, %v1226
    %v1228 = vpop.f32.mrb[0].mxu0
    %1229 = vmatprep.mubr.f32.mxu0 0.0
    %1230 = vmatmul.mubr.f32.gmra.mrb[0].mxu0 %v356
    %v1231 = vpop.f32.mrb[0].mxu0
    %v1232 = vadd.f32 %v289, %v1231
    %v1233 = vpop.f32.mrb[0].mxu0
    %1234 = vmatprep.mubr.f32.mxu0 0.0
    %1235 = vmatmul.mubr.f32.gmra.mrb[0].mxu0 %v359
    %v1236 = vpop.f32.mrb[0].mxu0
    %v1237 = vadd.f32 %v289, %v1236
    %v1238 = vpop.f32.mrb[0].mxu0
    %1239 = vmatprep.mubr.f32.mxu0 0.0
    %1240 = vmatmul.mubr.f32.gmra.mrb[0].mxu0 %v362
    %v1241 = vpop.f32.mrb[0].mxu0
    %v1242 = vadd.f32 %v289, %v1241
    %v1243 = vpop.f32.mrb[0].mxu0
    %1244 = vmatprep.mubr.f32.mxu0 0.0
    %1245 = vmatmul.mubr.f32.gmra.mrb[0].mxu0 %v365
    %v1246 = vpop.f32.mrb[0].mxu0
    %v1247 = vadd.f32 %v289, %v1246
    %v1248 = vpop.f32.mrb[0].mxu0
    %1249 = vmatprep.mubr.f32.mxu0 0.0
    %1250 = vmatmul.mubr.f32.gmra.mrb[0].mxu0 %v368
    %v1251 = vpop.f32.mrb[0].mxu0
    %v1252 = vadd.f32 %v289, %v1251
    %v1253 = vpop.f32.mrb[0].mxu0
    %1254 = vmatprep.mubr.f32.mxu0 0.0
    %1255 = vmatmul.mubr.f32.gmra.mrb[0].mxu0 %v371
    %v1256 = vpop.f32.mrb[0].mxu0
    %v1257 = vadd.f32 %v289, %v1256
    %v1258 = vpop.f32.mrb[0].mxu0
    %1259 = vmatprep.mubr.f32.mxu0 0.0
    %1260 = vmatmul.mubr.f32.gmra.mrb[0].mxu0 %v374
    %v1261 = vpop.f32.mrb[0].mxu0
    %v1262 = vadd.f32 %v289, %v1261
    %v1263 = vpop.f32.mrb[0].mxu0
    %1264 = vmatprep.mubr.f32.mxu0 0.0
    %1265 = vmatmul.mubr.f32.gmra.mrb[0].mxu0 %v377
    %v1266 = vpop.f32.mrb[0].mxu0
    %v1267 = vadd.f32 %v289, %v1266
    %v1268 = vpop.f32.mrb[0].mxu0
    %1269 = vmatprep.mubr.f32.mxu0 0.0
    %1270 = vmatmul.mubr.f32.gmra.mrb[0].mxu0 %v380
    %v1271 = vpop.f32.mrb[0].mxu0
    %v1272 = vadd.f32 %v289, %v1271
    %v1273 = vpop.f32.mrb[0].mxu0
    %1274 = vmatprep.mubr.f32.mxu0 0.0
    %1275 = vmatmul.mubr.f32.gmra.mrb[0].mxu0 %v383
    %v1276 = vpop.f32.mrb[0].mxu0
    %v1277 = vadd.f32 %v289, %v1276
    %v1278 = vpop.f32.mrb[0].mxu0
    %1279 = vmatprep.mubr.f32.mxu0 0.0
    %1280 = vmatmul.mubr.f32.gmra.mrb[0].mxu0 %v386
    %v1281 = vpop.f32.mrb[0].mxu0
    %v1282 = vadd.f32 %v289, %v1281
    %v1283 = vpop.f32.mrb[0].mxu0
    %1284 = vmatprep.mubr.f32.mxu0 0.0
    %1285 = vmatmul.mubr.f32.gmra.mrb[0].mxu0 %v389
    %v1286 = vpop.f32.mrb[0].mxu0
    %v1287 = vadd.f32 %v289, %v1286
    %v1288 = vpop.f32.mrb[0].mxu0
    %1289 = vmatprep.mubr.f32.mxu0 0.0
    %1290 = vmatmul.mubr.f32.gmra.mrb[0].mxu0 %v392
    %v1291 = vpop.f32.mrb[0].mxu0
    %v1292 = vadd.f32 %v289, %v1291
    %v1293 = vpop.f32.mrb[0].mxu0
    %1294 = vmatprep.mubr.f32.mxu0 0.0
    %1295 = vmatmul.mubr.f32.gmra.mrb[0].mxu0 %v395
    %v1296 = vpop.f32.mrb[0].mxu0
    %v1297 = vadd.f32 %v289, %v1296
    %v1298 = vpop.f32.mrb[0].mxu0
    %1299 = vmatprep.mubr.f32.mxu0 0.0
    %1300 = vmatmul.mubr.f32.gmra.mrb[0].mxu0 %v398
    %v1301 = vpop.f32.mrb[0].mxu0
    %v1302 = vadd.f32 %v289, %v1301
    %v1303 = vpop.f32.mrb[0].mxu0
    %1304 = vmatprep.mubr.f32.mxu0 0.0
    %1305 = vmatmul.mubr.f32.gmra.mrb[0].mxu0 %v401
    %v1306 = vpop.f32.mrb[0].mxu0
    %v1307 = vadd.f32 %v289, %v1306
    %v1308 = vpop.f32.mrb[0].mxu0
    %1309 = vmatprep.mubr.f32.mxu0 0.0
    %1310 = vmatmul.mubr.f32.gmra.mrb[0].mxu0 %v404
    %v1311 = vpop.f32.mrb[0].mxu0
    %v1312 = vadd.f32 %v289, %v1311
    %v1313 = vpop.f32.mrb[0].mxu0
    %1314 = vmatprep.mubr.f32.mxu0 0.0
    %1315 = vmatmul.mubr.f32.gmra.mrb[0].mxu0 %v407
    %v1316 = vpop.f32.mrb[0].mxu0
    %v1317 = vadd.f32 %v289, %v1316
    %v1318 = vpop.f32.mrb[0].mxu0
    %1319 = vmatprep.mubr.f32.mxu0 0.0
    %1320 = vmatmul.mubr.f32.gmra.mrb[0].mxu0 %v410
    %v1321 = vpop.f32.mrb[0].mxu0
    %v1322 = vadd.f32 %v289, %v1321
    %v1323 = vpop.f32.mrb[0].mxu0
    %1324 = vmatprep.mubr.f32.mxu0 0.0
    %1325 = vmatmul.mubr.f32.gmra.mrb[0].mxu0 %v413
    %v1326 = vpop.f32.mrb[0].mxu0
    %v1327 = vadd.f32 %v289, %v1326
    %v1328 = vpop.f32.mrb[0].mxu0
    %1329 = vmatprep.mubr.f32.mxu0 0.0
    %1330 = vmatmul.mubr.f32.gmra.mrb[0].mxu0 %v416
    %v1331 = vpop.f32.mrb[0].mxu0
    %v1332 = vadd.f32 %v289, %v1331
    %v1333 = vpop.f32.mrb[0].mxu0
    %1334 = vmatprep.mubr.f32.mxu0 0.0
    %1335 = vmatmul.mubr.f32.gmra.mrb[0].mxu0 %v419
    %v1336 = vpop.f32.mrb[0].mxu0
    %v1337 = vadd.f32 %v289, %v1336
    %v1338 = vpop.f32.mrb[0].mxu0
    %1339 = vmatprep.mubr.f32.mxu0 0.0
    %1340 = vmatmul.mubr.f32.gmra.mrb[0].mxu0 %v422
    %v1341 = vpop.f32.mrb[0].mxu0
    %v1342 = vadd.f32 %v289, %v1341
    %v1343 = vpop.f32.mrb[0].mxu0
    %1344 = vmatprep.mubr.f32.mxu0 0.0
    %1345 = vmatmul.mubr.f32.gmra.mrb[0].mxu0 %v425
    %v1346 = vpop.f32.mrb[0].mxu0
    %v1347 = vadd.f32 %v289, %v1346
    %v1348 = vpop.f32.mrb[0].mxu0
    %1349 = vmatprep.mubr.f32.mxu0 0.0
    %1350 = vmatmul.mubr.f32.gmra.mrb[0].mxu0 %v428
    %v1351 = vpop.f32.mrb[0].mxu0
    %v1352 = vadd.f32 %v289, %v1351
    %v1353 = vpop.f32.mrb[0].mxu0
    %1354 = vmatprep.mubr.f32.mxu0 0.0
    %1355 = vmatmul.mubr.f32.gmra.mrb[0].mxu0 %v431
    %v1356 = vpop.f32.mrb[0].mxu0
    %v1357 = vadd.f32 %v289, %v1356
    %v1358 = vpop.f32.mrb[0].mxu0
    %1359 = vmatprep.mubr.f32.mxu0 0.0
    %1360 = vmatmul.mubr.f32.gmra.mrb[0].mxu0 %v434
    %v1361 = vpop.f32.mrb[0].mxu0
    %v1362 = vadd.f32 %v289, %v1361
    %v1363 = vpop.f32.mrb[0].mxu0
    %1364 = vmatprep.mubr.f32.mxu0 0.0
    %1365 = vmatmul.mubr.f32.gmra.mrb[0].mxu0 %v437
    %v1366 = vpop.f32.mrb[0].mxu0
    %v1367 = vadd.f32 %v289, %v1366
    %v1368 = vpop.f32.mrb[0].mxu0
    %1369 = vmatprep.mubr.f32.mxu0 0.0
    %1370 = vmatmul.mubr.f32.gmra.mrb[0].mxu0 %v440
    %v1371 = vpop.f32.mrb[0].mxu0
    %v1372 = vadd.f32 %v289, %v1371
    %v1373 = vpop.f32.mrb[0].mxu0
    %1374 = vmatprep.mubr.f32.mxu0 0.0
    %1375 = vmatmul.mubr.f32.gmra.mrb[0].mxu0 %v443
    %v1376 = vpop.f32.mrb[0].mxu0
    %v1377 = vadd.f32 %v289, %v1376
    %v1378 = vpop.f32.mrb[0].mxu0
    %1379 = vmatprep.mubr.f32.mxu0 0.0
    %1380 = vmatmul.mubr.f32.gmra.mrb[0].mxu0 %v446
    %v1381 = vpop.f32.mrb[0].mxu0
    %v1382 = vadd.f32 %v289, %v1381
    %v1383 = vpop.f32.mrb[0].mxu0
    %1384 = vmatprep.mubr.f32.mxu0 0.0
    %1385 = vmatmul.mubr.f32.gmra.mrb[0].mxu0 %v449
    %v1386 = vpop.f32.mrb[0].mxu0
    %v1387 = vadd.f32 %v289, %v1386
    %v1388 = vpop.f32.mrb[0].mxu0
    %1389 = vmatprep.mubr.f32.mxu0 0.0
    %1390 = vmatmul.mubr.f32.gmra.mrb[0].mxu0 %v452
    %v1391 = vpop.f32.mrb[0].mxu0
    %v1392 = vadd.f32 %v289, %v1391
    %v1393 = vpop.f32.mrb[0].mxu0
    %1394 = vmatprep.mubr.f32.mxu0 0.0
    %1395 = vmatmul.mubr.f32.gmra.mrb[0].mxu0 %v455
    %v1396 = vpop.f32.mrb[0].mxu0
    %v1397 = vadd.f32 %v289, %v1396
    %v1398 = vpop.f32.mrb[0].mxu0
    %1399 = vmatprep.mubr.f32.mxu0 0.0
    %1400 = vmatmul.mubr.f32.gmra.mrb[0].mxu0 %v458
    %v1401 = vpop.f32.mrb[0].mxu0
    %v1402 = vadd.f32 %v289, %v1401
    %v1403 = vpop.f32.mrb[0].mxu0
    %1404 = vmatprep.mubr.f32.mxu0 0.0
    %1405 = vmatmul.mubr.f32.gmra.mrb[0].mxu0 %v461
    %v1406 = vpop.f32.mrb[0].mxu0
    %v1407 = vadd.f32 %v289, %v1406
    %v1408 = vpop.f32.mrb[0].mxu0
    %1409 = vmatprep.mubr.f32.mxu0 0.0
    %1410 = vmatmul.mubr.f32.gmra.mrb[0].mxu0 %v464
    %v1411 = vpop.f32.mrb[0].mxu0
    %v1412 = vadd.f32 %v289, %v1411
    %v1413 = vpop.f32.mrb[0].mxu0
    %1414 = vmatprep.mubr.f32.mxu0 0.0
    %1415 = vmatmul.mubr.f32.gmra.mrb[0].mxu0 %v467
    %v1416 = vpop.f32.mrb[0].mxu0
    %v1417 = vadd.f32 %v289, %v1416
    %v1418 = vpop.f32.mrb[0].mxu0
    %1419 = vmatprep.mubr.f32.mxu0 0.0
    %1420 = vmatmul.mubr.f32.gmra.mrb[0].mxu0 %v470
    %v1421 = vpop.f32.mrb[0].mxu0
    %v1422 = vadd.f32 %v289, %v1421
    %v1423 = vpop.f32.mrb[0].mxu0
    %1424 = vmatprep.mubr.f32.mxu0 0.0
    %1425 = vmatmul.mubr.f32.gmra.mrb[0].mxu0 %v473
    %v1426 = vpop.f32.mrb[0].mxu0
    %v1427 = vadd.f32 %v289, %v1426
    %v1428 = vpop.f32.mrb[0].mxu0
    %1429 = vmatprep.mubr.f32.mxu0 0.0
    %1430 = vmatmul.mubr.f32.gmra.mrb[0].mxu0 %v476
    %v1431 = vpop.f32.mrb[0].mxu0
    %v1432 = vadd.f32 %v289, %v1431
    %v1433 = vpop.f32.mrb[0].mxu0
    %1434 = vmatprep.mubr.f32.mxu0 0.0
    %1435 = vmatmul.mubr.f32.gmra.mrb[0].mxu0 %v479
    %v1436 = vpop.f32.mrb[0].mxu0
    %v1437 = vadd.f32 %v289, %v1436
    %v1438 = vpop.f32.mrb[0].mxu0
    %1439 = vmatprep.mubr.f32.mxu0 0.0
    %1440 = vmatmul.mubr.f32.gmra.mrb[0].mxu0 %v482
    %v1441 = vpop.f32.mrb[0].mxu0
    %v1442 = vadd.f32 %v289, %v1441
    %v1443 = vpop.f32.mrb[0].mxu0
    %1444 = vmatprep.mubr.f32.mxu0 0.0
    %1445 = vmatmul.mubr.f32.gmra.mrb[0].mxu0 %v485
    %v1446 = vpop.f32.mrb[0].mxu0
    %v1447 = vadd.f32 %v289, %v1446
    %v1448 = vpop.f32.mrb[0].mxu0
    %1449 = vmatprep.mubr.f32.mxu0 0.0
    %1450 = vmatmul.mubr.f32.gmra.mrb[0].mxu0 %v488
    %v1451 = vpop.f32.mrb[0].mxu0
    %v1452 = vadd.f32 %v289, %v1451
    %v1453 = vpop.f32.mrb[0].mxu0
    %1454 = vmatprep.mubr.f32.mxu0 0.0
    %1455 = vmatmul.mubr.f32.gmra.mrb[0].mxu0 %v491
    %v1456 = vpop.f32.mrb[0].mxu0
    %v1457 = vadd.f32 %v289, %v1456
    %v1458 = vpop.f32.mrb[0].mxu0
    %1459 = vmatprep.mubr.f32.mxu0 0.0
    %1460 = vmatmul.mubr.f32.gmra.mrb[0].mxu0 %v494
    %v1461 = vpop.f32.mrb[0].mxu0
    %v1462 = vadd.f32 %v289, %v1461
    %v1463 = vpop.f32.mrb[0].mxu0
    %1464 = vmatprep.mubr.f32.mxu0 0.0
    %1465 = vmatmul.mubr.f32.gmra.mrb[0].mxu0 %v497
    %v1466 = vpop.f32.mrb[0].mxu0
    %v1467 = vadd.f32 %v289, %v1466
    %v1468 = vpop.f32.mrb[0].mxu0
    %1469 = vmatprep.mubr.f32.mxu0 0.0
    %1470 = vmatmul.mubr.f32.gmra.mrb[0].mxu0 %v500
    %v1471 = vpop.f32.mrb[0].mxu0
    %v1472 = vadd.f32 %v289, %v1471
    %v1473 = vpop.f32.mrb[0].mxu0
    %1474 = vmatprep.mubr.f32.mxu0 0.0
    %1475 = vmatmul.mubr.f32.gmra.mrb[0].mxu0 %v503
    %v1476 = vpop.f32.mrb[0].mxu0
    %v1477 = vadd.f32 %v289, %v1476
    %v1478 = vpop.f32.mrb[0].mxu0
    %1479 = vmatprep.mubr.f32.mxu0 0.0
    %1480 = vmatmul.mubr.f32.gmra.mrb[0].mxu0 %v506
    %v1481 = vpop.f32.mrb[0].mxu0
    %v1482 = vadd.f32 %v289, %v1481
    %v1483 = vpop.f32.mrb[0].mxu0
    %1484 = vmatprep.mubr.f32.mxu0 0.0
    %1485 = vmatmul.mubr.f32.gmra.mrb[0].mxu0 %v509
    %v1486 = vpop.f32.mrb[0].mxu0
    %v1487 = vadd.f32 %v289, %v1486
    %v1488 = vpop.f32.mrb[0].mxu0
    %1489 = vmatprep.mubr.f32.mxu0 0.0
    %1490 = vmatmul.mubr.f32.gmra.mrb[0].mxu0 %v512
    %v1491 = vpop.f32.mrb[0].mxu0
    %v1492 = vadd.f32 %v289, %v1491
    %v1493 = vpop.f32.mrb[0].mxu0
    %1494 = vmatprep.mubr.f32.mxu0 0.0
    %1495 = vmatmul.mubr.f32.gmra.mrb[0].mxu0 %v515
    %v1496 = vpop.f32.mrb[0].mxu0
    %v1497 = vadd.f32 %v289, %v1496
    %v1498 = vpop.f32.mrb[0].mxu0
    %1499 = vmatprep.mubr.f32.mxu0 0.0
    %1500 = vmatmul.mubr.f32.gmra.mrb[0].mxu0 %v518
    %v1501 = vpop.f32.mrb[0].mxu0
    %v1502 = vadd.f32 %v289, %v1501
    %v1503 = vpop.f32.mrb[0].mxu0
    %1504 = vmatprep.mubr.f32.mxu0 0.0
    %1505 = vmatmul.mubr.f32.gmra.mrb[0].mxu0 %v521
    %v1506 = vpop.f32.mrb[0].mxu0
    %v1507 = vadd.f32 %v289, %v1506
    %v1508 = vpop.f32.mrb[0].mxu0
    %1509 = vmatprep.mubr.f32.mxu0 0.0
    %1510 = vmatmul.mubr.f32.gmra.mrb[0].mxu0 %v524
    %v1511 = vpop.f32.mrb[0].mxu0
    %v1512 = vadd.f32 %v289, %v1511
    %v1513 = vpop.f32.mrb[0].mxu0
    %1514 = vmatprep.mubr.f32.mxu0 0.0
    %1515 = vmatmul.mubr.f32.gmra.mrb[0].mxu0 %v527
    %v1516 = vpop.f32.mrb[0].mxu0
    %v1517 = vadd.f32 %v289, %v1516
    %v1518 = vpop.f32.mrb[0].mxu0
    %1519 = vmatprep.mubr.f32.mxu0 0.0
    %1520 = vmatmul.mubr.f32.gmra.mrb[0].mxu0 %v530
    %v1521 = vpop.f32.mrb[0].mxu0
    %v1522 = vadd.f32 %v289, %v1521
    %v1523 = vpop.f32.mrb[0].mxu0
    %1524 = vmatprep.mubr.f32.mxu0 0.0
    %1525 = vmatmul.mubr.f32.gmra.mrb[0].mxu0 %v533
    %v1526 = vpop.f32.mrb[0].mxu0
    %v1527 = vadd.f32 %v289, %v1526
    %v1528 = vpop.f32.mrb[0].mxu0
    %1529 = vmatprep.mubr.f32.mxu0 0.0
    %1530 = vmatmul.mubr.f32.gmra.mrb[0].mxu0 %v536
    %v1531 = vpop.f32.mrb[0].mxu0
    %v1532 = vadd.f32 %v289, %v1531
    %v1533 = vpop.f32.mrb[0].mxu0
    %1534 = vmatprep.mubr.f32.mxu0 0.0
    %1535 = vmatmul.mubr.f32.gmra.mrb[0].mxu0 %v539
    %v1536 = vpop.f32.mrb[0].mxu0
    %v1537 = vadd.f32 %v289, %v1536
    %v1538 = vpop.f32.mrb[0].mxu0
    %1539 = vmatprep.mubr.f32.mxu0 0.0
    %1540 = vmatmul.mubr.f32.gmra.mrb[0].mxu0 %v542
    %v1541 = vpop.f32.mrb[0].mxu0
    %v1542 = vadd.f32 %v289, %v1541
    %v1543 = vpop.f32.mrb[0].mxu0
    %1544 = vmatprep.mubr.f32.mxu0 0.0
    %1545 = vmatmul.mubr.f32.gmra.mrb[0].mxu0 %v545
    %v1546 = vpop.f32.mrb[0].mxu0
    %v1547 = vadd.f32 %v289, %v1546
    %v1548 = vpop.f32.mrb[0].mxu0
    %1549 = vmatprep.mubr.f32.mxu0 0.0
    %1550 = vmatmul.mubr.f32.gmra.mrb[0].mxu0 %v548
    %v1551 = vpop.f32.mrb[0].mxu0
    %v1552 = vadd.f32 %v289, %v1551
    %v1553 = vpop.f32.mrb[0].mxu0
    %1554 = vmatprep.mubr.f32.mxu0 0.0
    %1555 = vmatmul.mubr.f32.gmra.mrb[0].mxu0 %v551
    %v1556 = vpop.f32.mrb[0].mxu0
    %v1557 = vadd.f32 %v289, %v1556
    %v1558 = vpop.f32.mrb[0].mxu0
    %1559 = vmatprep.mubr.f32.mxu0 0.0
    %1560 = vmatmul.mubr.f32.gmra.mrb[0].mxu0 %v554
    %v1561 = vpop.f32.mrb[0].mxu0
    %v1562 = vadd.f32 %v289, %v1561
    %v1563 = vpop.f32.mrb[0].mxu0
    %1564 = vmatprep.mubr.f32.mxu0 0.0
    %1565 = vmatmul.mubr.f32.gmra.mrb[0].mxu0 %v557
    %v1566 = vpop.f32.mrb[0].mxu0
    %v1567 = vadd.f32 %v289, %v1566
    %v1568 = vpop.f32.mrb[0].mxu0
    %1569 = vmatprep.mubr.f32.mxu0 0.0
    %1570 = vmatmul.mubr.f32.gmra.mrb[0].mxu0 %v560
    %v1571 = vpop.f32.mrb[0].mxu0
    %v1572 = vadd.f32 %v289, %v1571
    %v1573 = vpop.f32.mrb[0].mxu0
    %1574 = vmatprep.mubr.f32.mxu0 0.0
    %1575 = vmatmul.mubr.f32.gmra.mrb[0].mxu0 %v563
    %v1576 = vpop.f32.mrb[0].mxu0
    %v1577 = vadd.f32 %v289, %v1576
    %v1578 = vpop.f32.mrb[0].mxu0
    %1579 = vmatprep.mubr.f32.mxu0 0.0
    %1580 = vmatmul.mubr.f32.gmra.mrb[0].mxu0 %v566
    %v1581 = vpop.f32.mrb[0].mxu0
    %v1582 = vadd.f32 %v289, %v1581
    %v1583 = vpop.f32.mrb[0].mxu0
    %1584 = vmatprep.mubr.f32.mxu0 0.0
    %1585 = vmatmul.mubr.f32.gmra.mrb[0].mxu0 %v569
    %v1586 = vpop.f32.mrb[0].mxu0
    %v1587 = vadd.f32 %v289, %v1586
    %v1588 = vpop.f32.mrb[0].mxu0
    %1589 = vmatprep.mubr.f32.mxu0 0.0
    %1590 = vmatmul.mubr.f32.gmra.mrb[0].mxu0 %v572
    %v1591 = vpop.f32.mrb[0].mxu0
    %v1592 = vadd.f32 %v289, %v1591
    %v1593 = vpop.f32.mrb[0].mxu0
    %1594 = vmatprep.mubr.f32.mxu0 0.0
    %1595 = vmatmul.mubr.f32.gmra.mrb[0].mxu0 %v575
    %v1596 = vpop.f32.mrb[0].mxu0
    %v1597 = vadd.f32 %v289, %v1596
    %v1598 = vpop.f32.mrb[0].mxu0
    %1599 = vmatprep.mubr.f32.mxu0 0.0
    %1600 = vmatmul.mubr.f32.gmra.mrb[0].mxu0 %v578
    %v1601 = vpop.f32.mrb[0].mxu0
    %v1602 = vadd.f32 %v289, %v1601
    %v1603 = vpop.f32.mrb[0].mxu0
    %1604 = vmatprep.mubr.f32.mxu0 0.0
    %1605 = vmatmul.mubr.f32.gmra.mrb[0].mxu0 %v581
    %v1606 = vpop.f32.mrb[0].mxu0
    %v1607 = vadd.f32 %v289, %v1606
    %v1608 = vpop.f32.mrb[0].mxu0
    %1609 = vmatprep.mubr.f32.mxu0 0.0
    %1610 = vmatmul.mubr.f32.gmra.mrb[0].mxu0 %v584
    %v1611 = vpop.f32.mrb[0].mxu0
    %v1612 = vadd.f32 %v289, %v1611
    %v1613 = vpop.f32.mrb[0].mxu0
    %1614 = vmatprep.mubr.f32.mxu0 0.0
    %1615 = vmatmul.mubr.f32.gmra.mrb[0].mxu0 %v587
    %v1616 = vpop.f32.mrb[0].mxu0
    %v1617 = vadd.f32 %v289, %v1616
    %v1618 = vpop.f32.mrb[0].mxu0
    %1619 = vmatprep.mubr.f32.mxu0 0.0
    %1620 = vmatmul.mubr.f32.gmra.mrb[0].mxu0 %v590
    %v1621 = vpop.f32.mrb[0].mxu0
    %v1622 = vadd.f32 %v289, %v1621
    %v1623 = vpop.f32.mrb[0].mxu0
    %1624 = vmatprep.mubr.f32.mxu0 0.0
    %1625 = vmatmul.mubr.f32.gmra.mrb[0].mxu0 %v593
    %v1626 = vpop.f32.mrb[0].mxu0
    %v1627 = vadd.f32 %v289, %v1626
    %v1628 = vpop.f32.mrb[0].mxu0
    %1629 = vmatprep.mubr.f32.mxu0 0.0
    %1630 = vmatmul.mubr.f32.gmra.mrb[0].mxu0 %v596
    %v1631 = vpop.f32.mrb[0].mxu0
    %v1632 = vadd.f32 %v289, %v1631
    %v1633 = vpop.f32.mrb[0].mxu0
    %1634 = vmatprep.mubr.f32.mxu0 0.0
    %1635 = vmatmul.mubr.f32.gmra.mrb[0].mxu0 %v599
    %v1636 = vpop.f32.mrb[0].mxu0
    %v1637 = vadd.f32 %v289, %v1636
    %v1638 = vpop.f32.mrb[0].mxu0
    %1639 = vmatprep.mubr.f32.mxu0 0.0
    %1640 = vmatmul.mubr.f32.gmra.mrb[0].mxu0 %v602
    %v1641 = vpop.f32.mrb[0].mxu0
    %v1642 = vadd.f32 %v289, %v1641
    %v1643 = vpop.f32.mrb[0].mxu0
    %1644 = vmatprep.mubr.f32.mxu0 0.0
    %1645 = vmatmul.mubr.f32.gmra.mrb[0].mxu0 %v605
    %v1646 = vpop.f32.mrb[0].mxu0
    %v1647 = vadd.f32 %v289, %v1646
    %v1648 = vpop.f32.mrb[0].mxu0
    %1649 = vmatprep.mubr.f32.mxu0 0.0
    %1650 = vmatmul.mubr.f32.gmra.mrb[0].mxu0 %v608
    %v1651 = vpop.f32.mrb[0].mxu0
    %v1652 = vadd.f32 %v289, %v1651
    %v1653 = vpop.f32.mrb[0].mxu0
    %1654 = vmatprep.mubr.f32.mxu0 0.0
    %1655 = vmatmul.mubr.f32.gmra.mrb[0].mxu0 %v611
    %v1656 = vpop.f32.mrb[0].mxu0
    %v1657 = vadd.f32 %v289, %v1656
    %v1658 = vpop.f32.mrb[0].mxu0
    %1659 = vmatprep.mubr.f32.mxu0 0.0
    %1660 = vmatmul.mubr.f32.gmra.mrb[0].mxu0 %v614
    %v1661 = vpop.f32.mrb[0].mxu0
    %v1662 = vadd.f32 %v289, %v1661
    %v1663 = vpop.f32.mrb[0].mxu0
    %1664 = vmatprep.mubr.f32.mxu0 0.0
    %1665 = vmatmul.mubr.f32.gmra.mrb[0].mxu0 %v617
    %v1666 = vpop.f32.mrb[0].mxu0
    %v1667 = vadd.f32 %v289, %v1666
    %v1668 = vpop.f32.mrb[0].mxu0
    %1669 = vmatprep.mubr.f32.mxu0 0.0
    %1670 = vmatmul.mubr.f32.gmra.mrb[0].mxu0 %v620
    %v1671 = vpop.f32.mrb[0].mxu0
    %v1672 = vadd.f32 %v289, %v1671
    %v1673 = vpop.f32.mrb[0].mxu0
    %1674 = vmatprep.mubr.f32.mxu0 0.0
    %1675 = vmatmul.mubr.f32.gmra.mrb[0].mxu0 %v623
    %v1676 = vpop.f32.mrb[0].mxu0
    %v1677 = vadd.f32 %v289, %v1676
    %v1678 = vpop.f32.mrb[0].mxu0
    %1679 = vmatprep.mubr.f32.mxu0 0.0
    %1680 = vmatmul.mubr.f32.gmra.mrb[0].mxu0 %v626
    %v1681 = vpop.f32.mrb[0].mxu0
    %v1682 = vadd.f32 %v289, %v1681
    %v1683 = vpop.f32.mrb[0].mxu0
    %1684 = vmatprep.mubr.f32.mxu0 0.0
    %1685 = vmatmul.mubr.f32.gmra.mrb[0].mxu0 %v629
    %v1686 = vpop.f32.mrb[0].mxu0
    %v1687 = vadd.f32 %v289, %v1686
    %v1688 = vpop.f32.mrb[0].mxu0
    %1689 = vmatprep.mubr.f32.mxu0 0.0
    %1690 = vmatmul.mubr.f32.gmra.mrb[0].mxu0 %v632
    %v1691 = vpop.f32.mrb[0].mxu0
    %v1692 = vadd.f32 %v289, %v1691
    %v1693 = vpop.f32.mrb[0].mxu0
    %1694 = vmatprep.mubr.f32.mxu0 0.0
    %1695 = vmatmul.mubr.f32.gmra.mrb[0].mxu0 %v635
    %v1696 = vpop.f32.mrb[0].mxu0
    %v1697 = vadd.f32 %v289, %v1696
    %v1698 = vpop.f32.mrb[0].mxu0
    %1699 = vmatprep.mubr.f32.mxu0 0.0
    %1700 = vmatmul.mubr.f32.gmra.mrb[0].mxu0 %v638
    %v1701 = vpop.f32.mrb[0].mxu0
    %v1702 = vadd.f32 %v289, %v1701
    %v1703 = vpop.f32.mrb[0].mxu0
    %1704 = vmatprep.mubr.f32.mxu0 0.0
    %1705 = vmatmul.mubr.f32.gmra.mrb[0].mxu0 %v641
    %v1706 = vpop.f32.mrb[0].mxu0
    %v1707 = vadd.f32 %v289, %v1706
    %v1708 = vpop.f32.mrb[0].mxu0
    %1709 = vmatprep.mubr.f32.mxu0 0.0
    %1710 = vmatmul.mubr.f32.gmra.mrb[0].mxu0 %v644
    %v1711 = vpop.f32.mrb[0].mxu0
    %v1712 = vadd.f32 %v289, %v1711
    %v1713 = vpop.f32.mrb[0].mxu0
    %1714 = vmatprep.mubr.f32.mxu0 0.0
    %1715 = vmatmul.mubr.f32.gmra.mrb[0].mxu0 %v647
    %v1716 = vpop.f32.mrb[0].mxu0
    %v1717 = vadd.f32 %v289, %v1716
    %v1718 = vpop.f32.mrb[0].mxu0
    %1719 = vmatprep.mubr.f32.mxu0 0.0
    %1720 = vmatmul.mubr.f32.gmra.mrb[0].mxu0 %v650
    %v1721 = vpop.f32.mrb[0].mxu0
    %v1722 = vadd.f32 %v289, %v1721
    %v1723 = vpop.f32.mrb[0].mxu0
    %1724 = vmatprep.mubr.f32.mxu0 0.0
    %1725 = vmatmul.mubr.f32.gmra.mrb[0].mxu0 %v653
    %v1726 = vpop.f32.mrb[0].mxu0
    %v1727 = vadd.f32 %v289, %v1726
    %v1728 = vpop.f32.mrb[0].mxu0
    %1729 = vmatprep.mubr.f32.mxu0 0.0
    %1730 = vmatmul.mubr.f32.gmra.mrb[0].mxu0 %v656
    %v1731 = vpop.f32.mrb[0].mxu0
    %v1732 = vadd.f32 %v289, %v1731
    %v1733 = vpop.f32.mrb[0].mxu0
    %1734 = vmatprep.mubr.f32.mxu0 0.0
    %1735 = vmatmul.mubr.f32.gmra.mrb[0].mxu0 %v659
    %v1736 = vpop.f32.mrb[0].mxu0
    %v1737 = vadd.f32 %v289, %v1736
    %v1738 = vpop.f32.mrb[0].mxu0
    %1739 = vmatprep.mubr.f32.mxu0 0.0
    %1740 = vmatmul.mubr.f32.gmra.mrb[0].mxu0 %v662
    %v1741 = vpop.f32.mrb[0].mxu0
    %v1742 = vadd.f32 %v289, %v1741
    %v1743 = vpop.f32.mrb[0].mxu0
    %1744 = vmatprep.mubr.f32.mxu0 0.0
    %1745 = vmatmul.mubr.f32.gmra.mrb[0].mxu0 %v665
    %v1746 = vpop.f32.mrb[0].mxu0
    %v1747 = vadd.f32 %v289, %v1746
    %v1748 = vpop.f32.mrb[0].mxu0
    %1749 = vmatprep.mubr.f32.mxu0 0.0
    %1750 = vmatmul.mubr.f32.gmra.mrb[0].mxu0 %v668
    %v1751 = vpop.f32.mrb[0].mxu0
    %v1752 = vadd.f32 %v289, %v1751
    %v1753 = vpop.f32.mrb[0].mxu0
    %1754 = vmatprep.mubr.f32.mxu0 0.0
    %1755 = vmatmul.mubr.f32.gmra.mrb[0].mxu0 %v671
    %v1756 = vpop.f32.mrb[0].mxu0
    %v1757 = vadd.f32 %v289, %v1756
    %v1758 = vpop.f32.mrb[0].mxu0
    %1759 = vmatprep.mubr.f32.mxu0 0.0
    %1760 = vmatmul.mubr.f32.gmra.mrb[0].mxu0 %v674
    %v1761 = vpop.f32.mrb[0].mxu0
    %v1762 = vadd.f32 %v289, %v1761
    %v1763 = vpop.f32.mrb[0].mxu0
    %1764 = vmatprep.mubr.f32.mxu0 0.0
    %1765 = vmatmul.mubr.f32.gmra.mrb[0].mxu0 %v677
    %v1766 = vpop.f32.mrb[0].mxu0
    %v1767 = vadd.f32 %v289, %v1766
    %v1768 = vpop.f32.mrb[0].mxu0
    %1769 = vmatprep.mubr.f32.mxu0 0.0
    %1770 = vmatmul.mubr.f32.gmra.mrb[0].mxu0 %v680
    %v1771 = vpop.f32.mrb[0].mxu0
    %v1772 = vadd.f32 %v289, %v1771
    %v1773 = vpop.f32.mrb[0].mxu0
    %1774 = vmatprep.mubr.f32.mxu0 0.0
    %1775 = vmatmul.mubr.f32.gmra.mrb[0].mxu0 %v683
    %v1776 = vpop.f32.mrb[0].mxu0
    %v1777 = vadd.f32 %v289, %v1776
    %v1778 = vpop.f32.mrb[0].mxu0
    %1779 = vmatprep.mubr.f32.mxu0 0.0
    %1780 = vmatmul.mubr.f32.gmra.mrb[0].mxu0 %v686
    %v1781 = vpop.f32.mrb[0].mxu0
    %v1782 = vadd.f32 %v289, %v1781
    %v1783 = vpop.f32.mrb[0].mxu0
    %1784 = vmatprep.mubr.f32.mxu0 0.0
    %1785 = vmatmul.mubr.f32.gmra.mrb[0].mxu0 %v689
    %v1786 = vpop.f32.mrb[0].mxu0
    %v1787 = vadd.f32 %v289, %v1786
    %v1788 = vpop.f32.mrb[0].mxu0
    %1789 = vmatprep.mubr.f32.mxu0 0.0
    %1790 = vmatmul.mubr.f32.gmra.mrb[0].mxu0 %v692
    %v1791 = vpop.f32.mrb[0].mxu0
    %v1792 = vadd.f32 %v289, %v1791
    %v1793 = vpop.f32.mrb[0].mxu0
    %1794 = vmatprep.mubr.f32.mxu0 0.0
    %1795 = vmatmul.mubr.f32.gmra.mrb[0].mxu0 %v695
    %v1796 = vpop.f32.mrb[0].mxu0
    %v1797 = vadd.f32 %v289, %v1796
    %v1798 = vpop.f32.mrb[0].mxu0
    %1799 = vmatprep.mubr.f32.mxu0 0.0
    %1800 = vmatmul.mubr.f32.gmra.mrb[0].mxu0 %v698
    %v1801 = vpop.f32.mrb[0].mxu0
    %v1802 = vadd.f32 %v289, %v1801
    %v1803 = vpop.f32.mrb[0].mxu0
    %1804 = vmatprep.mubr.f32.mxu0 0.0
    %1805 = vmatmul.mubr.f32.gmra.mrb[0].mxu0 %v701
    %v1806 = vpop.f32.mrb[0].mxu0
    %v1807 = vadd.f32 %v289, %v1806
    %v1808 = vpop.f32.mrb[0].mxu0
    %1809 = vmatprep.mubr.f32.mxu0 0.0
    %1810 = vmatmul.mubr.f32.gmra.mrb[0].mxu0 %v704
    %v1811 = vpop.f32.mrb[0].mxu0
    %v1812 = vadd.f32 %v289, %v1811
    %v1813 = vpop.f32.mrb[0].mxu0
    %1814 = vmatprep.mubr.f32.mxu0 0.0
    %1815 = vmatmul.mubr.f32.gmra.mrb[0].mxu0 %v707
    %v1816 = vpop.f32.mrb[0].mxu0
    %v1817 = vadd.f32 %v289, %v1816
    %v1818 = vpop.f32.mrb[0].mxu0
    %1819 = vmatprep.mubr.f32.mxu0 0.0
    %1820 = vmatmul.mubr.f32.gmra.mrb[0].mxu0 %v710
    %v1821 = vpop.f32.mrb[0].mxu0
    %v1822 = vadd.f32 %v289, %v1821
    %v1823 = vpop.f32.mrb[0].mxu0
    %1824 = vmatprep.mubr.f32.mxu0 0.0
    %1825 = vmatmul.mubr.f32.gmra.mrb[0].mxu0 %v713
    %v1826 = vpop.f32.mrb[0].mxu0
    %v1827 = vadd.f32 %v289, %v1826
    %v1828 = vpop.f32.mrb[0].mxu0
    %1829 = vmatprep.mubr.f32.mxu0 0.0
    %1830 = vmatmul.mubr.f32.gmra.mrb[0].mxu0 %v716
    %v1831 = vpop.f32.mrb[0].mxu0
    %v1832 = vadd.f32 %v289, %v1831
    %v1833 = vpop.f32.mrb[0].mxu0
    %1834 = vmatprep.mubr.f32.mxu0 0.0
    %1835 = vmatmul.mubr.f32.gmra.mrb[0].mxu0 %v719
    %v1836 = vpop.f32.mrb[0].mxu0
    %v1837 = vadd.f32 %v289, %v1836
    %v1838 = vpop.f32.mrb[0].mxu0
    %1839 = vmatprep.mubr.f32.mxu0 0.0
    %1840 = vmatmul.mubr.f32.gmra.mrb[0].mxu0 %v722
    %v1841 = vpop.f32.mrb[0].mxu0
    %v1842 = vadd.f32 %v289, %v1841
    %v1843 = vpop.f32.mrb[0].mxu0
    %1844 = vmatprep.mubr.f32.mxu0 0.0
    %1845 = vmatmul.mubr.f32.gmra.mrb[0].mxu0 %v725
    %v1846 = vpop.f32.mrb[0].mxu0
    %v1847 = vadd.f32 %v289, %v1846
    %v1848 = vpop.f32.mrb[0].mxu0
    %1849 = vmatprep.mubr.f32.mxu0 0.0
    %1850 = vmatmul.mubr.f32.gmra.mrb[0].mxu0 %v728
    %v1851 = vpop.f32.mrb[0].mxu0
    %v1852 = vadd.f32 %v289, %v1851
    %v1853 = vpop.f32.mrb[0].mxu0
    %1854 = vmatprep.mubr.f32.mxu0 0.0
    %1855 = vmatmul.mubr.f32.gmra.mrb[0].mxu0 %v731
    %v1856 = vpop.f32.mrb[0].mxu0
    %v1857 = vadd.f32 %v289, %v1856
    %v1858 = vpop.f32.mrb[0].mxu0
    %1859 = vmatprep.mubr.f32.mxu0 0.0
    %1860 = vmatmul.mubr.f32.gmra.mrb[0].mxu0 %v734
    %v1861 = vpop.f32.mrb[0].mxu0
    %v1862 = vadd.f32 %v289, %v1861
    %v1863 = vpop.f32.mrb[0].mxu0
    %1864 = vmatprep.mubr.f32.mxu0 0.0
    %1865 = vmatmul.mubr.f32.gmra.mrb[0].mxu0 %v737
    %v1866 = vpop.f32.mrb[0].mxu0
    %v1867 = vadd.f32 %v289, %v1866
    %v1868 = vpop.f32.mrb[0].mxu0
    %1869 = vmatprep.mubr.f32.mxu0 0.0
    %1870 = vmatmul.mubr.f32.gmra.mrb[0].mxu0 %v740
    %v1871 = vpop.f32.mrb[0].mxu0
    %v1872 = vadd.f32 %v289, %v1871
    %v1873 = vpop.f32.mrb[0].mxu0
    %1874 = vmatprep.mubr.f32.mxu0 0.0
    %1875 = vmatmul.mubr.f32.gmra.mrb[0].mxu0 %v743
    %v1876 = vpop.f32.mrb[0].mxu0
    %v1877 = vadd.f32 %v289, %v1876
    %v1878 = vpop.f32.mrb[0].mxu0
    %1879 = vmatprep.mubr.f32.mxu0 0.0
    %1880 = vmatmul.mubr.f32.gmra.mrb[0].mxu0 %v746
    %v1881 = vpop.f32.mrb[0].mxu0
    %v1882 = vadd.f32 %v289, %v1881
    %v1883 = vpop.f32.mrb[0].mxu0
    %1884 = vmatprep.mubr.f32.mxu0 0.0
    %1885 = vmatmul.mubr.f32.gmra.mrb[0].mxu0 %v749
    %v1886 = vpop.f32.mrb[0].mxu0
    %v1887 = vadd.f32 %v289, %v1886
    %v1888 = vpop.f32.mrb[0].mxu0
    %1889 = vmatprep.mubr.f32.mxu0 0.0
    %1890 = vmatmul.mubr.f32.gmra.mrb[0].mxu0 %v752
    %v1891 = vpop.f32.mrb[0].mxu0
    %v1892 = vadd.f32 %v289, %v1891
    %v1893 = vpop.f32.mrb[0].mxu0
    %1894 = vmatprep.mubr.f32.mxu0 0.0
    %1895 = vmatmul.mubr.f32.gmra.mrb[0].mxu0 %v755
    %v1896 = vpop.f32.mrb[0].mxu0
    %v1897 = vadd.f32 %v289, %v1896
    %v1898 = vpop.f32.mrb[0].mxu0
    %1899 = vmatprep.mubr.f32.mxu0 0.0
    %1900 = vmatmul.mubr.f32.gmra.mrb[0].mxu0 %v758
    %v1901 = vpop.f32.mrb[0].mxu0
    %v1902 = vadd.f32 %v289, %v1901
    %v1903 = vpop.f32.mrb[0].mxu0
    %1904 = vmatprep.mubr.f32.mxu0 0.0
    %1905 = vmatmul.mubr.f32.gmra.mrb[0].mxu0 %v761
    %v1906 = vpop.f32.mrb[0].mxu0
    %v1907 = vadd.f32 %v289, %v1906
    %v1908 = vpop.f32.mrb[0].mxu0
    %1909 = vmatprep.mubr.f32.mxu0 0.0
    %1910 = vmatmul.mubr.f32.gmra.mrb[0].mxu0 %v764
    %v1911 = vpop.f32.mrb[0].mxu0
    %v1912 = vadd.f32 %v289, %v1911
    %v1913 = vpop.f32.mrb[0].mxu0
    %1914 = vmatprep.mubr.f32.mxu0 0.0
    %1915 = vmatmul.mubr.f32.gmra.mrb[0].mxu0 %v767
    %v1916 = vpop.f32.mrb[0].mxu0
    %v1917 = vadd.f32 %v289, %v1916
    %v1918 = vpop.f32.mrb[0].mxu0
    %1919 = vmatprep.mubr.f32.mxu0 0.0
    %1920 = vmatmul.mubr.f32.gmra.mrb[0].mxu0 %v770
    %v1921 = vpop.f32.mrb[0].mxu0
    %v1922 = vadd.f32 %v289, %v1921
    %v1923 = vpop.f32.mrb[0].mxu0
    %1924 = vmatprep.mubr.f32.mxu0 0.0
    %1925 = vmatmul.mubr.f32.gmra.mrb[0].mxu0 %v773
    %v1926 = vpop.f32.mrb[0].mxu0
    %v1927 = vadd.f32 %v289, %v1926
    %v1928 = vpop.f32.mrb[0].mxu0
    %1929 = vmatprep.mubr.f32.mxu0 0.0
    %1930 = vmatmul.mubr.f32.gmra.mrb[0].mxu0 %v776
    %v1931 = vpop.f32.mrb[0].mxu0
    %v1932 = vadd.f32 %v289, %v1931
    %v1933 = vpop.f32.mrb[0].mxu0
    %1934 = vmatprep.mubr.f32.mxu0 0.0
    %1935 = vmatmul.mubr.f32.gmra.mrb[0].mxu0 %v779
    %v1936 = vpop.f32.mrb[0].mxu0
    %v1937 = vadd.f32 %v289, %v1936
    %v1938 = vpop.f32.mrb[0].mxu0
    %1939 = vmatprep.mubr.f32.mxu0 0.0
    %1940 = vmatmul.mubr.f32.gmra.mrb[0].mxu0 %v782
    %v1941 = vpop.f32.mrb[0].mxu0
    %v1942 = vadd.f32 %v289, %v1941
    %v1943 = vpop.f32.mrb[0].mxu0
    %1944 = vmatprep.mubr.f32.mxu0 0.0
    %1945 = vmatmul.mubr.f32.gmra.mrb[0].mxu0 %v785
    %v1946 = vpop.f32.mrb[0].mxu0
    %v1947 = vadd.f32 %v289, %v1946
    %v1948 = vpop.f32.mrb[0].mxu0
    %1949 = vmatprep.mubr.f32.mxu0 0.0
    %1950 = vmatmul.mubr.f32.gmra.mrb[0].mxu0 %v788
    %v1951 = vpop.f32.mrb[0].mxu0
    %v1952 = vadd.f32 %v289, %v1951
    %v1953 = vpop.f32.mrb[0].mxu0
    %1954 = vmatprep.mubr.f32.mxu0 0.0
    %1955 = vmatmul.mubr.f32.gmra.mrb[0].mxu0 %v791
    %v1956 = vpop.f32.mrb[0].mxu0
    %v1957 = vadd.f32 %v289, %v1956
    %v1958 = vpop.f32.mrb[0].mxu0
    %1959 = vmatprep.mubr.f32.mxu0 0.0
    %1960 = vmatmul.mubr.f32.gmra.mrb[0].mxu0 %v794
    %v1961 = vpop.f32.mrb[0].mxu0
    %v1962 = vadd.f32 %v289, %v1961
    %v1963 = vpop.f32.mrb[0].mxu0
    %1964 = vmatprep.mubr.f32.mxu0 0.0
    %1965 = vmatmul.mubr.f32.gmra.mrb[0].mxu0 %v797
    %v1966 = vpop.f32.mrb[0].mxu0
    %v1967 = vadd.f32 %v289, %v1966
    %v1968 = vpop.f32.mrb[0].mxu0
    %1969 = vmatprep.mubr.f32.mxu0 0.0
    %1970 = vmatmul.mubr.f32.gmra.mrb[0].mxu0 %v800
    %v1971 = vpop.f32.mrb[0].mxu0
    %v1972 = vadd.f32 %v289, %v1971
    %v1973 = vpop.f32.mrb[0].mxu0
    %1974 = vmatprep.mubr.f32.mxu0 0.0
    %1975 = vmatmul.mubr.f32.gmra.mrb[0].mxu0 %v803
    %v1976 = vpop.f32.mrb[0].mxu0
    %v1977 = vadd.f32 %v289, %v1976
    %v1978 = vpop.f32.mrb[0].mxu0
    %1979 = vmatprep.mubr.f32.mxu0 0.0
    %1980 = vmatmul.mubr.f32.gmra.mrb[0].mxu0 %v806
    %v1981 = vpop.f32.mrb[0].mxu0
    %v1982 = vadd.f32 %v289, %v1981
    %v1983 = vpop.f32.mrb[0].mxu0
    %1984 = vmatprep.mubr.f32.mxu0 0.0
    %1985 = vmatmul.mubr.f32.gmra.mrb[0].mxu0 %v809
    %v1986 = vpop.f32.mrb[0].mxu0
    %v1987 = vadd.f32 %v289, %v1986
    %v1988 = vpop.f32.mrb[0].mxu0
    %1989 = vmatprep.mubr.f32.mxu0 0.0
    %1990 = vmatmul.mubr.f32.gmra.mrb[0].mxu0 %v812
    %v1991 = vpop.f32.mrb[0].mxu0
    %v1992 = vadd.f32 %v289, %v1991
    %v1993 = vpop.f32.mrb[0].mxu0
    %1994 = vmatprep.mubr.f32.mxu0 0.0
    %1995 = vmatmul.mubr.f32.gmra.mrb[0].mxu0 %v815
    %v1996 = vpop.f32.mrb[0].mxu0
    %v1997 = vadd.f32 %v289, %v1996
    %v1998 = vpop.f32.mrb[0].mxu0
    %1999 = vmatprep.mubr.f32.mxu0 0.0
    %2000 = vmatmul.mubr.f32.gmra.mrb[0].mxu0 %v818
    %v2001 = vpop.f32.mrb[0].mxu0
    %v2002 = vadd.f32 %v289, %v2001
    %v2003 = vpop.f32.mrb[0].mxu0
    %2004 = vmatprep.mubr.f32.mxu0 0.0
    %2005 = vmatmul.mubr.f32.gmra.mrb[0].mxu0 %v821
    %v2006 = vpop.f32.mrb[0].mxu0
    %v2007 = vadd.f32 %v289, %v2006
    %v2008 = vpop.f32.mrb[0].mxu0
    %2009 = vmatprep.mubr.f32.mxu0 0.0
    %2010 = vmatmul.mubr.f32.gmra.mrb[0].mxu0 %v824
    %v2011 = vpop.f32.mrb[0].mxu0
    %v2012 = vadd.f32 %v289, %v2011
    %v2013 = vpop.f32.mrb[0].mxu0
    %2014 = vmatprep.mubr.f32.mxu0 0.0
    %2015 = vmatmul.mubr.f32.gmra.mrb[0].mxu0 %v827
    %v2016 = vpop.f32.mrb[0].mxu0
    %v2017 = vadd.f32 %v289, %v2016
    %v2018 = vpop.f32.mrb[0].mxu0
    %2019 = vmatprep.mubr.f32.mxu0 0.0
    %2020 = vmatmul.mubr.f32.gmra.mrb[0].mxu0 %v830
    %v2021 = vpop.f32.mrb[0].mxu0
    %v2022 = vadd.f32 %v289, %v2021
    %v2023 = vpop.f32.mrb[0].mxu0
    %2024 = vmatprep.mubr.f32.mxu0 0.0
    %2025 = vmatmul.mubr.f32.gmra.mrb[0].mxu0 %v833
    %v2026 = vpop.f32.mrb[0].mxu0
    %v2027 = vadd.f32 %v289, %v2026
    %v2028 = vpop.f32.mrb[0].mxu0
    %2029 = vmatprep.mubr.f32.mxu0 0.0
    %2030 = vmatmul.mubr.f32.gmra.mrb[0].mxu0 %v836
    %v2031 = vpop.f32.mrb[0].mxu0
    %v2032 = vadd.f32 %v289, %v2031
    %v2033 = vpop.f32.mrb[0].mxu0
    %2034 = vmatprep.mubr.f32.mxu0 0.0
    %2035 = vmatmul.mubr.f32.gmra.mrb[0].mxu0 %v839
    %v2036 = vpop.f32.mrb[0].mxu0
    %v2037 = vadd.f32 %v289, %v2036
    %v2038 = vpop.f32.mrb[0].mxu0
    %2039 = vmatprep.mubr.f32.mxu0 0.0
    %2040 = vmatmul.mubr.f32.gmra.mrb[0].mxu0 %v842
    %v2041 = vpop.f32.mrb[0].mxu0
    %v2042 = vadd.f32 %v289, %v2041
    %v2043 = vpop.f32.mrb[0].mxu0
    %2044 = vmatprep.mubr.f32.mxu0 0.0
    %2045 = vmatmul.mubr.f32.gmra.mrb[0].mxu0 %v845
    %v2046 = vpop.f32.mrb[0].mxu0
    %v2047 = vadd.f32 %v289, %v2046
    %v2048 = vpop.f32.mrb[0].mxu0
    %2049 = vmatprep.mubr.f32.mxu0 0.0
    %2050 = vmatmul.mubr.f32.gmra.mrb[0].mxu0 %v848
    %v2051 = vpop.f32.mrb[0].mxu0
    %v2052 = vadd.f32 %v289, %v2051
    %v2053 = vpop.f32.mrb[0].mxu0
    %2054 = vmatprep.mubr.f32.mxu0 0.0
    %2055 = vmatmul.mubr.f32.gmra.mrb[0].mxu0 %v851
    %v2056 = vpop.f32.mrb[0].mxu0
    %v2057 = vadd.f32 %v289, %v2056
    %v2058 = vpop.f32.mrb[0].mxu0
    %2059 = vmatprep.mubr.f32.mxu0 0.0
    %2060 = vmatmul.mubr.f32.gmra.mrb[0].mxu0 %v854
    %v2061 = vpop.f32.mrb[0].mxu0
    %v2062 = vadd.f32 %v289, %v2061
    %v2063 = vpop.f32.mrb[0].mxu0
    %2064 = vmatprep.mubr.f32.mxu0 0.0
    %2065 = vmatmul.mubr.f32.gmra.mrb[0].mxu0 %v857
    %v2066 = vpop.f32.mrb[0].mxu0
    %v2067 = vadd.f32 %v289, %v2066
    %v2068 = vpop.f32.mrb[0].mxu0
    %2069 = vmatprep.mubr.f32.mxu0 0.0
    %2070 = vmatmul.mubr.f32.gmra.mrb[0].mxu0 %v860
    %v2071 = vpop.f32.mrb[0].mxu0
    %v2072 = vadd.f32 %v289, %v2071
    %v2073 = vpop.f32.mrb[0].mxu0
    %2074 = vmatprep.mubr.f32.mxu0 0.0
    %2075 = vmatmul.mubr.f32.gmra.mrb[0].mxu0 %v863
    %v2076 = vpop.f32.mrb[0].mxu0
    %v2077 = vadd.f32 %v289, %v2076
    %v2078 = vpop.f32.mrb[0].mxu0
    %2079 = vmatprep.mubr.f32.mxu0 0.0
    %2080 = vmatmul.mubr.f32.gmra.mrb[0].mxu0 %v866
    %v2081 = vpop.f32.mrb[0].mxu0
    %v2082 = vadd.f32 %v289, %v2081
    %v2083 = vpop.f32.mrb[0].mxu0
    %2084 = vmatprep.mubr.f32.mxu0 0.0
    %2085 = vmatmul.mubr.f32.gmra.mrb[0].mxu0 %v869
    %v2086 = vpop.f32.mrb[0].mxu0
    %v2087 = vadd.f32 %v289, %v2086
    %v2088 = vpop.f32.mrb[0].mxu0
    %2089 = vmatprep.mubr.f32.mxu0 0.0
    %2090 = vmatmul.mubr.f32.gmra.mrb[0].mxu0 %v872
    %v2091 = vpop.f32.mrb[0].mxu0
    %v2092 = vadd.f32 %v289, %v2091
    %v2093 = vpop.f32.mrb[0].mxu0
    %2094 = vmatprep.mubr.f32.mxu0 0.0
    %2095 = vmatmul.mubr.f32.gmra.mrb[0].mxu0 %v875
    %v2096 = vpop.f32.mrb[0].mxu0
    %v2097 = vadd.f32 %v289, %v2096
    %v2098 = vpop.f32.mrb[0].mxu0
    %2099 = vmatprep.mubr.f32.mxu0 0.0
    %2100 = vmatmul.mubr.f32.gmra.mrb[0].mxu0 %v878
    %v2101 = vpop.f32.mrb[0].mxu0
    %v2102 = vadd.f32 %v289, %v2101
    %v2103 = vpop.f32.mrb[0].mxu0
    %2104 = vmatprep.mubr.f32.mxu0 0.0
    %2105 = vmatmul.mubr.f32.gmra.mrb[0].mxu0 %v881
    %v2106 = vpop.f32.mrb[0].mxu0
    %v2107 = vadd.f32 %v289, %v2106
    %v2108 = vpop.f32.mrb[0].mxu0
    %2109 = vmatprep.mubr.f32.mxu0 0.0
    %2110 = vmatmul.mubr.f32.gmra.mrb[0].mxu0 %v884
    %v2111 = vpop.f32.mrb[0].mxu0
    %v2112 = vadd.f32 %v289, %v2111
    %v2113 = vpop.f32.mrb[0].mxu0
    %2114 = vmatprep.mubr.f32.mxu0 0.0
    %2115 = vmatmul.mubr.f32.gmra.mrb[0].mxu0 %v887
    %v2116 = vpop.f32.mrb[0].mxu0
    %v2117 = vadd.f32 %v289, %v2116
    %v2118 = vpop.f32.mrb[0].mxu0
    %2119 = vmatprep.mubr.f32.mxu0 0.0
    %2120 = vmatmul.mubr.f32.gmra.mrb[0].mxu0 %v890
    %v2121 = vpop.f32.mrb[0].mxu0
    %v2122 = vadd.f32 %v289, %v2121
    %v2123 = vpop.f32.mrb[0].mxu0
    %2124 = vmatprep.mubr.f32.mxu0 0.0
    %2125 = vmatmul.mubr.f32.gmra.mrb[0].mxu0 %v893
    %v2126 = vpop.f32.mrb[0].mxu0
    %v2127 = vadd.f32 %v289, %v2126
    %v2128 = vpop.f32.mrb[0].mxu0
    %2129 = vmatprep.mubr.f32.mxu0 0.0
    %2130 = vmatmul.mubr.f32.gmra.mrb[0].mxu0 %v896
    %v2131 = vpop.f32.mrb[0].mxu0
    %v2132 = vadd.f32 %v289, %v2131
    %v2133 = vpop.f32.mrb[0].mxu0
    %2134 = vmatprep.mubr.f32.mxu0 0.0
    %2135 = vmatmul.mubr.f32.gmra.mrb[0].mxu0 %v899
    %v2136 = vpop.f32.mrb[0].mxu0
    %v2137 = vadd.f32 %v289, %v2136
    %v2138 = vpop.f32.mrb[0].mxu0
    %2139 = vmatprep.mubr.f32.mxu0 0.0
    %2140 = vmatmul.mubr.f32.gmra.mrb[0].mxu0 %v902
    %v2141 = vpop.f32.mrb[0].mxu0
    %v2142 = vadd.f32 %v289, %v2141
    %v2143 = vpop.f32.mrb[0].mxu0
    %2144 = vmatprep.mubr.f32.mxu0 0.0
    %2145 = vmatmul.mubr.f32.gmra.mrb[0].mxu0 %v905
    %v2146 = vpop.f32.mrb[0].mxu0
    %v2147 = vadd.f32 %v289, %v2146
    %v2148 = vpop.f32.mrb[0].mxu0
    %2149 = vmatprep.mubr.f32.mxu0 0.0
    %2150 = vmatmul.mubr.f32.gmra.mrb[0].mxu0 %v908
    %v2151 = vpop.f32.mrb[0].mxu0
    %v2152 = vadd.f32 %v289, %v2151
    %v2153 = vpop.f32.mrb[0].mxu0
    %2154 = vmatprep.mubr.f32.mxu0 0.0
    %2155 = vmatmul.mubr.f32.gmra.mrb[0].mxu0 %v911
    %v2156 = vpop.f32.mrb[0].mxu0
    %v2157 = vadd.f32 %v289, %v2156
    %v2158 = vpop.f32.mrb[0].mxu0
    %2159 = vmatprep.mubr.f32.mxu0 0.0
    %2160 = vmatmul.mubr.f32.gmra.mrb[0].mxu0 %v914
    %v2161 = vpop.f32.mrb[0].mxu0
    %v2162 = vadd.f32 %v289, %v2161
    %v2163 = vpop.f32.mrb[0].mxu0
    %2164 = vmatprep.mubr.f32.mxu0 0.0
    %2165 = vmatmul.mubr.f32.gmra.mrb[0].mxu0 %v917
    %v2166 = vpop.f32.mrb[0].mxu0
    %v2167 = vadd.f32 %v289, %v2166
    %v2168 = vpop.f32.mrb[0].mxu0
    %2169 = vmatprep.mubr.f32.mxu0 0.0
    %2170 = vmatmul.mubr.f32.gmra.mrb[0].mxu0 %v920
    %v2171 = vpop.f32.mrb[0].mxu0
    %v2172 = vadd.f32 %v289, %v2171
    %v2173 = vpop.f32.mrb[0].mxu0
    %2174 = vmatprep.mubr.f32.mxu0 0.0
    %2175 = vmatmul.mubr.f32.gmra.mrb[0].mxu0 %v923
    %v2176 = vpop.f32.mrb[0].mxu0
    %v2177 = vadd.f32 %v289, %v2176
    %v2178 = vpop.f32.mrb[0].mxu0
    %2179 = vmatprep.mubr.f32.mxu0 0.0
    %2180 = vmatmul.mubr.f32.gmra.mrb[0].mxu0 %v926
    %v2181 = vpop.f32.mrb[0].mxu0
    %v2182 = vadd.f32 %v289, %v2181
    %v2183 = vpop.f32.mrb[0].mxu0
    %2184 = vmatprep.mubr.f32.mxu0 0.0
    %2185 = vmatmul.mubr.f32.gmra.mrb[0].mxu0 %v929
    %v2186 = vpop.f32.mrb[0].mxu0
    %v2187 = vadd.f32 %v289, %v2186
    %v2188 = vpop.f32.mrb[0].mxu0
    %2189 = vmatprep.mubr.f32.mxu0 0.0
    %2190 = vmatmul.mubr.f32.gmra.mrb[0].mxu0 %v932
    %v2191 = vpop.f32.mrb[0].mxu0
    %v2192 = vadd.f32 %v289, %v2191
    %v2193 = vpop.f32.mrb[0].mxu0
    %2194 = vmatprep.mubr.f32.mxu0 0.0
    %2195 = vmatmul.mubr.f32.gmra.mrb[0].mxu0 %v935
    %v2196 = vpop.f32.mrb[0].mxu0
    %v2197 = vadd.f32 %v289, %v2196
    %v2198 = vpop.f32.mrb[0].mxu0
    %2199 = vmatprep.mubr.f32.mxu0 0.0
    %2200 = vmatmul.mubr.f32.gmra.mrb[0].mxu0 %v938
    %v2201 = vpop.f32.mrb[0].mxu0
    %v2202 = vadd.f32 %v289, %v2201
    %v2203 = vpop.f32.mrb[0].mxu0
    %2204 = vmatprep.mubr.f32.mxu0 0.0
    %2205 = vmatmul.mubr.f32.gmra.mrb[0].mxu0 %v941
    %v2206 = vpop.f32.mrb[0].mxu0
    %v2207 = vadd.f32 %v289, %v2206
    %v2208 = vpop.f32.mrb[0].mxu0
    %2209 = vmatprep.mubr.f32.mxu0 0.0
    %2210 = vmatmul.mubr.f32.gmra.mrb[0].mxu0 %v944
    %v2211 = vpop.f32.mrb[0].mxu0
    %v2212 = vadd.f32 %v289, %v2211
    %v2213 = vpop.f32.mrb[0].mxu0
    %2214 = vmatprep.mubr.f32.mxu0 0.0
    %2215 = vmatmul.mubr.f32.gmra.mrb[0].mxu0 %v947
    %v2216 = vpop.f32.mrb[0].mxu0
    %v2217 = vadd.f32 %v289, %v2216
    %v2218 = vpop.f32.mrb[0].mxu0
    %2219 = vmatprep.mubr.f32.mxu0 0.0
    %2220 = vmatmul.mubr.f32.gmra.mrb[0].mxu0 %v950
    %v2221 = vpop.f32.mrb[0].mxu0
    %v2222 = vadd.f32 %v289, %v2221
    %v2223 = vpop.f32.mrb[0].mxu0
    %2224 = vmatprep.mubr.f32.mxu0 0.0
    %2225 = vmatmul.mubr.f32.gmra.mrb[0].mxu0 %v953
    %v2226 = vpop.f32.mrb[0].mxu0
    %v2227 = vadd.f32 %v289, %v2226
    %v2228 = vpop.f32.mrb[0].mxu0
    %2229 = vmatprep.mubr.f32.mxu0 0.0
    %2230 = vmatmul.mubr.f32.gmra.mrb[0].mxu0 %v956
    %v2231 = vpop.f32.mrb[0].mxu0
    %v2232 = vadd.f32 %v289, %v2231
    %v2233 = vpop.f32.mrb[0].mxu0
    %2234 = vmatprep.mubr.f32.mxu0 0.0
    %2235 = vmatmul.mubr.f32.gmra.mrb[0].mxu0 %v959
    %v2236 = vpop.f32.mrb[0].mxu0
    %v2237 = vadd.f32 %v289, %v2236
    %v2238 = vpop.f32.mrb[0].mxu0
    %2239 = vmatprep.mubr.f32.mxu0 0.0
    %2240 = vmatmul.mubr.f32.gmra.mrb[0].mxu0 %v962
    %v2241 = vpop.f32.mrb[0].mxu0
    %v2242 = vadd.f32 %v289, %v2241
    %v2243 = vpop.f32.mrb[0].mxu0
    %2244 = vmatprep.mubr.f32.mxu0 0.0
    %2245 = vmatmul.mubr.f32.gmra.mrb[0].mxu0 %v965
    %v2246 = vpop.f32.mrb[0].mxu0
    %v2247 = vadd.f32 %v289, %v2246
    %v2248 = vpop.f32.mrb[0].mxu0
    %2249 = vmatprep.mubr.f32.mxu0 0.0
    %2250 = vmatmul.mubr.f32.gmra.mrb[0].mxu0 %v968
    %v2251 = vpop.f32.mrb[0].mxu0
    %v2252 = vadd.f32 %v289, %v2251
    %v2253 = vpop.f32.mrb[0].mxu0
    %2254 = vmatprep.mubr.f32.mxu0 0.0
    %2255 = vmatmul.mubr.f32.gmra.mrb[0].mxu0 %v971
    %v2256 = vpop.f32.mrb[0].mxu0
    %v2257 = vadd.f32 %v289, %v2256
    %v2258 = vpop.f32.mrb[0].mxu0
    %2259 = vmatprep.mubr.f32.mxu0 0.0
    %2260 = vmatmul.mubr.f32.gmra.mrb[0].mxu0 %v974
    %v2261 = vpop.f32.mrb[0].mxu0
    %v2262 = vadd.f32 %v289, %v2261
    %v2263 = vpop.f32.mrb[0].mxu0
    %2264 = vmatprep.mubr.f32.mxu0 0.0
    %2265 = vmatmul.mubr.f32.gmra.mrb[0].mxu0 %v977
    %v2266 = vpop.f32.mrb[0].mxu0
    %v2267 = vadd.f32 %v289, %v2266
    %v2268 = vpop.f32.mrb[0].mxu0
    %2269 = vmatprep.mubr.f32.mxu0 0.0
    %2270 = vmatmul.mubr.f32.gmra.mrb[0].mxu0 %v980
    %v2271 = vpop.f32.mrb[0].mxu0
    %v2272 = vadd.f32 %v289, %v2271
    %v2273 = vpop.f32.mrb[0].mxu0
    %2274 = vmatprep.mubr.f32.mxu0 0.0
    %2275 = vmatmul.mubr.f32.gmra.mrb[0].mxu0 %v983
    %v2276 = vpop.f32.mrb[0].mxu0
    %v2277 = vadd.f32 %v289, %v2276
    %v2278 = vpop.f32.mrb[0].mxu0
    %2279 = vmatprep.mubr.f32.mxu0 0.0
    %2280 = vmatmul.mubr.f32.gmra.mrb[0].mxu0 %v986
    %v2281 = vpop.f32.mrb[0].mxu0
    %v2282 = vadd.f32 %v289, %v2281
    %v2283 = vpop.f32.mrb[0].mxu0
    %2284 = vmatprep.mubr.f32.mxu0 0.0
    %2285 = vmatmul.mubr.f32.gmra.mrb[0].mxu0 %v989
    %v2286 = vpop.f32.mrb[0].mxu0
    %v2287 = vadd.f32 %v289, %v2286
    %v2288 = vpop.f32.mrb[0].mxu0
    %2289 = vmatprep.mubr.f32.mxu0 0.0
    %2290 = vmatmul.mubr.f32.gmra.mrb[0].mxu0 %v992
    %v2291 = vpop.f32.mrb[0].mxu0
    %v2292 = vadd.f32 %v289, %v2291
    %v2293 = vpop.f32.mrb[0].mxu0
    %2294 = vmatprep.mubr.f32.mxu0 0.0
    %2295 = vmatmul.mubr.f32.gmra.mrb[0].mxu0 %v995
    %v2296 = vpop.f32.mrb[0].mxu0
    %v2297 = vadd.f32 %v289, %v2296
    %v2298 = vpop.f32.mrb[0].mxu0
    %2299 = vmatprep.mubr.f32.mxu0 0.0
    %2300 = vmatmul.mubr.f32.gmra.mrb[0].mxu0 %v998
    %v2301 = vpop.f32.mrb[0].mxu0
    %v2302 = vadd.f32 %v289, %v2301
    %v2303 = vpop.f32.mrb[0].mxu0
    %2304 = vmatprep.mubr.f32.mxu0 0.0
    %2305 = vmatmul.mubr.f32.gmra.mrb[0].mxu0 %v1001
    %v2306 = vpop.f32.mrb[0].mxu0
    %v2307 = vadd.f32 %v289, %v2306
    %v2308 = vpop.f32.mrb[0].mxu0
    %2309 = vmatprep.mubr.f32.mxu0 0.0
    %2310 = vmatmul.mubr.f32.gmra.mrb[0].mxu0 %v1004
    %v2311 = vpop.f32.mrb[0].mxu0
    %v2312 = vadd.f32 %v289, %v2311
    %v2313 = vpop.f32.mrb[0].mxu0
    %2314 = vmatprep.mubr.f32.mxu0 0.0
    %2315 = vmatmul.mubr.f32.gmra.mrb[0].mxu0 %v1007
    %v2316 = vpop.f32.mrb[0].mxu0
    %v2317 = vadd.f32 %v289, %v2316
    %v2318 = vpop.f32.mrb[0].mxu0
    %2319 = vmatprep.mubr.f32.mxu0 0.0
    %2320 = vmatmul.mubr.f32.gmra.mrb[0].mxu0 %v1010
    %v2321 = vpop.f32.mrb[0].mxu0
    %v2322 = vadd.f32 %v289, %v2321
    %v2323 = vpop.f32.mrb[0].mxu0
    %2324 = vmatprep.mubr.f32.mxu0 0.0
    %2325 = vmatmul.mubr.f32.gmra.mrb[0].mxu0 %v1013
    %v2326 = vpop.f32.mrb[0].mxu0
    %v2327 = vadd.f32 %v289, %v2326
    %v2328 = vpop.f32.mrb[0].mxu0
    %2329 = vmatprep.mubr.f32.mxu0 0.0
    %2330 = vmatmul.mubr.f32.gmra.mrb[0].mxu0 %v1016
    %v2331 = vpop.f32.mrb[0].mxu0
    %v2332 = vadd.f32 %v289, %v2331
    %v2333 = vpop.f32.mrb[0].mxu0
    %2334 = vmatprep.mubr.f32.mxu0 0.0
    %2335 = vmatmul.mubr.f32.gmra.mrb[0].mxu0 %v1019
    %v2336 = vpop.f32.mrb[0].mxu0
    %v2337 = vadd.f32 %v289, %v2336
    %v2338 = vpop.f32.mrb[0].mxu0
    %2339 = vmatprep.mubr.f32.mxu0 0.0
    %2340 = vmatmul.mubr.f32.gmra.mrb[0].mxu0 %v1022
    %v2341 = vpop.f32.mrb[0].mxu0
    %v2342 = vadd.f32 %v289, %v2341
    %v2343 = vpop.f32.mrb[0].mxu0
    %2344 = vmatprep.mubr.f32.mxu0 0.0
    %2345 = vmatmul.mubr.f32.gmra.mrb[0].mxu0 %v1025
    %v2346 = vpop.f32.mrb[0].mxu0
    %v2347 = vadd.f32 %v289, %v2346
    %v2348 = vpop.f32.mrb[0].mxu0
    %2349 = vmatprep.mubr.f32.mxu0 0.0
    %2350 = vmatmul.mubr.f32.gmra.mrb[0].mxu0 %v1028
    %v2351 = vpop.f32.mrb[0].mxu0
    %v2352 = vadd.f32 %v289, %v2351
    %v2353 = vpop.f32.mrb[0].mxu0
    %2354 = vmatprep.mubr.f32.mxu0 0.0
    %2355 = vmatmul.mubr.f32.gmra.mrb[0].mxu0 %v1031
    %v2356 = vpop.f32.mrb[0].mxu0
    %v2357 = vadd.f32 %v289, %v2356
    %v2358 = vpop.f32.mrb[0].mxu0
    %2359 = vmatprep.mubr.f32.mxu0 0.0
    %2360 = vmatmul.mubr.f32.gmra.mrb[0].mxu0 %v1034
    %v2361 = vpop.f32.mrb[0].mxu0
    %v2362 = vadd.f32 %v289, %v2361
    %v2363 = vpop.f32.mrb[0].mxu0
    %2364 = vmatprep.mubr.f32.mxu0 0.0
    %2365 = vmatmul.mubr.f32.gmra.mrb[0].mxu0 %v1037
    %v2366 = vpop.f32.mrb[0].mxu0
    %v2367 = vadd.f32 %v289, %v2366
    %v2368 = vpop.f32.mrb[0].mxu0
    %2369 = vmatprep.mubr.f32.mxu0 0.0
    %2370 = vmatmul.mubr.f32.gmra.mrb[0].mxu0 %v1040
    %v2371 = vpop.f32.mrb[0].mxu0
    %v2372 = vadd.f32 %v289, %v2371
    %v2373 = vpop.f32.mrb[0].mxu0
    %2374 = vmatprep.mubr.f32.mxu0 0.0
    %2375 = vmatmul.mubr.f32.gmra.mrb[0].mxu0 %v1043
    %v2376 = vpop.f32.mrb[0].mxu0
    %v2377 = vadd.f32 %v289, %v2376
    %v2378 = vpop.f32.mrb[0].mxu0
    %2379 = vmatprep.mubr.f32.mxu0 0.0
    %2380 = vmatmul.mubr.f32.gmra.mrb[0].mxu0 %v1046
    %v2381 = vpop.f32.mrb[0].mxu0
    %v2382 = vadd.f32 %v289, %v2381
    %v2383 = vpop.f32.mrb[0].mxu0
    %2384 = vmatprep.mubr.f32.mxu0 0.0
    %2385 = vmatmul.mubr.f32.gmra.mrb[0].mxu0 %v1049
    %v2386 = vpop.f32.mrb[0].mxu0
    %v2387 = vadd.f32 %v289, %v2386
    %v2388 = vpop.f32.mrb[0].mxu0
    %2389 = vmatprep.mubr.f32.mxu0 0.0
    %2390 = vmatmul.mubr.f32.gmra.mrb[0].mxu0 %v1052
    %v2391 = vpop.f32.mrb[0].mxu0
    %v2392 = vadd.f32 %v289, %v2391
    %v2393 = vpop.f32.mrb[0].mxu0
    %2394 = vmatprep.mubr.f32.mxu0 0.0
    %2395 = vmatmul.mubr.f32.gmra.mrb[0].mxu0 %v1055
    %v2396 = vpop.f32.mrb[0].mxu0
    %v2397 = vadd.f32 %v289, %v2396
    %v2398 = vpop.f32.mrb[0].mxu0
    %2399 = vmatprep.mubr.f32.mxu0 0.0
    %2400 = vmatmul.mubr.f32.gmra.mrb[0].mxu0 %v1058
    %v2401 = vpop.f32.mrb[0].mxu0
    %v2402 = vadd.f32 %v289, %v2401
    %v2403 = vpop.f32.mrb[0].mxu0
    %2404 = vdwg.mxu0
    %v2405 = vmax.f32 %v1127, 0.0
    %v2406 = vmax.f32 %v1132, 0.0
    %v2407 = vmax.f32 %v1137, 0.0
    %v2408 = vmax.f32 %v1142, 0.0
    %v2409 = vmax.f32 %v1147, 0.0
    %v2410 = vmax.f32 %v1152, 0.0
    %v2411 = vmax.f32 %v1157, 0.0
    %v2412 = vmax.f32 %v1162, 0.0
    %v2413 = vmax.f32 %v1167, 0.0
    %v2414 = vmax.f32 %v1172, 0.0
    %v2415 = vmax.f32 %v1177, 0.0
    %v2416 = vmax.f32 %v1182, 0.0
    %v2417 = vmax.f32 %v1187, 0.0
    %v2418 = vmax.f32 %v1192, 0.0
    %v2419 = vmax.f32 %v1197, 0.0
    %v2420 = vmax.f32 %v1202, 0.0
    %v2421 = vmax.f32 %v1207, 0.0
    %v2422 = vmax.f32 %v1212, 0.0
    %v2423 = vmax.f32 %v1217, 0.0
    %v2424 = vmax.f32 %v1222, 0.0
    %v2425 = vmax.f32 %v1227, 0.0
    %v2426 = vmax.f32 %v1232, 0.0
    %v2427 = vmax.f32 %v1237, 0.0
    %v2428 = vmax.f32 %v1242, 0.0
    %v2429 = vmax.f32 %v1247, 0.0
    %v2430 = vmax.f32 %v1252, 0.0
    %v2431 = vmax.f32 %v1257, 0.0
    %v2432 = vmax.f32 %v1262, 0.0
    %v2433 = vmax.f32 %v1267, 0.0
    %v2434 = vmax.f32 %v1272, 0.0
    %v2435 = vmax.f32 %v1277, 0.0
    %v2436 = vmax.f32 %v1282, 0.0
    %v2437 = vmax.f32 %v1287, 0.0
    %v2438 = vmax.f32 %v1292, 0.0
    %v2439 = vmax.f32 %v1297, 0.0
    %v2440 = vmax.f32 %v1302, 0.0
    %v2441 = vmax.f32 %v1307, 0.0
    %v2442 = vmax.f32 %v1312, 0.0
    %v2443 = vmax.f32 %v1317, 0.0
    %v2444 = vmax.f32 %v1322, 0.0
    %v2445 = vmax.f32 %v1327, 0.0
    %v2446 = vmax.f32 %v1332, 0.0
    %v2447 = vmax.f32 %v1337, 0.0
    %v2448 = vmax.f32 %v1342, 0.0
    %v2449 = vmax.f32 %v1347, 0.0
    %v2450 = vmax.f32 %v1352, 0.0
    %v2451 = vmax.f32 %v1357, 0.0
    %v2452 = vmax.f32 %v1362, 0.0
    %v2453 = vmax.f32 %v1367, 0.0
    %v2454 = vmax.f32 %v1372, 0.0
    %v2455 = vmax.f32 %v1377, 0.0
    %v2456 = vmax.f32 %v1382, 0.0
    %v2457 = vmax.f32 %v1387, 0.0
    %v2458 = vmax.f32 %v1392, 0.0
    %v2459 = vmax.f32 %v1397, 0.0
    %v2460 = vmax.f32 %v1402, 0.0
    %v2461 = vmax.f32 %v1407, 0.0
    %v2462 = vmax.f32 %v1412, 0.0
    %v2463 = vmax.f32 %v1417, 0.0
    %v2464 = vmax.f32 %v1422, 0.0
    %v2465 = vmax.f32 %v1427, 0.0
    %v2466 = vmax.f32 %v1432, 0.0
    %v2467 = vmax.f32 %v1437, 0.0
    %v2468 = vmax.f32 %v1442, 0.0
    %v2469 = vmax.f32 %v1447, 0.0
    %v2470 = vmax.f32 %v1452, 0.0
    %v2471 = vmax.f32 %v1457, 0.0
    %v2472 = vmax.f32 %v1462, 0.0
    %v2473 = vmax.f32 %v1467, 0.0
    %v2474 = vmax.f32 %v1472, 0.0
    %v2475 = vmax.f32 %v1477, 0.0
    %v2476 = vmax.f32 %v1482, 0.0
    %v2477 = vmax.f32 %v1487, 0.0
    %v2478 = vmax.f32 %v1492, 0.0
    %v2479 = vmax.f32 %v1497, 0.0
    %v2480 = vmax.f32 %v1502, 0.0
    %v2481 = vmax.f32 %v1507, 0.0
    %v2482 = vmax.f32 %v1512, 0.0
    %v2483 = vmax.f32 %v1517, 0.0
    %v2484 = vmax.f32 %v1522, 0.0
    %v2485 = vmax.f32 %v1527, 0.0
    %v2486 = vmax.f32 %v1532, 0.0
    %v2487 = vmax.f32 %v1537, 0.0
    %v2488 = vmax.f32 %v1542, 0.0
    %v2489 = vmax.f32 %v1547, 0.0
    %v2490 = vmax.f32 %v1552, 0.0
    %v2491 = vmax.f32 %v1557, 0.0
    %v2492 = vmax.f32 %v1562, 0.0
    %v2493 = vmax.f32 %v1567, 0.0
    %v2494 = vmax.f32 %v1572, 0.0
    %v2495 = vmax.f32 %v1577, 0.0
    %v2496 = vmax.f32 %v1582, 0.0
    %v2497 = vmax.f32 %v1587, 0.0
    %v2498 = vmax.f32 %v1592, 0.0
    %v2499 = vmax.f32 %v1597, 0.0
    %v2500 = vmax.f32 %v1602, 0.0
    %v2501 = vmax.f32 %v1607, 0.0
    %v2502 = vmax.f32 %v1612, 0.0
    %v2503 = vmax.f32 %v1617, 0.0
    %v2504 = vmax.f32 %v1622, 0.0
    %v2505 = vmax.f32 %v1627, 0.0
    %v2506 = vmax.f32 %v1632, 0.0
    %v2507 = vmax.f32 %v1637, 0.0
    %v2508 = vmax.f32 %v1642, 0.0
    %v2509 = vmax.f32 %v1647, 0.0
    %v2510 = vmax.f32 %v1652, 0.0
    %v2511 = vmax.f32 %v1657, 0.0
    %v2512 = vmax.f32 %v1662, 0.0
    %v2513 = vmax.f32 %v1667, 0.0
    %v2514 = vmax.f32 %v1672, 0.0
    %v2515 = vmax.f32 %v1677, 0.0
    %v2516 = vmax.f32 %v1682, 0.0
    %v2517 = vmax.f32 %v1687, 0.0
    %v2518 = vmax.f32 %v1692, 0.0
    %v2519 = vmax.f32 %v1697, 0.0
    %v2520 = vmax.f32 %v1702, 0.0
    %v2521 = vmax.f32 %v1707, 0.0
    %v2522 = vmax.f32 %v1712, 0.0
    %v2523 = vmax.f32 %v1717, 0.0
    %v2524 = vmax.f32 %v1722, 0.0
    %v2525 = vmax.f32 %v1727, 0.0
    %v2526 = vmax.f32 %v1732, 0.0
    %v2527 = vmax.f32 %v1737, 0.0
    %v2528 = vmax.f32 %v1742, 0.0
    %v2529 = vmax.f32 %v1747, 0.0
    %v2530 = vmax.f32 %v1752, 0.0
    %v2531 = vmax.f32 %v1757, 0.0
    %v2532 = vmax.f32 %v1762, 0.0
    %v2533 = vmax.f32 %v1767, 0.0
    %v2534 = vmax.f32 %v1772, 0.0
    %v2535 = vmax.f32 %v1777, 0.0
    %v2536 = vmax.f32 %v1782, 0.0
    %v2537 = vmax.f32 %v1787, 0.0
    %v2538 = vmax.f32 %v1792, 0.0
    %v2539 = vmax.f32 %v1797, 0.0
    %v2540 = vmax.f32 %v1802, 0.0
    %v2541 = vmax.f32 %v1807, 0.0
    %v2542 = vmax.f32 %v1812, 0.0
    %v2543 = vmax.f32 %v1817, 0.0
    %v2544 = vmax.f32 %v1822, 0.0
    %v2545 = vmax.f32 %v1827, 0.0
    %v2546 = vmax.f32 %v1832, 0.0
    %v2547 = vmax.f32 %v1837, 0.0
    %v2548 = vmax.f32 %v1842, 0.0
    %v2549 = vmax.f32 %v1847, 0.0
    %v2550 = vmax.f32 %v1852, 0.0
    %v2551 = vmax.f32 %v1857, 0.0
    %v2552 = vmax.f32 %v1862, 0.0
    %v2553 = vmax.f32 %v1867, 0.0
    %v2554 = vmax.f32 %v1872, 0.0
    %v2555 = vmax.f32 %v1877, 0.0
    %v2556 = vmax.f32 %v1882, 0.0
    %v2557 = vmax.f32 %v1887, 0.0
    %v2558 = vmax.f32 %v1892, 0.0
    %v2559 = vmax.f32 %v1897, 0.0
    %v2560 = vmax.f32 %v1902, 0.0
    %v2561 = vmax.f32 %v1907, 0.0
    %v2562 = vmax.f32 %v1912, 0.0
    %v2563 = vmax.f32 %v1917, 0.0
    %v2564 = vmax.f32 %v1922, 0.0
    %v2565 = vmax.f32 %v1927, 0.0
    %v2566 = vmax.f32 %v1932, 0.0
    %v2567 = vmax.f32 %v1937, 0.0
    %v2568 = vmax.f32 %v1942, 0.0
    %v2569 = vmax.f32 %v1947, 0.0
    %v2570 = vmax.f32 %v1952, 0.0
    %v2571 = vmax.f32 %v1957, 0.0
    %v2572 = vmax.f32 %v1962, 0.0
    %v2573 = vmax.f32 %v1967, 0.0
    %v2574 = vmax.f32 %v1972, 0.0
    %v2575 = vmax.f32 %v1977, 0.0
    %v2576 = vmax.f32 %v1982, 0.0
    %v2577 = vmax.f32 %v1987, 0.0
    %v2578 = vmax.f32 %v1992, 0.0
    %v2579 = vmax.f32 %v1997, 0.0
    %v2580 = vmax.f32 %v2002, 0.0
    %v2581 = vmax.f32 %v2007, 0.0
    %v2582 = vmax.f32 %v2012, 0.0
    %v2583 = vmax.f32 %v2017, 0.0
    %v2584 = vmax.f32 %v2022, 0.0
    %v2585 = vmax.f32 %v2027, 0.0
    %v2586 = vmax.f32 %v2032, 0.0
    %v2587 = vmax.f32 %v2037, 0.0
    %v2588 = vmax.f32 %v2042, 0.0
    %v2589 = vmax.f32 %v2047, 0.0
    %v2590 = vmax.f32 %v2052, 0.0
    %v2591 = vmax.f32 %v2057, 0.0
    %v2592 = vmax.f32 %v2062, 0.0
    %v2593 = vmax.f32 %v2067, 0.0
    %v2594 = vmax.f32 %v2072, 0.0
    %v2595 = vmax.f32 %v2077, 0.0
    %v2596 = vmax.f32 %v2082, 0.0
    %v2597 = vmax.f32 %v2087, 0.0
    %v2598 = vmax.f32 %v2092, 0.0
    %v2599 = vmax.f32 %v2097, 0.0
    %v2600 = vmax.f32 %v2102, 0.0
    %v2601 = vmax.f32 %v2107, 0.0
    %v2602 = vmax.f32 %v2112, 0.0
    %v2603 = vmax.f32 %v2117, 0.0
    %v2604 = vmax.f32 %v2122, 0.0
    %v2605 = vmax.f32 %v2127, 0.0
    %v2606 = vmax.f32 %v2132, 0.0
    %v2607 = vmax.f32 %v2137, 0.0
    %v2608 = vmax.f32 %v2142, 0.0
    %v2609 = vmax.f32 %v2147, 0.0
    %v2610 = vmax.f32 %v2152, 0.0
    %v2611 = vmax.f32 %v2157, 0.0
    %v2612 = vmax.f32 %v2162, 0.0
    %v2613 = vmax.f32 %v2167, 0.0
    %v2614 = vmax.f32 %v2172, 0.0
    %v2615 = vmax.f32 %v2177, 0.0
    %v2616 = vmax.f32 %v2182, 0.0
    %v2617 = vmax.f32 %v2187, 0.0
    %v2618 = vmax.f32 %v2192, 0.0
    %v2619 = vmax.f32 %v2197, 0.0
    %v2620 = vmax.f32 %v2202, 0.0
    %v2621 = vmax.f32 %v2207, 0.0
    %v2622 = vmax.f32 %v2212, 0.0
    %v2623 = vmax.f32 %v2217, 0.0
    %v2624 = vmax.f32 %v2222, 0.0
    %v2625 = vmax.f32 %v2227, 0.0
    %v2626 = vmax.f32 %v2232, 0.0
    %v2627 = vmax.f32 %v2237, 0.0
    %v2628 = vmax.f32 %v2242, 0.0
    %v2629 = vmax.f32 %v2247, 0.0
    %v2630 = vmax.f32 %v2252, 0.0
    %v2631 = vmax.f32 %v2257, 0.0
    %v2632 = vmax.f32 %v2262, 0.0
    %v2633 = vmax.f32 %v2267, 0.0
    %v2634 = vmax.f32 %v2272, 0.0
    %v2635 = vmax.f32 %v2277, 0.0
    %v2636 = vmax.f32 %v2282, 0.0
    %v2637 = vmax.f32 %v2287, 0.0
    %v2638 = vmax.f32 %v2292, 0.0
    %v2639 = vmax.f32 %v2297, 0.0
    %v2640 = vmax.f32 %v2302, 0.0
    %v2641 = vmax.f32 %v2307, 0.0
    %v2642 = vmax.f32 %v2312, 0.0
    %v2643 = vmax.f32 %v2317, 0.0
    %v2644 = vmax.f32 %v2322, 0.0
    %v2645 = vmax.f32 %v2327, 0.0
    %v2646 = vmax.f32 %v2332, 0.0
    %v2647 = vmax.f32 %v2337, 0.0
    %v2648 = vmax.f32 %v2342, 0.0
    %v2649 = vmax.f32 %v2347, 0.0
    %v2650 = vmax.f32 %v2352, 0.0
    %v2651 = vmax.f32 %v2357, 0.0
    %v2652 = vmax.f32 %v2362, 0.0
    %v2653 = vmax.f32 %v2367, 0.0
    %v2654 = vmax.f32 %v2372, 0.0
    %v2655 = vmax.f32 %v2377, 0.0
    %v2656 = vmax.f32 %v2382, 0.0
    %v2657 = vmax.f32 %v2387, 0.0
    %v2658 = vmax.f32 %v2392, 0.0
    %v2659 = vmax.f32 %v2397, 0.0
    %v2660 = vmax.f32 %v2402, 0.0
    %v2661 = vld [vmem:[%s3] sm:$0xff]
    %v2662 = vld [vmem:[%s3 + $0x8] sm:$0xff]
    %v2663 = vld [vmem:[%s3 + $0x10] sm:$0xff]
    %v2664 = vld [vmem:[%s3 + $0x18] sm:$0xff]
    %v2669 = vcombine.high %v2661, %v2661
    %v2671 = vunpack.c.l.s4 1983009808
    %v2672 = vunpack.c.0.s8 %v2671
    %v2673 = vlaneseq
    %v2674 = vshrl.u32 %v2673, 7
    %v2675 = vsub.s32 %v2672, %v2674
    %v2676 = vrot.slane %v2661, %v2675
    %v2678 = vunpack.c.l.s4 1983009808
    %v2679 = vunpack.c.0.s8 %v2678
    %v2680 = vlaneseq
    %v2681 = vshrl.u32 %v2680, 7
    %v2682 = vsub.s32 %v2679, %v2681
    %v2683 = vrot.slane %v2669, %v2682
    %v2684 = vcombine.high %v2676, %v2676
    %v2685 = vcombine.high %v2683, %v2683
    %v2686 = vcombine.high %v2662, %v2662
    %v2688 = vunpack.c.l.s4 1983009808
    %v2689 = vunpack.c.0.s8 %v2688
    %v2690 = vlaneseq
    %v2691 = vshrl.u32 %v2690, 7
    %v2692 = vsub.s32 %v2689, %v2691
    %v2693 = vrot.slane %v2662, %v2692
    %v2695 = vunpack.c.l.s4 1983009808
    %v2696 = vunpack.c.0.s8 %v2695
    %v2697 = vlaneseq
    %v2698 = vshrl.u32 %v2697, 7
    %v2699 = vsub.s32 %v2696, %v2698
    %v2700 = vrot.slane %v2686, %v2699
    %v2701 = vcombine.high %v2693, %v2693
    %v2702 = vcombine.high %v2700, %v2700
    %v2703 = vcombine.high %v2663, %v2663
    %v2705 = vunpack.c.l.s4 1983009808
    %v2706 = vunpack.c.0.s8 %v2705
    %v2707 = vlaneseq
    %v2708 = vshrl.u32 %v2707, 7
    %v2709 = vsub.s32 %v2706, %v2708
    %v2710 = vrot.slane %v2663, %v2709
    %v2712 = vunpack.c.l.s4 1983009808
    %v2713 = vunpack.c.0.s8 %v2712
    %v2714 = vlaneseq
    %v2715 = vshrl.u32 %v2714, 7
    %v2716 = vsub.s32 %v2713, %v2715
    %v2717 = vrot.slane %v2703, %v2716
    %v2718 = vcombine.high %v2710, %v2710
    %v2719 = vcombine.high %v2717, %v2717
    %v2720 = vcombine.high %v2664, %v2664
    %v2722 = vunpack.c.l.s4 1983009808
    %v2723 = vunpack.c.0.s8 %v2722
    %v2724 = vlaneseq
    %v2725 = vshrl.u32 %v2724, 7
    %v2726 = vsub.s32 %v2723, %v2725
    %v2727 = vrot.slane %v2664, %v2726
    %v2729 = vunpack.c.l.s4 1983009808
    %v2730 = vunpack.c.0.s8 %v2729
    %v2731 = vlaneseq
    %v2732 = vshrl.u32 %v2731, 7
    %v2733 = vsub.s32 %v2730, %v2732
    %v2734 = vrot.slane %v2720, %v2733
    %v2735 = vcombine.high %v2727, %v2727
    %v2736 = vcombine.high %v2734, %v2734
    %2753 = vmatprep.subr.mxu0 0.0
    %2754 = vmatpush1.msra.mxu0 %v2405
    %2755 = vmatprep.subr.mxu0 0.0
    %2756 = vmatpush1.msra.mxu0 %v2406
    %2757 = vmatprep.subr.mxu0 0.0
    %2758 = vmatpush1.msra.mxu0 %v2407
    %2759 = vmatprep.subr.mxu0 0.0
    %2760 = vmatpush1.msra.mxu0 %v2408
    %2761 = vmatprep.subr.mxu0 0.0
    %2762 = vmatpush1.msra.mxu0 %v2409
    %2763 = vmatprep.subr.mxu0 0.0
    %2764 = vmatpush1.msra.mxu0 %v2410
    %2765 = vmatprep.subr.mxu0 0.0
    %2766 = vmatpush1.msra.mxu0 %v2411
    %2767 = vmatprep.subr.mxu0 0.0
    %2768 = vmatpush1.msra.mxu0 %v2412
    %2769 = vmatprep.subr.mxu0 0.0
    %2770 = vmatpush1.msra.mxu0 %v2413
    %2771 = vmatprep.subr.mxu0 0.0
    %2772 = vmatpush1.msra.mxu0 %v2414
    %2773 = vmatprep.subr.mxu0 0.0
    %2774 = vmatpush1.msra.mxu0 %v2415
    %2775 = vmatprep.subr.mxu0 0.0
    %2776 = vmatpush1.msra.mxu0 %v2416
    %2777 = vmatprep.subr.mxu0 0.0
    %2778 = vmatpush1.msra.mxu0 %v2417
    %2779 = vmatprep.subr.mxu0 0.0
    %2780 = vmatpush1.msra.mxu0 %v2418
    %2781 = vmatprep.subr.mxu0 0.0
    %2782 = vmatpush1.msra.mxu0 %v2419
    %2783 = vmatprep.subr.mxu0 0.0
    %2784 = vmatpush1.msra.mxu0 %v2420
    %2785 = vmatprep.subr.mxu0 0.0
    %2786 = vmatpush1.msra.mxu0 %v2421
    %2787 = vmatprep.subr.mxu0 0.0
    %2788 = vmatpush1.msra.mxu0 %v2422
    %2789 = vmatprep.subr.mxu0 0.0
    %2790 = vmatpush1.msra.mxu0 %v2423
    %2791 = vmatprep.subr.mxu0 0.0
    %2792 = vmatpush1.msra.mxu0 %v2424
    %2793 = vmatprep.subr.mxu0 0.0
    %2794 = vmatpush1.msra.mxu0 %v2425
    %2795 = vmatprep.subr.mxu0 0.0
    %2796 = vmatpush1.msra.mxu0 %v2426
    %2797 = vmatprep.subr.mxu0 0.0
    %2798 = vmatpush1.msra.mxu0 %v2427
    %2799 = vmatprep.subr.mxu0 0.0
    %2800 = vmatpush1.msra.mxu0 %v2428
    %2801 = vmatprep.subr.mxu0 0.0
    %2802 = vmatpush1.msra.mxu0 %v2429
    %2803 = vmatprep.subr.mxu0 0.0
    %2804 = vmatpush1.msra.mxu0 %v2430
    %2805 = vmatprep.subr.mxu0 0.0
    %2806 = vmatpush1.msra.mxu0 %v2431
    %2807 = vmatprep.subr.mxu0 0.0
    %2808 = vmatpush1.msra.mxu0 %v2432
    %2809 = vmatprep.subr.mxu0 0.0
    %2810 = vmatpush1.msra.mxu0 %v2433
    %2811 = vmatprep.subr.mxu0 0.0
    %2812 = vmatpush1.msra.mxu0 %v2434
    %2813 = vmatprep.subr.mxu0 0.0
    %2814 = vmatpush1.msra.mxu0 %v2435
    %2815 = vmatprep.subr.mxu0 0.0
    %2816 = vmatpush1.msra.mxu0 %v2436
    %2817 = vmatprep.mubr.f32.mxu0 %v2684
    %2818 = vmatmul.mubr.f32.gmra.mrb[0].mxu0 %v2676
    %v2819 = vpop.f32.mrb[0].mxu0
    %v2820 = vadd.f32 0.0, %v2819
    %v2821 = vpop.f32.mrb[0].mxu0
    %2822 = vdwg.mxu0
    %2823 = vmatprep.subr.mxu0 0.0
    %2824 = vmatpush1.msra.mxu0 %v2437
    %2825 = vmatprep.subr.mxu0 0.0
    %2826 = vmatpush1.msra.mxu0 %v2438
    %2827 = vmatprep.subr.mxu0 0.0
    %2828 = vmatpush1.msra.mxu0 %v2439
    %2829 = vmatprep.subr.mxu0 0.0
    %2830 = vmatpush1.msra.mxu0 %v2440
    %2831 = vmatprep.subr.mxu0 0.0
    %2832 = vmatpush1.msra.mxu0 %v2441
    %2833 = vmatprep.subr.mxu0 0.0
    %2834 = vmatpush1.msra.mxu0 %v2442
    %2835 = vmatprep.subr.mxu0 0.0
    %2836 = vmatpush1.msra.mxu0 %v2443
    %2837 = vmatprep.subr.mxu0 0.0
    %2838 = vmatpush1.msra.mxu0 %v2444
    %2839 = vmatprep.subr.mxu0 0.0
    %2840 = vmatpush1.msra.mxu0 %v2445
    %2841 = vmatprep.subr.mxu0 0.0
    %2842 = vmatpush1.msra.mxu0 %v2446
    %2843 = vmatprep.subr.mxu0 0.0
    %2844 = vmatpush1.msra.mxu0 %v2447
    %2845 = vmatprep.subr.mxu0 0.0
    %2846 = vmatpush1.msra.mxu0 %v2448
    %2847 = vmatprep.subr.mxu0 0.0
    %2848 = vmatpush1.msra.mxu0 %v2449
    %2849 = vmatprep.subr.mxu0 0.0
    %2850 = vmatpush1.msra.mxu0 %v2450
    %2851 = vmatprep.subr.mxu0 0.0
    %2852 = vmatpush1.msra.mxu0 %v2451
    %2853 = vmatprep.subr.mxu0 0.0
    %2854 = vmatpush1.msra.mxu0 %v2452
    %2855 = vmatprep.subr.mxu0 0.0
    %2856 = vmatpush1.msra.mxu0 %v2453
    %2857 = vmatprep.subr.mxu0 0.0
    %2858 = vmatpush1.msra.mxu0 %v2454
    %2859 = vmatprep.subr.mxu0 0.0
    %2860 = vmatpush1.msra.mxu0 %v2455
    %2861 = vmatprep.subr.mxu0 0.0
    %2862 = vmatpush1.msra.mxu0 %v2456
    %2863 = vmatprep.subr.mxu0 0.0
    %2864 = vmatpush1.msra.mxu0 %v2457
    %2865 = vmatprep.subr.mxu0 0.0
    %2866 = vmatpush1.msra.mxu0 %v2458
    %2867 = vmatprep.subr.mxu0 0.0
    %2868 = vmatpush1.msra.mxu0 %v2459
    %2869 = vmatprep.subr.mxu0 0.0
    %2870 = vmatpush1.msra.mxu0 %v2460
    %2871 = vmatprep.subr.mxu0 0.0
    %2872 = vmatpush1.msra.mxu0 %v2461
    %2873 = vmatprep.subr.mxu0 0.0
    %2874 = vmatpush1.msra.mxu0 %v2462
    %2875 = vmatprep.subr.mxu0 0.0
    %2876 = vmatpush1.msra.mxu0 %v2463
    %2877 = vmatprep.subr.mxu0 0.0
    %2878 = vmatpush1.msra.mxu0 %v2464
    %2879 = vmatprep.subr.mxu0 0.0
    %2880 = vmatpush1.msra.mxu0 %v2465
    %2881 = vmatprep.subr.mxu0 0.0
    %2882 = vmatpush1.msra.mxu0 %v2466
    %2883 = vmatprep.subr.mxu0 0.0
    %2884 = vmatpush1.msra.mxu0 %v2467
    %2885 = vmatprep.subr.mxu0 0.0
    %2886 = vmatpush1.msra.mxu0 %v2468
    %2887 = vmatprep.mubr.f32.mxu0 %v2685
    %2888 = vmatmul.mubr.f32.gmra.mrb[0].mxu0 %v2683
    %v2889 = vpop.f32.mrb[0].mxu0
    %v2890 = vadd.f32 %v2820, %v2889
    %v2891 = vpop.f32.mrb[0].mxu0
    %2892 = vdwg.mxu0
    %2893 = vmatprep.subr.mxu0 0.0
    %2894 = vmatpush1.msra.mxu0 %v2469
    %2895 = vmatprep.subr.mxu0 0.0
    %2896 = vmatpush1.msra.mxu0 %v2470
    %2897 = vmatprep.subr.mxu0 0.0
    %2898 = vmatpush1.msra.mxu0 %v2471
    %2899 = vmatprep.subr.mxu0 0.0
    %2900 = vmatpush1.msra.mxu0 %v2472
    %2901 = vmatprep.subr.mxu0 0.0
    %2902 = vmatpush1.msra.mxu0 %v2473
    %2903 = vmatprep.subr.mxu0 0.0
    %2904 = vmatpush1.msra.mxu0 %v2474
    %2905 = vmatprep.subr.mxu0 0.0
    %2906 = vmatpush1.msra.mxu0 %v2475
    %2907 = vmatprep.subr.mxu0 0.0
    %2908 = vmatpush1.msra.mxu0 %v2476
    %2909 = vmatprep.subr.mxu0 0.0
    %2910 = vmatpush1.msra.mxu0 %v2477
    %2911 = vmatprep.subr.mxu0 0.0
    %2912 = vmatpush1.msra.mxu0 %v2478
    %2913 = vmatprep.subr.mxu0 0.0
    %2914 = vmatpush1.msra.mxu0 %v2479
    %2915 = vmatprep.subr.mxu0 0.0
    %2916 = vmatpush1.msra.mxu0 %v2480
    %2917 = vmatprep.subr.mxu0 0.0
    %2918 = vmatpush1.msra.mxu0 %v2481
    %2919 = vmatprep.subr.mxu0 0.0
    %2920 = vmatpush1.msra.mxu0 %v2482
    %2921 = vmatprep.subr.mxu0 0.0
    %2922 = vmatpush1.msra.mxu0 %v2483
    %2923 = vmatprep.subr.mxu0 0.0
    %2924 = vmatpush1.msra.mxu0 %v2484
    %2925 = vmatprep.subr.mxu0 0.0
    %2926 = vmatpush1.msra.mxu0 %v2485
    %2927 = vmatprep.subr.mxu0 0.0
    %2928 = vmatpush1.msra.mxu0 %v2486
    %2929 = vmatprep.subr.mxu0 0.0
    %2930 = vmatpush1.msra.mxu0 %v2487
    %2931 = vmatprep.subr.mxu0 0.0
    %2932 = vmatpush1.msra.mxu0 %v2488
    %2933 = vmatprep.subr.mxu0 0.0
    %2934 = vmatpush1.msra.mxu0 %v2489
    %2935 = vmatprep.subr.mxu0 0.0
    %2936 = vmatpush1.msra.mxu0 %v2490
    %2937 = vmatprep.subr.mxu0 0.0
    %2938 = vmatpush1.msra.mxu0 %v2491
    %2939 = vmatprep.subr.mxu0 0.0
    %2940 = vmatpush1.msra.mxu0 %v2492
    %2941 = vmatprep.subr.mxu0 0.0
    %2942 = vmatpush1.msra.mxu0 %v2493
    %2943 = vmatprep.subr.mxu0 0.0
    %2944 = vmatpush1.msra.mxu0 %v2494
    %2945 = vmatprep.subr.mxu0 0.0
    %2946 = vmatpush1.msra.mxu0 %v2495
    %2947 = vmatprep.subr.mxu0 0.0
    %2948 = vmatpush1.msra.mxu0 %v2496
    %2949 = vmatprep.subr.mxu0 0.0
    %2950 = vmatpush1.msra.mxu0 %v2497
    %2951 = vmatprep.subr.mxu0 0.0
    %2952 = vmatpush1.msra.mxu0 %v2498
    %2953 = vmatprep.subr.mxu0 0.0
    %2954 = vmatpush1.msra.mxu0 %v2499
    %2955 = vmatprep.subr.mxu0 0.0
    %2956 = vmatpush1.msra.mxu0 %v2500
    %2957 = vmatprep.mubr.f32.mxu0 %v2701
    %2958 = vmatmul.mubr.f32.gmra.mrb[0].mxu0 %v2693
    %v2959 = vpop.f32.mrb[0].mxu0
    %v2960 = vadd.f32 %v2890, %v2959
    %v2961 = vpop.f32.mrb[0].mxu0
    %2962 = vdwg.mxu0
    %2963 = vmatprep.subr.mxu0 0.0
    %2964 = vmatpush1.msra.mxu0 %v2501
    %2965 = vmatprep.subr.mxu0 0.0
    %2966 = vmatpush1.msra.mxu0 %v2502
    %2967 = vmatprep.subr.mxu0 0.0
    %2968 = vmatpush1.msra.mxu0 %v2503
    %2969 = vmatprep.subr.mxu0 0.0
    %2970 = vmatpush1.msra.mxu0 %v2504
    %2971 = vmatprep.subr.mxu0 0.0
    %2972 = vmatpush1.msra.mxu0 %v2505
    %2973 = vmatprep.subr.mxu0 0.0
    %2974 = vmatpush1.msra.mxu0 %v2506
    %2975 = vmatprep.subr.mxu0 0.0
    %2976 = vmatpush1.msra.mxu0 %v2507
    %2977 = vmatprep.subr.mxu0 0.0
    %2978 = vmatpush1.msra.mxu0 %v2508
    %2979 = vmatprep.subr.mxu0 0.0
    %2980 = vmatpush1.msra.mxu0 %v2509
    %2981 = vmatprep.subr.mxu0 0.0
    %2982 = vmatpush1.msra.mxu0 %v2510
    %2983 = vmatprep.subr.mxu0 0.0
    %2984 = vmatpush1.msra.mxu0 %v2511
    %2985 = vmatprep.subr.mxu0 0.0
    %2986 = vmatpush1.msra.mxu0 %v2512
    %2987 = vmatprep.subr.mxu0 0.0
    %2988 = vmatpush1.msra.mxu0 %v2513
    %2989 = vmatprep.subr.mxu0 0.0
    %2990 = vmatpush1.msra.mxu0 %v2514
    %2991 = vmatprep.subr.mxu0 0.0
    %2992 = vmatpush1.msra.mxu0 %v2515
    %2993 = vmatprep.subr.mxu0 0.0
    %2994 = vmatpush1.msra.mxu0 %v2516
    %2995 = vmatprep.subr.mxu0 0.0
    %2996 = vmatpush1.msra.mxu0 %v2517
    %2997 = vmatprep.subr.mxu0 0.0
    %2998 = vmatpush1.msra.mxu0 %v2518
    %2999 = vmatprep.subr.mxu0 0.0
    %3000 = vmatpush1.msra.mxu0 %v2519
    %3001 = vmatprep.subr.mxu0 0.0
    %3002 = vmatpush1.msra.mxu0 %v2520
    %3003 = vmatprep.subr.mxu0 0.0
    %3004 = vmatpush1.msra.mxu0 %v2521
    %3005 = vmatprep.subr.mxu0 0.0
    %3006 = vmatpush1.msra.mxu0 %v2522
    %3007 = vmatprep.subr.mxu0 0.0
    %3008 = vmatpush1.msra.mxu0 %v2523
    %3009 = vmatprep.subr.mxu0 0.0
    %3010 = vmatpush1.msra.mxu0 %v2524
    %3011 = vmatprep.subr.mxu0 0.0
    %3012 = vmatpush1.msra.mxu0 %v2525
    %3013 = vmatprep.subr.mxu0 0.0
    %3014 = vmatpush1.msra.mxu0 %v2526
    %3015 = vmatprep.subr.mxu0 0.0
    %3016 = vmatpush1.msra.mxu0 %v2527
    %3017 = vmatprep.subr.mxu0 0.0
    %3018 = vmatpush1.msra.mxu0 %v2528
    %3019 = vmatprep.subr.mxu0 0.0
    %3020 = vmatpush1.msra.mxu0 %v2529
    %3021 = vmatprep.subr.mxu0 0.0
    %3022 = vmatpush1.msra.mxu0 %v2530
    %3023 = vmatprep.subr.mxu0 0.0
    %3024 = vmatpush1.msra.mxu0 %v2531
    %3025 = vmatprep.subr.mxu0 0.0
    %3026 = vmatpush1.msra.mxu0 %v2532
    %3027 = vmatprep.mubr.f32.mxu0 %v2702
    %3028 = vmatmul.mubr.f32.gmra.mrb[0].mxu0 %v2700
    %v3029 = vpop.f32.mrb[0].mxu0
    %v3030 = vadd.f32 %v2960, %v3029
    %v3031 = vpop.f32.mrb[0].mxu0
    %3032 = vdwg.mxu0
    %3033 = vmatprep.subr.mxu0 0.0
    %3034 = vmatpush1.msra.mxu0 %v2533
    %3035 = vmatprep.subr.mxu0 0.0
    %3036 = vmatpush1.msra.mxu0 %v2534
    %3037 = vmatprep.subr.mxu0 0.0
    %3038 = vmatpush1.msra.mxu0 %v2535
    %3039 = vmatprep.subr.mxu0 0.0
    %3040 = vmatpush1.msra.mxu0 %v2536
    %3041 = vmatprep.subr.mxu0 0.0
    %3042 = vmatpush1.msra.mxu0 %v2537
    %3043 = vmatprep.subr.mxu0 0.0
    %3044 = vmatpush1.msra.mxu0 %v2538
    %3045 = vmatprep.subr.mxu0 0.0
    %3046 = vmatpush1.msra.mxu0 %v2539
    %3047 = vmatprep.subr.mxu0 0.0
    %3048 = vmatpush1.msra.mxu0 %v2540
    %3049 = vmatprep.subr.mxu0 0.0
    %3050 = vmatpush1.msra.mxu0 %v2541
    %3051 = vmatprep.subr.mxu0 0.0
    %3052 = vmatpush1.msra.mxu0 %v2542
    %3053 = vmatprep.subr.mxu0 0.0
    %3054 = vmatpush1.msra.mxu0 %v2543
    %3055 = vmatprep.subr.mxu0 0.0
    %3056 = vmatpush1.msra.mxu0 %v2544
    %3057 = vmatprep.subr.mxu0 0.0
    %3058 = vmatpush1.msra.mxu0 %v2545
    %3059 = vmatprep.subr.mxu0 0.0
    %3060 = vmatpush1.msra.mxu0 %v2546
    %3061 = vmatprep.subr.mxu0 0.0
    %3062 = vmatpush1.msra.mxu0 %v2547
    %3063 = vmatprep.subr.mxu0 0.0
    %3064 = vmatpush1.msra.mxu0 %v2548
    %3065 = vmatprep.subr.mxu0 0.0
    %3066 = vmatpush1.msra.mxu0 %v2549
    %3067 = vmatprep.subr.mxu0 0.0
    %3068 = vmatpush1.msra.mxu0 %v2550
    %3069 = vmatprep.subr.mxu0 0.0
    %3070 = vmatpush1.msra.mxu0 %v2551
    %3071 = vmatprep.subr.mxu0 0.0
    %3072 = vmatpush1.msra.mxu0 %v2552
    %3073 = vmatprep.subr.mxu0 0.0
    %3074 = vmatpush1.msra.mxu0 %v2553
    %3075 = vmatprep.subr.mxu0 0.0
    %3076 = vmatpush1.msra.mxu0 %v2554
    %3077 = vmatprep.subr.mxu0 0.0
    %3078 = vmatpush1.msra.mxu0 %v2555
    %3079 = vmatprep.subr.mxu0 0.0
    %3080 = vmatpush1.msra.mxu0 %v2556
    %3081 = vmatprep.subr.mxu0 0.0
    %3082 = vmatpush1.msra.mxu0 %v2557
    %3083 = vmatprep.subr.mxu0 0.0
    %3084 = vmatpush1.msra.mxu0 %v2558
    %3085 = vmatprep.subr.mxu0 0.0
    %3086 = vmatpush1.msra.mxu0 %v2559
    %3087 = vmatprep.subr.mxu0 0.0
    %3088 = vmatpush1.msra.mxu0 %v2560
    %3089 = vmatprep.subr.mxu0 0.0
    %3090 = vmatpush1.msra.mxu0 %v2561
    %3091 = vmatprep.subr.mxu0 0.0
    %3092 = vmatpush1.msra.mxu0 %v2562
    %3093 = vmatprep.subr.mxu0 0.0
    %3094 = vmatpush1.msra.mxu0 %v2563
    %3095 = vmatprep.subr.mxu0 0.0
    %3096 = vmatpush1.msra.mxu0 %v2564
    %3097 = vmatprep.mubr.f32.mxu0 %v2718
    %3098 = vmatmul.mubr.f32.gmra.mrb[0].mxu0 %v2710
    %v3099 = vpop.f32.mrb[0].mxu0
    %v3100 = vadd.f32 %v3030, %v3099
    %v3101 = vpop.f32.mrb[0].mxu0
    %3102 = vdwg.mxu0
    %3103 = vmatprep.subr.mxu0 0.0
    %3104 = vmatpush1.msra.mxu0 %v2565
    %3105 = vmatprep.subr.mxu0 0.0
    %3106 = vmatpush1.msra.mxu0 %v2566
    %3107 = vmatprep.subr.mxu0 0.0
    %3108 = vmatpush1.msra.mxu0 %v2567
    %3109 = vmatprep.subr.mxu0 0.0
    %3110 = vmatpush1.msra.mxu0 %v2568
    %3111 = vmatprep.subr.mxu0 0.0
    %3112 = vmatpush1.msra.mxu0 %v2569
    %3113 = vmatprep.subr.mxu0 0.0
    %3114 = vmatpush1.msra.mxu0 %v2570
    %3115 = vmatprep.subr.mxu0 0.0
    %3116 = vmatpush1.msra.mxu0 %v2571
    %3117 = vmatprep.subr.mxu0 0.0
    %3118 = vmatpush1.msra.mxu0 %v2572
    %3119 = vmatprep.subr.mxu0 0.0
    %3120 = vmatpush1.msra.mxu0 %v2573
    %3121 = vmatprep.subr.mxu0 0.0
    %3122 = vmatpush1.msra.mxu0 %v2574
    %3123 = vmatprep.subr.mxu0 0.0
    %3124 = vmatpush1.msra.mxu0 %v2575
    %3125 = vmatprep.subr.mxu0 0.0
    %3126 = vmatpush1.msra.mxu0 %v2576
    %3127 = vmatprep.subr.mxu0 0.0
    %3128 = vmatpush1.msra.mxu0 %v2577
    %3129 = vmatprep.subr.mxu0 0.0
    %3130 = vmatpush1.msra.mxu0 %v2578
    %3131 = vmatprep.subr.mxu0 0.0
    %3132 = vmatpush1.msra.mxu0 %v2579
    %3133 = vmatprep.subr.mxu0 0.0
    %3134 = vmatpush1.msra.mxu0 %v2580
    %3135 = vmatprep.subr.mxu0 0.0
    %3136 = vmatpush1.msra.mxu0 %v2581
    %3137 = vmatprep.subr.mxu0 0.0
    %3138 = vmatpush1.msra.mxu0 %v2582
    %3139 = vmatprep.subr.mxu0 0.0
    %3140 = vmatpush1.msra.mxu0 %v2583
    %3141 = vmatprep.subr.mxu0 0.0
    %3142 = vmatpush1.msra.mxu0 %v2584
    %3143 = vmatprep.subr.mxu0 0.0
    %3144 = vmatpush1.msra.mxu0 %v2585
    %3145 = vmatprep.subr.mxu0 0.0
    %3146 = vmatpush1.msra.mxu0 %v2586
    %3147 = vmatprep.subr.mxu0 0.0
    %3148 = vmatpush1.msra.mxu0 %v2587
    %3149 = vmatprep.subr.mxu0 0.0
    %3150 = vmatpush1.msra.mxu0 %v2588
    %3151 = vmatprep.subr.mxu0 0.0
    %3152 = vmatpush1.msra.mxu0 %v2589
    %3153 = vmatprep.subr.mxu0 0.0
    %3154 = vmatpush1.msra.mxu0 %v2590
    %3155 = vmatprep.subr.mxu0 0.0
    %3156 = vmatpush1.msra.mxu0 %v2591
    %3157 = vmatprep.subr.mxu0 0.0
    %3158 = vmatpush1.msra.mxu0 %v2592
    %3159 = vmatprep.subr.mxu0 0.0
    %3160 = vmatpush1.msra.mxu0 %v2593
    %3161 = vmatprep.subr.mxu0 0.0
    %3162 = vmatpush1.msra.mxu0 %v2594
    %3163 = vmatprep.subr.mxu0 0.0
    %3164 = vmatpush1.msra.mxu0 %v2595
    %3165 = vmatprep.subr.mxu0 0.0
    %3166 = vmatpush1.msra.mxu0 %v2596
    %3167 = vmatprep.mubr.f32.mxu0 %v2719
    %3168 = vmatmul.mubr.f32.gmra.mrb[0].mxu0 %v2717
    %v3169 = vpop.f32.mrb[0].mxu0
    %v3170 = vadd.f32 %v3100, %v3169
    %v3171 = vpop.f32.mrb[0].mxu0
    %3172 = vdwg.mxu0
    %3173 = vmatprep.subr.mxu0 0.0
    %3174 = vmatpush1.msra.mxu0 %v2597
    %3175 = vmatprep.subr.mxu0 0.0
    %3176 = vmatpush1.msra.mxu0 %v2598
    %3177 = vmatprep.subr.mxu0 0.0
    %3178 = vmatpush1.msra.mxu0 %v2599
    %3179 = vmatprep.subr.mxu0 0.0
    %3180 = vmatpush1.msra.mxu0 %v2600
    %3181 = vmatprep.subr.mxu0 0.0
    %3182 = vmatpush1.msra.mxu0 %v2601
    %3183 = vmatprep.subr.mxu0 0.0
    %3184 = vmatpush1.msra.mxu0 %v2602
    %3185 = vmatprep.subr.mxu0 0.0
    %3186 = vmatpush1.msra.mxu0 %v2603
    %3187 = vmatprep.subr.mxu0 0.0
    %3188 = vmatpush1.msra.mxu0 %v2604
    %3189 = vmatprep.subr.mxu0 0.0
    %3190 = vmatpush1.msra.mxu0 %v2605
    %3191 = vmatprep.subr.mxu0 0.0
    %3192 = vmatpush1.msra.mxu0 %v2606
    %3193 = vmatprep.subr.mxu0 0.0
    %3194 = vmatpush1.msra.mxu0 %v2607
    %3195 = vmatprep.subr.mxu0 0.0
    %3196 = vmatpush1.msra.mxu0 %v2608
    %3197 = vmatprep.subr.mxu0 0.0
    %3198 = vmatpush1.msra.mxu0 %v2609
    %3199 = vmatprep.subr.mxu0 0.0
    %3200 = vmatpush1.msra.mxu0 %v2610
    %3201 = vmatprep.subr.mxu0 0.0
    %3202 = vmatpush1.msra.mxu0 %v2611
    %3203 = vmatprep.subr.mxu0 0.0
    %3204 = vmatpush1.msra.mxu0 %v2612
    %3205 = vmatprep.subr.mxu0 0.0
    %3206 = vmatpush1.msra.mxu0 %v2613
    %3207 = vmatprep.subr.mxu0 0.0
    %3208 = vmatpush1.msra.mxu0 %v2614
    %3209 = vmatprep.subr.mxu0 0.0
    %3210 = vmatpush1.msra.mxu0 %v2615
    %3211 = vmatprep.subr.mxu0 0.0
    %3212 = vmatpush1.msra.mxu0 %v2616
    %3213 = vmatprep.subr.mxu0 0.0
    %3214 = vmatpush1.msra.mxu0 %v2617
    %3215 = vmatprep.subr.mxu0 0.0
    %3216 = vmatpush1.msra.mxu0 %v2618
    %3217 = vmatprep.subr.mxu0 0.0
    %3218 = vmatpush1.msra.mxu0 %v2619
    %3219 = vmatprep.subr.mxu0 0.0
    %3220 = vmatpush1.msra.mxu0 %v2620
    %3221 = vmatprep.subr.mxu0 0.0
    %3222 = vmatpush1.msra.mxu0 %v2621
    %3223 = vmatprep.subr.mxu0 0.0
    %3224 = vmatpush1.msra.mxu0 %v2622
    %3225 = vmatprep.subr.mxu0 0.0
    %3226 = vmatpush1.msra.mxu0 %v2623
    %3227 = vmatprep.subr.mxu0 0.0
    %3228 = vmatpush1.msra.mxu0 %v2624
    %3229 = vmatprep.subr.mxu0 0.0
    %3230 = vmatpush1.msra.mxu0 %v2625
    %3231 = vmatprep.subr.mxu0 0.0
    %3232 = vmatpush1.msra.mxu0 %v2626
    %3233 = vmatprep.subr.mxu0 0.0
    %3234 = vmatpush1.msra.mxu0 %v2627
    %3235 = vmatprep.subr.mxu0 0.0
    %3236 = vmatpush1.msra.mxu0 %v2628
    %3237 = vmatprep.mubr.f32.mxu0 %v2735
    %3238 = vmatmul.mubr.f32.gmra.mrb[0].mxu0 %v2727
    %v3239 = vpop.f32.mrb[0].mxu0
    %v3240 = vadd.f32 %v3170, %v3239
    %v3241 = vpop.f32.mrb[0].mxu0
    %3242 = vdwg.mxu0
    %3243 = vmatprep.subr.mxu0 0.0
    %3244 = vmatpush1.msra.mxu0 %v2629
    %3245 = vmatprep.subr.mxu0 0.0
    %3246 = vmatpush1.msra.mxu0 %v2630
    %3247 = vmatprep.subr.mxu0 0.0
    %3248 = vmatpush1.msra.mxu0 %v2631
    %3249 = vmatprep.subr.mxu0 0.0
    %3250 = vmatpush1.msra.mxu0 %v2632
    %3251 = vmatprep.subr.mxu0 0.0
    %3252 = vmatpush1.msra.mxu0 %v2633
    %3253 = vmatprep.subr.mxu0 0.0
    %3254 = vmatpush1.msra.mxu0 %v2634
    %3255 = vmatprep.subr.mxu0 0.0
    %3256 = vmatpush1.msra.mxu0 %v2635
    %3257 = vmatprep.subr.mxu0 0.0
    %3258 = vmatpush1.msra.mxu0 %v2636
    %3259 = vmatprep.subr.mxu0 0.0
    %3260 = vmatpush1.msra.mxu0 %v2637
    %3261 = vmatprep.subr.mxu0 0.0
    %3262 = vmatpush1.msra.mxu0 %v2638
    %3263 = vmatprep.subr.mxu0 0.0
    %3264 = vmatpush1.msra.mxu0 %v2639
    %3265 = vmatprep.subr.mxu0 0.0
    %3266 = vmatpush1.msra.mxu0 %v2640
    %3267 = vmatprep.subr.mxu0 0.0
    %3268 = vmatpush1.msra.mxu0 %v2641
    %3269 = vmatprep.subr.mxu0 0.0
    %3270 = vmatpush1.msra.mxu0 %v2642
    %3271 = vmatprep.subr.mxu0 0.0
    %3272 = vmatpush1.msra.mxu0 %v2643
    %3273 = vmatprep.subr.mxu0 0.0
    %3274 = vmatpush1.msra.mxu0 %v2644
    %3275 = vmatprep.subr.mxu0 0.0
    %3276 = vmatpush1.msra.mxu0 %v2645
    %3277 = vmatprep.subr.mxu0 0.0
    %3278 = vmatpush1.msra.mxu0 %v2646
    %3279 = vmatprep.subr.mxu0 0.0
    %3280 = vmatpush1.msra.mxu0 %v2647
    %3281 = vmatprep.subr.mxu0 0.0
    %3282 = vmatpush1.msra.mxu0 %v2648
    %3283 = vmatprep.subr.mxu0 0.0
    %3284 = vmatpush1.msra.mxu0 %v2649
    %3285 = vmatprep.subr.mxu0 0.0
    %3286 = vmatpush1.msra.mxu0 %v2650
    %3287 = vmatprep.subr.mxu0 0.0
    %3288 = vmatpush1.msra.mxu0 %v2651
    %3289 = vmatprep.subr.mxu0 0.0
    %3290 = vmatpush1.msra.mxu0 %v2652
    %3291 = vmatprep.subr.mxu0 0.0
    %3292 = vmatpush1.msra.mxu0 %v2653
    %3293 = vmatprep.subr.mxu0 0.0
    %3294 = vmatpush1.msra.mxu0 %v2654
    %3295 = vmatprep.subr.mxu0 0.0
    %3296 = vmatpush1.msra.mxu0 %v2655
    %3297 = vmatprep.subr.mxu0 0.0
    %3298 = vmatpush1.msra.mxu0 %v2656
    %3299 = vmatprep.subr.mxu0 0.0
    %3300 = vmatpush1.msra.mxu0 %v2657
    %3301 = vmatprep.subr.mxu0 0.0
    %3302 = vmatpush1.msra.mxu0 %v2658
    %3303 = vmatprep.subr.mxu0 0.0
    %3304 = vmatpush1.msra.mxu0 %v2659
    %3305 = vmatprep.subr.mxu0 0.0
    %3306 = vmatpush1.msra.mxu0 %v2660
    %3307 = vmatprep.mubr.f32.mxu0 %v2736
    %3308 = vmatmul.mubr.f32.gmra.mrb[0].mxu0 %v2734
    %v3309 = vpop.f32.mrb[0].mxu0
    %v3310 = vadd.f32 %v3240, %v3309
    %v3311 = vpop.f32.mrb[0].mxu0
    %3312 = vdwg.mxu0
    %v3313 = vld [vmem:[%s4] sm:$0xff]
    %v3314 = vld [vmem:[%s4 + $0x8] sm:$0xff]
    %v3315 = vld [vmem:[%s4 + $0x10] sm:$0xff]
    %v3316 = vld [vmem:[%s4 + $0x18] sm:$0xff]
    %v3317 = vld [vmem:[%s4 + $0x20] sm:$0xff]
    %v3318 = vld [vmem:[%s4 + $0x28] sm:$0xff]
    %v3319 = vld [vmem:[%s4 + $0x30] sm:$0xff]
    %v3320 = vld [vmem:[%s4 + $0x38] sm:$0xff]
    %v3321 = vld [vmem:[%s5] sm:$0x3]
    %v3323 = vlaneseq
    %v3324 = vshrl.u32 %v3323, 7
    %v3325 = vsub.s32 0, %v3324
    %v3326 = vrot.slane %v3321, %v3325
    %v3327 = vlaneseq
    %v3328 = vshrl.u32 %v3327, 7
    %v3329 = vsub.s32 1, %v3328
    %v3330 = vrot.slane %v3321, %v3329
    %v3334 = vsel %vm291, %v3310, 0
    %3336 = vmatprep.subr.mxu0 %v3314
    %3337 = vmatpush1.msra.mxu0 %v3313
    %3338 = vmatprep.subr.mxu0 %v3316
    %3339 = vmatpush1.msra.mxu0 %v3315
    %3340 = vmatprep.subr.mxu0 %v3318
    %3341 = vmatpush1.msra.mxu0 %v3317
    %3342 = vmatprep.subr.mxu0 %v3320
    %3343 = vmatpush1.msra.mxu0 %v3319
    %3344 = vmatprep.subr.mxu0 0.0
    %3345 = vmatpush1.msra.mxu0 0.0
    %3346 = vmatprep.subr.mxu0 0.0
    %3347 = vmatpush1.msra.mxu0 0.0
    %3348 = vmatprep.subr.mxu0 0.0
    %3349 = vmatpush1.msra.mxu0 0.0
    %3350 = vmatprep.subr.mxu0 0.0
    %3351 = vmatpush1.msra.mxu0 0.0
    %3352 = vmatprep.subr.mxu0 0.0
    %3353 = vmatpush1.msra.mxu0 0.0
    %3354 = vmatprep.subr.mxu0 0.0
    %3355 = vmatpush1.msra.mxu0 0.0
    %3356 = vmatprep.subr.mxu0 0.0
    %3357 = vmatpush1.msra.mxu0 0.0
    %3358 = vmatprep.subr.mxu0 0.0
    %3359 = vmatpush1.msra.mxu0 0.0
    %3360 = vmatprep.subr.mxu0 0.0
    %3361 = vmatpush1.msra.mxu0 0.0
    %3362 = vmatprep.subr.mxu0 0.0
    %3363 = vmatpush1.msra.mxu0 0.0
    %3364 = vmatprep.subr.mxu0 0.0
    %3365 = vmatpush1.msra.mxu0 0.0
    %3366 = vmatprep.subr.mxu0 0.0
    %3367 = vmatpush1.msra.mxu0 0.0
    %3368 = vmatprep.subr.mxu0 0.0
    %3369 = vmatpush1.msra.mxu0 0.0
    %3370 = vmatprep.subr.mxu0 0.0
    %3371 = vmatpush1.msra.mxu0 0.0
    %3372 = vmatprep.subr.mxu0 0.0
    %3373 = vmatpush1.msra.mxu0 0.0
    %3374 = vmatprep.subr.mxu0 0.0
    %3375 = vmatpush1.msra.mxu0 0.0
    %3376 = vmatprep.subr.mxu0 0.0
    %3377 = vmatpush1.msra.mxu0 0.0
    %3378 = vmatprep.subr.mxu0 0.0
    %3379 = vmatpush1.msra.mxu0 0.0
    %3380 = vmatprep.subr.mxu0 0.0
    %3381 = vmatpush1.msra.mxu0 0.0
    %3382 = vmatprep.subr.mxu0 0.0
    %3383 = vmatpush1.msra.mxu0 0.0
    %3384 = vmatprep.subr.mxu0 0.0
    %3385 = vmatpush1.msra.mxu0 0.0
    %3386 = vmatprep.subr.mxu0 0.0
    %3387 = vmatpush1.msra.mxu0 0.0
    %3388 = vmatprep.subr.mxu0 0.0
    %3389 = vmatpush1.msra.mxu0 0.0
    %3390 = vmatprep.subr.mxu0 0.0
    %3391 = vmatpush1.msra.mxu0 0.0
    %3392 = vmatprep.subr.mxu0 0.0
    %3393 = vmatpush1.msra.mxu0 0.0
    %3394 = vmatprep.subr.mxu0 0.0
    %3395 = vmatpush1.msra.mxu0 0.0
    %3396 = vmatprep.subr.mxu0 0.0
    %3397 = vmatpush1.msra.mxu0 0.0
    %3398 = vmatprep.subr.mxu0 0.0
    %3399 = vmatpush1.msra.mxu0 0.0
    %3400 = vmatprep.mubr.f32.mxu0 0.0
    %3401 = vmatmul.mubr.f32.gmra.mrb[0].mxu0 %v3334
    %v3402 = vpop.f32.mrb[0].mxu0
    %v3403 = vadd.f32 %v3326, %v3402
    %v3404 = vpop.f32.mrb[0].mxu0
    %v3405 = vadd.f32 %v3330, %v3404
    %3406 = vdwg.mxu0
    %v3409 = vcombine.low %v3403, %v3405
    %v3411 = vunpack.c.l.s4 1983009808
    %v3412 = vunpack.c.0.s8 %v3411
    %v3413 = vlaneseq
    %v3414 = vshrl.u32 %v3413, 7
    %v3415 = vsub.s32 %v3412, %v3414
    %v3416 = vrot.slane %v3409, %v3415
    %3418 = vst [vmem:[#allocation2] sm:$0xf] %v3416
    // Predicated region
    $region26: #{tsn_mmc_forward.2} parent=1 // pred_check
      _
    $region27: #{tsn_mmc_forward.2} parent=1 // pred_check_branch
      %3420 = sbr.rel (0) target = $region29
    $region28: #{tsn_mmc_forward.2} parent=1 // pred_region
      %s3422 = ssub.s32 64, 64
      %3423 = vsyncadd [#allocation3], %s3422
      %s3425 = sshll.u32 [#allocation2], 4
      %s3426 = int_to_ptr.vmem [resolvable:$true] %s3425
      %3428 = dma.vmem_to_hbm [thread:$0]  %s3426, 64, %s6, [#allocation3]
    $region29: #{tsn_mmc_forward.2} parent=1 // pred_fallthru
      _
    // Predicated region
    $region30: #{tsn_mmc_forward.2} parent=1 // pred_check
      _
    $region31: #{tsn_mmc_forward.2} parent=1 // pred_check_branch
      %3430 = sbr.rel (0) target = $region33
    $region32: #{tsn_mmc_forward.2} parent=1 // pred_region
      %3431 = dma.done [#allocation3], 64
    $region33: #{tsn_mmc_forward.2} parent=1 // pred_fallthru
      _
    %3432 = vsyncpa [#allocation3], 1

</llo_original>
